<compile_context>
chip_gen: v7x
topology: tpu7x:2x2x1
jax: 0.10.0
libtpu: 0.0.40
codegen_flags: <defaults>
</compile_context>

<pallas_src>
import jax
import jax.numpy as jnp
import numpy as np
from jax import lax
from jax.experimental import pallas as pl
from jax.experimental.pallas import tpu as pltpu


# ----------------------------------------------------------------------------
# im2col helper (runs in XLA, in the wrapper): extract KHxKW patches of an
# NHWC image, grouped by the 2x2 max-pool offset they feed.
#   result[n, q = 2*r + c, hp*Wp + wp, :] = patch for conv-output position
#   (2*hp + r, 2*wp + c), flattened in (kh, kw, cin) order (matches HWIO
#   weights reshaped to (KH*KW*Cin, Cout)).
# ----------------------------------------------------------------------------
def im2col_pool_patches(x, KH, KW):
    N, H, W, C = x.shape
    Ho, Wo = H - KH + 1, W - KW + 1
    Hp, Wp = Ho // 2, Wo // 2
    taps = [x[:, kh:kh + Ho, kw:kw + Wo, :] for kh in range(KH) for kw in range(KW)]
    pat = jnp.stack(taps, axis=3).reshape(N, Ho, Wo, KH * KW * C)
    pat = pat[:, : 2 * Hp, : 2 * Wp]                 # floor-pool drops odd tail
    pat = pat.reshape(N, Hp, 2, Wp, 2, KH * KW * C)
    pat = pat.transpose(0, 2, 4, 1, 3, 5).reshape(N, 4, Hp * Wp, KH * KW * C)
    return pat, Hp, Wp


# ----------------------------------------------------------------------------
# Fused conv(valid) + maxpool(2,2) + bias + ReLU kernel on im2col patches.
# One grid step = one image; 4 fat matmuls (one per pool offset), elementwise
# max, then bias + ReLU, then one lane-dense store.
# ----------------------------------------------------------------------------
def _conv_relu_pool_kernel(p_ref, w_ref, b_ref, o_ref):
    # p_ref: (1, 4, M, K) bf16   w_ref: (K, Cout) bf16
    # b_ref: (1, Cout) f32       o_ref: (1, M, Cout) f32
    Q = p_ref.shape[1]
    w = w_ref[...]
    y = jnp.dot(p_ref[0, 0], w, preferred_element_type=jnp.float32)
    for q in range(1, Q):                            # static unroll (Q == 4)
        y = jnp.maximum(y, jnp.dot(p_ref[0, q], w, preferred_element_type=jnp.float32))
    # max-pool commutes with the monotone bias+ReLU -> apply them once, after.
    o_ref[0] = jnp.maximum(y + b_ref[...], 0.0)


def conv_relu_pool(patches, w, b):
    N, Q, M, K = patches.shape
    Cout = w.shape[1]
    return pl.pallas_call(
        _conv_relu_pool_kernel,
        out_shape=jax.ShapeDtypeStruct((N, M, Cout), jnp.float32),
        grid=(N,),
        in_specs=[
            pl.BlockSpec((1, Q, M, K), lambda n: (n, 0, 0, 0)),
            pl.BlockSpec((K, Cout), lambda n: (0, 0)),
            pl.BlockSpec((1, Cout), lambda n: (0, 0)),
        ],
        out_specs=pl.BlockSpec((1, M, Cout), lambda n: (n, 0, 0)),
        compiler_params=pltpu.CompilerParams(dimension_semantics=("parallel",)),
    )(patches, w, b)


# ----------------------------------------------------------------------------
# Fused FC stack: fc1+ReLU -> fc2+ReLU -> fc3 in a single pallas_call.
# All weights (~2.2 MB in bf16) live in VMEM for the whole call.
# ----------------------------------------------------------------------------
def _fc_stack_kernel(x_ref, w1_ref, b1_ref, w2_ref, b2_ref, w3_ref, b3_ref, o_ref):
    h = jnp.dot(x_ref[...], w1_ref[...], preferred_element_type=jnp.float32)
    h = jnp.maximum(h + b1_ref[...], 0.0)
    h = jnp.dot(h.astype(jnp.bfloat16), w2_ref[...], preferred_element_type=jnp.float32)
    h = jnp.maximum(h + b2_ref[...], 0.0)
    h = jnp.dot(h.astype(jnp.bfloat16), w3_ref[...], preferred_element_type=jnp.float32)
    o_ref[...] = h + b3_ref[...]


def fc_stack(x, w1, b1, w2, b2, w3, b3):
    N = x.shape[0]
    Dout = w3.shape[1]
    args = (x, w1, b1, w2, b2, w3, b3)
    return pl.pallas_call(
        _fc_stack_kernel,
        out_shape=jax.ShapeDtypeStruct((N, Dout), jnp.float32),
        grid=(1,),
        in_specs=[pl.BlockSpec(a.shape, lambda i: (0, 0)) for a in args],
        out_specs=pl.BlockSpec((N, Dout), lambda i: (0, 0)),
    )(*args)


# ----------------------------------------------------------------------------
# Parameter conversion (done once): PyTorch conventions -> kernel layouts.
#  - conv weights OIHW -> (KH*KW*Cin, Cout) bf16
#  - fc1 weight (120, C*6*6 NCHW-flat) -> (6*6*C NHWC-flat, 120) bf16, so the
#    NHWC conv2 output can be flattened directly (no activation transpose).
# ----------------------------------------------------------------------------
def prepare_params(p):
    def conv_w(w_oihw):
        Co, Ci, KH, KW = w_oihw.shape
        return jnp.transpose(w_oihw, (2, 3, 1, 0)).reshape(KH * KW * Ci, Co).astype(jnp.bfloat16)

    fw1 = (p["fc1_w"].reshape(120, 128, 6, 6)
           .transpose(2, 3, 1, 0).reshape(6 * 6 * 128, 120).astype(jnp.bfloat16))
    return dict(
        w1=conv_w(p["conv1_w"]), b1=p["conv1_b"].reshape(1, -1).astype(jnp.float32),
        w2=conv_w(p["conv2_w"]), b2=p["conv2_b"].reshape(1, -1).astype(jnp.float32),
        fw1=fw1, fb1=p["fc1_b"].reshape(1, -1).astype(jnp.float32),
        fw2=p["fc2_w"].T.astype(jnp.bfloat16), fb2=p["fc2_b"].reshape(1, -1).astype(jnp.float32),
        fw3=p["fc3_w"].T.astype(jnp.bfloat16), fb3=p["fc3_b"].reshape(1, -1).astype(jnp.float32),
    )


# ----------------------------------------------------------------------------
# Full forward pass (PyTorch NCHW input at the boundary).
# ----------------------------------------------------------------------------
@jax.jit
def net_forward(x_nchw, kp):
    N = x_nchw.shape[0]
    x = jnp.transpose(x_nchw, (0, 2, 3, 1)).astype(jnp.float32)        # NCHW -> NHWC

    p1, Hp1, Wp1 = im2col_pool_patches(x, 3, 3)                        # (N,4,225,27)
    y1 = conv_relu_pool(p1.astype(jnp.bfloat16), kp["w1"], kp["b1"])   # (N,225,64)
    y1 = y1.reshape(N, Hp1, Wp1, 64)

    p2, Hp2, Wp2 = im2col_pool_patches(y1, 3, 3)                       # (N,4,36,576)
    y2 = conv_relu_pool(p2.astype(jnp.bfloat16), kp["w2"], kp["b2"])   # (N,36,128)

    xf = y2.reshape(N, Hp2 * Wp2 * 128).astype(jnp.bfloat16)           # NHWC flatten
    return fc_stack(xf, kp["fw1"], kp["fb1"], kp["fw2"], kp["fb2"],
                    kp["fw3"], kp["fb3"])


# ----------------------------------------------------------------------------
# Deterministic synthetic parameters (PyTorch shapes) + pure-JAX reference.
# ----------------------------------------------------------------------------
def init_params(key):
    ks = jax.random.split(key, 10)
    s = 0.05

    def rn(k, shape):
        return jax.random.normal(k, shape, jnp.float32) * s

    return dict(
        conv1_w=rn(ks[0], (64, 3, 3, 3)),      conv1_b=rn(ks[1], (64,)),
        conv2_w=rn(ks[2], (128, 64, 3, 3)),    conv2_b=rn(ks[3], (128,)),
        fc1_w=rn(ks[4], (120, 128 * 6 * 6)),   fc1_b=rn(ks[5], (120,)),
        fc2_w=rn(ks[6], (84, 120)),            fc2_b=rn(ks[7], (84,)),
        fc3_w=rn(ks[8], (10, 84)),             fc3_b=rn(ks[9], (10,)),
    )


def reference_forward(x, p):
    def conv(y, w, b):
        y = lax.conv_general_dilated(
            y, w, (1, 1), "VALID", dimension_numbers=("NCHW", "OIHW", "NCHW")
        )
        return jnp.maximum(y + b[None, :, None, None], 0.0)

    def pool(y):
        return lax.reduce_window(
            y, -jnp.inf, lax.max, (1, 1, 2, 2), (1, 1, 2, 2), "VALID"
        )

    y = pool(conv(x, p["conv1_w"], p["conv1_b"]))
    y = pool(conv(y, p["conv2_w"], p["conv2_b"]))
    y = y.reshape(y.shape[0], -1)
    y = jnp.maximum(y @ p["fc1_w"].T + p["fc1_b"], 0.0)
    y = jnp.maximum(y @ p["fc2_w"].T + p["fc2_b"], 0.0)
    return y @ p["fc3_w"].T + p["fc3_b"]


if __name__ == "__main__":
    key = jax.random.PRNGKey(0)
    pkey, xkey = jax.random.split(key)
    params = init_params(pkey)
    kparams = prepare_params(params)

    # Input must be 32x32 for the 128*6*6 flatten in the original module.
    x = jax.random.normal(xkey, (2, 3, 32, 32), jnp.float32)   # NCHW, as in PyTorch

    out = jax.block_until_ready(net_forward(x, kparams))
    assert out.shape == (2, 10), out.shape

    ref = reference_forward(x, params)
    np.testing.assert_allclose(np.asarray(out), np.asarray(ref), atol=2e-2, rtol=2e-2)

    print("KERNEL_OK")
</pallas_src>

<mosaic_0001>
module attributes {stable_mosaic.version = 11 : i64} {
  func.func @_conv_relu_pool_kernel(%arg0: i32, %arg1: memref<1x4x225x27xbf16, #tpu.memory_space<vmem>>, %arg2: memref<27x64xbf16, #tpu.memory_space<vmem>>, %arg3: memref<1x64xf32, #tpu.memory_space<vmem>>, %arg4: memref<1x225x64xf32, #tpu.memory_space<vmem>>) attributes {dimension_semantics = [#tpu.dimension_semantics<parallel>], iteration_bounds = array<i64: 2>, scalar_prefetch = 0 : i64, scratch_operands = 0 : i64, tpu.core_type = #tpu.core_type<tc>, window_params = [{transform_indices = @transform_0, window_bounds = array<i64: 1, 4, 225, 27>}, {pipeline_mode = #tpu.pipeline_mode<synchronous>, transform_indices = @transform_1, window_bounds = array<i64: 27, 64>}, {pipeline_mode = #tpu.pipeline_mode<synchronous>, transform_indices = @transform_2, window_bounds = array<i64: 1, 64>}, {transform_indices = @transform_3, window_bounds = array<i64: 1, 225, 64>}]} {
    %c0 = arith.constant 0 : index
    %c0_0 = arith.constant 0 : index
    %0 = vector.load %arg2[%c0, %c0_0] : memref<27x64xbf16, #tpu.memory_space<vmem>>, vector<27x64xbf16>
    %c0_1 = arith.constant 0 : index
    %c0_2 = arith.constant 0 : index
    %c0_3 = arith.constant 0 : index
    %c0_4 = arith.constant 0 : index
    %1 = vector.load %arg1[%c0_1, %c0_2, %c0_3, %c0_4] : memref<1x4x225x27xbf16, #tpu.memory_space<vmem>>, vector<1x1x225x27xbf16>
    %2 = vector.shape_cast %1 : vector<1x1x225x27xbf16> to vector<225x27xbf16>
    %cst = arith.constant dense<0.000000e+00> : vector<225x64xf32>
    %3 = tpu.matmul %2, %0, %cst {dimension_numbers = #tpu.dot_dimension_numbers<[1], [0], [0], [1], [0, 0, 1, 1], [], []>} : vector<225x27xbf16>, vector<27x64xbf16>, vector<225x64xf32> -> vector<225x64xf32>
    %c0_5 = arith.constant 0 : index
    %c1 = arith.constant 1 : index
    %c0_6 = arith.constant 0 : index
    %c0_7 = arith.constant 0 : index
    %4 = vector.load %arg1[%c0_5, %c1, %c0_6, %c0_7] : memref<1x4x225x27xbf16, #tpu.memory_space<vmem>>, vector<1x1x225x27xbf16>
    %5 = vector.shape_cast %4 : vector<1x1x225x27xbf16> to vector<225x27xbf16>
    %cst_8 = arith.constant dense<0.000000e+00> : vector<225x64xf32>
    %6 = tpu.matmul %5, %0, %cst_8 {dimension_numbers = #tpu.dot_dimension_numbers<[1], [0], [0], [1], [0, 0, 1, 1], [], []>} : vector<225x27xbf16>, vector<27x64xbf16>, vector<225x64xf32> -> vector<225x64xf32>
    %7 = arith.maximumf %3, %6 : vector<225x64xf32>
    %c0_9 = arith.constant 0 : index
    %c2 = arith.constant 2 : index
    %c0_10 = arith.constant 0 : index
    %c0_11 = arith.constant 0 : index
    %8 = vector.load %arg1[%c0_9, %c2, %c0_10, %c0_11] : memref<1x4x225x27xbf16, #tpu.memory_space<vmem>>, vector<1x1x225x27xbf16>
    %9 = vector.shape_cast %8 : vector<1x1x225x27xbf16> to vector<225x27xbf16>
    %cst_12 = arith.constant dense<0.000000e+00> : vector<225x64xf32>
    %10 = tpu.matmul %9, %0, %cst_12 {dimension_numbers = #tpu.dot_dimension_numbers<[1], [0], [0], [1], [0, 0, 1, 1], [], []>} : vector<225x27xbf16>, vector<27x64xbf16>, vector<225x64xf32> -> vector<225x64xf32>
    %11 = arith.maximumf %7, %10 : vector<225x64xf32>
    %c0_13 = arith.constant 0 : index
    %c3 = arith.constant 3 : index
    %c0_14 = arith.constant 0 : index
    %c0_15 = arith.constant 0 : index
    %12 = vector.load %arg1[%c0_13, %c3, %c0_14, %c0_15] : memref<1x4x225x27xbf16, #tpu.memory_space<vmem>>, vector<1x1x225x27xbf16>
    %13 = vector.shape_cast %12 : vector<1x1x225x27xbf16> to vector<225x27xbf16>
    %cst_16 = arith.constant dense<0.000000e+00> : vector<225x64xf32>
    %14 = tpu.matmul %13, %0, %cst_16 {dimension_numbers = #tpu.dot_dimension_numbers<[1], [0], [0], [1], [0, 0, 1, 1], [], []>} : vector<225x27xbf16>, vector<27x64xbf16>, vector<225x64xf32> -> vector<225x64xf32>
    %15 = arith.maximumf %11, %14 : vector<225x64xf32>
    %c0_17 = arith.constant 0 : index
    %c0_18 = arith.constant 0 : index
    %16 = vector.load %arg3[%c0_17, %c0_18] : memref<1x64xf32, #tpu.memory_space<vmem>>, vector<1x64xf32>
    %17 = vector.broadcast %16 : vector<1x64xf32> to vector<225x64xf32>
    %18 = arith.addf %15, %17 : vector<225x64xf32>
    %cst_19 = arith.constant 0.000000e+00 : f32
    %19 = vector.broadcast %cst_19 : f32 to vector<225x64xf32>
    %20 = arith.maximumf %18, %19 : vector<225x64xf32>
    %c0_20 = arith.constant 0 : index
    %c0_21 = arith.constant 0 : index
    %c0_22 = arith.constant 0 : index
    %21 = vector.load %arg4[%c0_20, %c0_21, %c0_22] : memref<1x225x64xf32, #tpu.memory_space<vmem>>, vector<1x225x64xf32>
    %22 = vector.shape_cast %21 : vector<1x225x64xf32> to vector<225x64xf32>
    %23 = vector.shape_cast %20 : vector<225x64xf32> to vector<1x225x64xf32>
    tpu.vector_store %arg4[%c0_20, %c0_21, %c0_22], %23 {strides = array<i32>} : memref<1x225x64xf32, #tpu.memory_space<vmem>>, vector<1x225x64xf32>,
    return
  }
  func.func @transform_0(%arg0: i32) -> (i32, i32, i32, i32) {
    %c0_i32 = arith.constant 0 : i32
    %c0_i32_0 = arith.constant 0 : i32
    %c0_i32_1 = arith.constant 0 : i32
    %c0_i32_2 = arith.constant 0 : i32
    return %arg0, %c0_i32, %c0_i32_0, %c0_i32_1 : i32, i32, i32, i32
  }
  func.func @transform_1(%arg0: i32) -> (i32, i32) {
    %c0_i32 = arith.constant 0 : i32
    %c0_i32_0 = arith.constant 0 : i32
    %c0_i32_1 = arith.constant 0 : i32
    return %c0_i32, %c0_i32_0 : i32, i32
  }
  func.func @transform_2(%arg0: i32) -> (i32, i32) {
    %c0_i32 = arith.constant 0 : i32
    %c0_i32_0 = arith.constant 0 : i32
    %c0_i32_1 = arith.constant 0 : i32
    return %c0_i32, %c0_i32_0 : i32, i32
  }
  func.func @transform_3(%arg0: i32) -> (i32, i32, i32) {
    %c0_i32 = arith.constant 0 : i32
    %c0_i32_0 = arith.constant 0 : i32
    %c0_i32_1 = arith.constant 0 : i32
    return %arg0, %c0_i32, %c0_i32_0 : i32, i32, i32
  }
}

module attributes {stable_mosaic.version = 11 : i64} {
  func.func @_conv_relu_pool_kernel(%arg0: i32, %arg1: memref<1x4x36x576xbf16, #tpu.memory_space<vmem>>, %arg2: memref<576x128xbf16, #tpu.memory_space<vmem>>, %arg3: memref<1x128xf32, #tpu.memory_space<vmem>>, %arg4: memref<1x36x128xf32, #tpu.memory_space<vmem>>) attributes {dimension_semantics = [#tpu.dimension_semantics<parallel>], iteration_bounds = array<i64: 2>, scalar_prefetch = 0 : i64, scratch_operands = 0 : i64, tpu.core_type = #tpu.core_type<tc>, window_params = [{transform_indices = @transform_0, window_bounds = array<i64: 1, 4, 36, 576>}, {pipeline_mode = #tpu.pipeline_mode<synchronous>, transform_indices = @transform_1, window_bounds = array<i64: 576, 128>}, {pipeline_mode = #tpu.pipeline_mode<synchronous>, transform_indices = @transform_2, window_bounds = array<i64: 1, 128>}, {transform_indices = @transform_3, window_bounds = array<i64: 1, 36, 128>}]} {
    %c0 = arith.constant 0 : index
    %c0_0 = arith.constant 0 : index
    %0 = vector.load %arg2[%c0, %c0_0] : memref<576x128xbf16, #tpu.memory_space<vmem>>, vector<576x128xbf16>
    %c0_1 = arith.constant 0 : index
    %c0_2 = arith.constant 0 : index
    %c0_3 = arith.constant 0 : index
    %c0_4 = arith.constant 0 : index
    %1 = vector.load %arg1[%c0_1, %c0_2, %c0_3, %c0_4] : memref<1x4x36x576xbf16, #tpu.memory_space<vmem>>, vector<1x1x36x576xbf16>
    %2 = vector.shape_cast %1 : vector<1x1x36x576xbf16> to vector<36x576xbf16>
    %cst = arith.constant dense<0.000000e+00> : vector<36x128xf32>
    %3 = tpu.matmul %2, %0, %cst {dimension_numbers = #tpu.dot_dimension_numbers<[1], [0], [0], [1], [0, 0, 1, 1], [], []>} : vector<36x576xbf16>, vector<576x128xbf16>, vector<36x128xf32> -> vector<36x128xf32>
    %c0_5 = arith.constant 0 : index
    %c1 = arith.constant 1 : index
    %c0_6 = arith.constant 0 : index
    %c0_7 = arith.constant 0 : index
    %4 = vector.load %arg1[%c0_5, %c1, %c0_6, %c0_7] : memref<1x4x36x576xbf16, #tpu.memory_space<vmem>>, vector<1x1x36x576xbf16>
    %5 = vector.shape_cast %4 : vector<1x1x36x576xbf16> to vector<36x576xbf16>
    %cst_8 = arith.constant dense<0.000000e+00> : vector<36x128xf32>
    %6 = tpu.matmul %5, %0, %cst_8 {dimension_numbers = #tpu.dot_dimension_numbers<[1], [0], [0], [1], [0, 0, 1, 1], [], []>} : vector<36x576xbf16>, vector<576x128xbf16>, vector<36x128xf32> -> vector<36x128xf32>
    %7 = arith.maximumf %3, %6 : vector<36x128xf32>
    %c0_9 = arith.constant 0 : index
    %c2 = arith.constant 2 : index
    %c0_10 = arith.constant 0 : index
    %c0_11 = arith.constant 0 : index
    %8 = vector.load %arg1[%c0_9, %c2, %c0_10, %c0_11] : memref<1x4x36x576xbf16, #tpu.memory_space<vmem>>, vector<1x1x36x576xbf16>
    %9 = vector.shape_cast %8 : vector<1x1x36x576xbf16> to vector<36x576xbf16>
    %cst_12 = arith.constant dense<0.000000e+00> : vector<36x128xf32>
    %10 = tpu.matmul %9, %0, %cst_12 {dimension_numbers = #tpu.dot_dimension_numbers<[1], [0], [0], [1], [0, 0, 1, 1], [], []>} : vector<36x576xbf16>, vector<576x128xbf16>, vector<36x128xf32> -> vector<36x128xf32>
    %11 = arith.maximumf %7, %10 : vector<36x128xf32>
    %c0_13 = arith.constant 0 : index
    %c3 = arith.constant 3 : index
    %c0_14 = arith.constant 0 : index
    %c0_15 = arith.constant 0 : index
    %12 = vector.load %arg1[%c0_13, %c3, %c0_14, %c0_15] : memref<1x4x36x576xbf16, #tpu.memory_space<vmem>>, vector<1x1x36x576xbf16>
    %13 = vector.shape_cast %12 : vector<1x1x36x576xbf16> to vector<36x576xbf16>
    %cst_16 = arith.constant dense<0.000000e+00> : vector<36x128xf32>
    %14 = tpu.matmul %13, %0, %cst_16 {dimension_numbers = #tpu.dot_dimension_numbers<[1], [0], [0], [1], [0, 0, 1, 1], [], []>} : vector<36x576xbf16>, vector<576x128xbf16>, vector<36x128xf32> -> vector<36x128xf32>
    %15 = arith.maximumf %11, %14 : vector<36x128xf32>
    %c0_17 = arith.constant 0 : index
    %c0_18 = arith.constant 0 : index
    %16 = vector.load %arg3[%c0_17, %c0_18] : memref<1x128xf32, #tpu.memory_space<vmem>>, vector<1x128xf32>
    %17 = vector.broadcast %16 : vector<1x128xf32> to vector<36x128xf32>
    %18 = arith.addf %15, %17 : vector<36x128xf32>
    %cst_19 = arith.constant 0.000000e+00 : f32
    %19 = vector.broadcast %cst_19 : f32 to vector<36x128xf32>
    %20 = arith.maximumf %18, %19 : vector<36x128xf32>
    %c0_20 = arith.constant 0 : index
    %c0_21 = arith.constant 0 : index
    %c0_22 = arith.constant 0 : index
    %21 = vector.load %arg4[%c0_20, %c0_21, %c0_22] : memref<1x36x128xf32, #tpu.memory_space<vmem>>, vector<1x36x128xf32>
    %22 = vector.shape_cast %21 : vector<1x36x128xf32> to vector<36x128xf32>
    %23 = vector.shape_cast %20 : vector<36x128xf32> to vector<1x36x128xf32>
    tpu.vector_store %arg4[%c0_20, %c0_21, %c0_22], %23 {strides = array<i32>} : memref<1x36x128xf32, #tpu.memory_space<vmem>>, vector<1x36x128xf32>,
    return
  }
  func.func @transform_0(%arg0: i32) -> (i32, i32, i32, i32) {
    %c0_i32 = arith.constant 0 : i32
    %c0_i32_0 = arith.constant 0 : i32
    %c0_i32_1 = arith.constant 0 : i32
    %c0_i32_2 = arith.constant 0 : i32
    return %arg0, %c0_i32, %c0_i32_0, %c0_i32_1 : i32, i32, i32, i32
  }
  func.func @transform_1(%arg0: i32) -> (i32, i32) {
    %c0_i32 = arith.constant 0 : i32
    %c0_i32_0 = arith.constant 0 : i32
    %c0_i32_1 = arith.constant 0 : i32
    return %c0_i32, %c0_i32_0 : i32, i32
  }
  func.func @transform_2(%arg0: i32) -> (i32, i32) {
    %c0_i32 = arith.constant 0 : i32
    %c0_i32_0 = arith.constant 0 : i32
    %c0_i32_1 = arith.constant 0 : i32
    return %c0_i32, %c0_i32_0 : i32, i32
  }
  func.func @transform_3(%arg0: i32) -> (i32, i32, i32) {
    %c0_i32 = arith.constant 0 : i32
    %c0_i32_0 = arith.constant 0 : i32
    %c0_i32_1 = arith.constant 0 : i32
    return %arg0, %c0_i32, %c0_i32_0 : i32, i32, i32
  }
}

module attributes {stable_mosaic.version = 11 : i64} {
  func.func @_fc_stack_kernel(%arg0: i32, %arg1: memref<2x4608xbf16, #tpu.memory_space<vmem>>, %arg2: memref<4608x120xbf16, #tpu.memory_space<vmem>>, %arg3: memref<1x120xf32, #tpu.memory_space<vmem>>, %arg4: memref<120x84xbf16, #tpu.memory_space<vmem>>, %arg5: memref<1x84xf32, #tpu.memory_space<vmem>>, %arg6: memref<84x10xbf16, #tpu.memory_space<vmem>>, %arg7: memref<1x10xf32, #tpu.memory_space<vmem>>, %arg8: memref<2x10xf32, #tpu.memory_space<vmem>>) attributes {dimension_semantics = [#tpu.dimension_semantics<arbitrary>], iteration_bounds = array<i64: 1>, scalar_prefetch = 0 : i64, scratch_operands = 0 : i64, tpu.core_type = #tpu.core_type<tc>, window_params = [{pipeline_mode = #tpu.pipeline_mode<synchronous>, transform_indices = @transform_0, window_bounds = array<i64: 2, 4608>}, {pipeline_mode = #tpu.pipeline_mode<synchronous>, transform_indices = @transform_1, window_bounds = array<i64: 4608, 120>}, {pipeline_mode = #tpu.pipeline_mode<synchronous>, transform_indices = @transform_2, window_bounds = array<i64: 1, 120>}, {pipeline_mode = #tpu.pipeline_mode<synchronous>, transform_indices = @transform_3, window_bounds = array<i64: 120, 84>}, {pipeline_mode = #tpu.pipeline_mode<synchronous>, transform_indices = @transform_4, window_bounds = array<i64: 1, 84>}, {pipeline_mode = #tpu.pipeline_mode<synchronous>, transform_indices = @transform_5, window_bounds = array<i64: 84, 10>}, {pipeline_mode = #tpu.pipeline_mode<synchronous>, transform_indices = @transform_6, window_bounds = array<i64: 1, 10>}, {pipeline_mode = #tpu.pipeline_mode<synchronous>, transform_indices = @transform_7, window_bounds = array<i64: 2, 10>}]} {
    %c0 = arith.constant 0 : index
    %c0_0 = arith.constant 0 : index
    %0 = vector.load %arg1[%c0, %c0_0] : memref<2x4608xbf16, #tpu.memory_space<vmem>>, vector<2x4608xbf16>
    %c0_1 = arith.constant 0 : index
    %c0_2 = arith.constant 0 : index
    %1 = vector.load %arg2[%c0_1, %c0_2] : memref<4608x120xbf16, #tpu.memory_space<vmem>>, vector<4608x120xbf16>
    %cst = arith.constant dense<0.000000e+00> : vector<2x120xf32>
    %2 = tpu.matmul %0, %1, %cst {dimension_numbers = #tpu.dot_dimension_numbers<[1], [0], [0], [1], [0, 0, 1, 1], [], []>} : vector<2x4608xbf16>, vector<4608x120xbf16>, vector<2x120xf32> -> vector<2x120xf32>
    %c0_3 = arith.constant 0 : index
    %c0_4 = arith.constant 0 : index
    %3 = vector.load %arg3[%c0_3, %c0_4] : memref<1x120xf32, #tpu.memory_space<vmem>>, vector<1x120xf32>
    %4 = vector.broadcast %3 : vector<1x120xf32> to vector<2x120xf32>
    %5 = arith.addf %2, %4 : vector<2x120xf32>
    %cst_5 = arith.constant 0.000000e+00 : f32
    %6 = vector.broadcast %cst_5 : f32 to vector<2x120xf32>
    %7 = arith.maximumf %5, %6 : vector<2x120xf32>
    %8 = arith.truncf %7 : vector<2x120xf32> to vector<2x120xbf16>
    %c0_6 = arith.constant 0 : index
    %c0_7 = arith.constant 0 : index
    %9 = vector.load %arg4[%c0_6, %c0_7] : memref<120x84xbf16, #tpu.memory_space<vmem>>, vector<120x84xbf16>
    %cst_8 = arith.constant dense<0.000000e+00> : vector<2x84xf32>
    %10 = tpu.matmul %8, %9, %cst_8 {dimension_numbers = #tpu.dot_dimension_numbers<[1], [0], [0], [1], [0, 0, 1, 1], [], []>} : vector<2x120xbf16>, vector<120x84xbf16>, vector<2x84xf32> -> vector<2x84xf32>
    %c0_9 = arith.constant 0 : index
    %c0_10 = arith.constant 0 : index
    %11 = vector.load %arg5[%c0_9, %c0_10] : memref<1x84xf32, #tpu.memory_space<vmem>>, vector<1x84xf32>
    %12 = vector.broadcast %11 : vector<1x84xf32> to vector<2x84xf32>
    %13 = arith.addf %10, %12 : vector<2x84xf32>
    %cst_11 = arith.constant 0.000000e+00 : f32
    %14 = vector.broadcast %cst_11 : f32 to vector<2x84xf32>
    %15 = arith.maximumf %13, %14 : vector<2x84xf32>
    %16 = arith.truncf %15 : vector<2x84xf32> to vector<2x84xbf16>
    %c0_12 = arith.constant 0 : index
    %c0_13 = arith.constant 0 : index
    %17 = vector.load %arg6[%c0_12, %c0_13] : memref<84x10xbf16, #tpu.memory_space<vmem>>, vector<84x10xbf16>
    %cst_14 = arith.constant dense<0.000000e+00> : vector<2x10xf32>
    %18 = tpu.matmul %16, %17, %cst_14 {dimension_numbers = #tpu.dot_dimension_numbers<[1], [0], [0], [1], [0, 0, 1, 1], [], []>} : vector<2x84xbf16>, vector<84x10xbf16>, vector<2x10xf32> -> vector<2x10xf32>
    %c0_15 = arith.constant 0 : index
    %c0_16 = arith.constant 0 : index
    %19 = vector.load %arg7[%c0_15, %c0_16] : memref<1x10xf32, #tpu.memory_space<vmem>>, vector<1x10xf32>
    %20 = vector.broadcast %19 : vector<1x10xf32> to vector<2x10xf32>
    %21 = arith.addf %18, %20 : vector<2x10xf32>
    %c0_17 = arith.constant 0 : index
    %c0_18 = arith.constant 0 : index
    %22 = vector.load %arg8[%c0_17, %c0_18] : memref<2x10xf32, #tpu.memory_space<vmem>>, vector<2x10xf32>
    tpu.vector_store %arg8[%c0_17, %c0_18], %21 {strides = array<i32>} : memref<2x10xf32, #tpu.memory_space<vmem>>, vector<2x10xf32>,
    return
  }
  func.func @transform_0(%arg0: i32) -> (i32, i32) {
    %c0_i32 = arith.constant 0 : i32
    %c0_i32_0 = arith.constant 0 : i32
    %c0_i32_1 = arith.constant 0 : i32
    return %c0_i32, %c0_i32_0 : i32, i32
  }
  func.func @transform_1(%arg0: i32) -> (i32, i32) {
    %c0_i32 = arith.constant 0 : i32
    %c0_i32_0 = arith.constant 0 : i32
    %c0_i32_1 = arith.constant 0 : i32
    return %c0_i32, %c0_i32_0 : i32, i32
  }
  func.func @transform_2(%arg0: i32) -> (i32, i32) {
    %c0_i32 = arith.constant 0 : i32
    %c0_i32_0 = arith.constant 0 : i32
    %c0_i32_1 = arith.constant 0 : i32
    return %c0_i32, %c0_i32_0 : i32, i32
  }
  func.func @transform_3(%arg0: i32) -> (i32, i32) {
    %c0_i32 = arith.constant 0 : i32
    %c0_i32_0 = arith.constant 0 : i32
    %c0_i32_1 = arith.constant 0 : i32
    return %c0_i32, %c0_i32_0 : i32, i32
  }
  func.func @transform_4(%arg0: i32) -> (i32, i32) {
    %c0_i32 = arith.constant 0 : i32
    %c0_i32_0 = arith.constant 0 : i32
    %c0_i32_1 = arith.constant 0 : i32
    return %c0_i32, %c0_i32_0 : i32, i32
  }
  func.func @transform_5(%arg0: i32) -> (i32, i32) {
    %c0_i32 = arith.constant 0 : i32
    %c0_i32_0 = arith.constant 0 : i32
    %c0_i32_1 = arith.constant 0 : i32
    return %c0_i32, %c0_i32_0 : i32, i32
  }
  func.func @transform_6(%arg0: i32) -> (i32, i32) {
    %c0_i32 = arith.constant 0 : i32
    %c0_i32_0 = arith.constant 0 : i32
    %c0_i32_1 = arith.constant 0 : i32
    return %c0_i32, %c0_i32_0 : i32, i32
  }
  func.func @transform_7(%arg0: i32) -> (i32, i32) {
    %c0_i32 = arith.constant 0 : i32
    %c0_i32_0 = arith.constant 0 : i32
    %c0_i32_1 = arith.constant 0 : i32
    return %c0_i32, %c0_i32_0 : i32, i32
  }
}

</mosaic_0001>

<llo_original>
// kernel: net_forward.3
$region0: #{net_forward.3}
  #allocation0 [shape = 'u32[]', space=smem, size = 0x4, offset = 0x4, fixed_abs, tag = 'smem constant byte address 0x4 - core index']
  #allocation1 [shape = 'u32[144,128]{1,0:T(1,128)}', space=vmem, size = 0x12000, scoped, tag = 'internal scratch']
  %s0 = inlined_call_operand.vmem [shape: bf16[2,4,225,27], index: 0, kind: input, shape index: {}]
  %s1 = inlined_call_operand.vmem [shape: bf16[27,64], index: 1, kind: input, shape index: {}]
  %s2 = inlined_call_operand.vmem [shape: f32[1,64], index: 2, kind: input, shape index: {}]
  %s3 = inlined_call_operand.vmem [shape: f32[2,225,64], index: 3, kind: output, shape index: {}]
  %s4 = sld [smem:[#allocation0]]
  $region45: #{net_forward.3} parent=0
    _
  %s6 = ssub.s32 1, %s4
  %s7 = scalar_select 0, %s6, %s4
  loop: start=0, step=1, limit=4
  $region2: #{net_forward.3} parent=0 // loop_pre_header
    _
  $region3: #{net_forward.3} parent=0 // loop_header
    %s9 = sphi 0, %s13
    %p10 = scmp.ge.s32.totalorder %s9, 4
    %s19 = sphi 0, %s21
    %s22 = sphi 0, %s19
    %s23 = sphi 0, %s22
    %s39 = sphi 0, %s23
    %s43 = sphi 0, %s43
    %s45 = sphi 0, %s43
    %s46 = sphi 0, %s45
    %s60 = sphi 0, %s46
    %s64 = sphi 0, %s64
    %s66 = sphi 0, %s64
    %s67 = sphi 0, %s66
    %s81 = sphi 0, %s67
    %s87 = sphi 0, %s89
    %s90 = sphi 0, %s87
    %s91 = sphi 0, %s90
    %s107 = sphi 0, %s91
  $region4: #{net_forward.3} parent=0 // loop_header_branch
    %12 = sbr.rel (%p10) target = $region8
  $region5: #{net_forward.3} parent=0 // loop_body
    %s14 = ssub.s32 %s9, 1
    %s15 = ssub.s32 %s9, 2
    %s16 = sadd.s32 %s9, 1
    %s17 = ssub.s32 %s9, %s16
    %p18 = scmp.eq.s32.totalorder %s17, 0
    %s20 = sadd.s32 %s19, 1
    %s21 = scalar_select %p18, %s19, %s20
    %p24 = pneg %p18
    %p25 = scmp.eq.s32.totalorder %s9, 1
    %p26 = por %p24, %p25
    %p27 = scmp.ne.s32.totalorder %s19, %s22
    %p28 = scmp.eq.s32.totalorder %s9, 0
    %p29 = por %p27, %p28
    %p30 = scmp.ne.s32.totalorder %s19, %s22
    %p31 = scmp.eq.s32.totalorder %s14, 1
    %p32 = por %p30, %p31
    %p33 = scmp.ne.s32.totalorder %s22, %s23
    %p34 = scmp.eq.s32.totalorder %s14, 0
    %p35 = por %p33, %p34
    %p36 = scmp.ne.s32.totalorder %s22, %s23
    %p37 = scmp.eq.s32.totalorder %s15, 1
    %p38 = por %p36, %p37
    %p40 = scmp.ne.s32.totalorder %s23, %s39
    %p41 = scmp.eq.s32.totalorder %s15, 0
    %p42 = por %p40, %p41
    %s44 = sadd.s32 %s43, 1
    %p47 = scmp.eq.s32.totalorder %s9, 1
    %p48 = scmp.ne.s32.totalorder %s43, %s45
    %p49 = scmp.eq.s32.totalorder %s9, 0
    %p50 = por %p48, %p49
    %p51 = scmp.ne.s32.totalorder %s43, %s45
    %p52 = scmp.eq.s32.totalorder %s14, 1
    %p53 = por %p51, %p52
    %p54 = scmp.ne.s32.totalorder %s45, %s46
    %p55 = scmp.eq.s32.totalorder %s14, 0
    %p56 = por %p54, %p55
    %p57 = scmp.ne.s32.totalorder %s45, %s46
    %p58 = scmp.eq.s32.totalorder %s15, 1
    %p59 = por %p57, %p58
    %p61 = scmp.ne.s32.totalorder %s46, %s60
    %p62 = scmp.eq.s32.totalorder %s15, 0
    %p63 = por %p61, %p62
    %s65 = sadd.s32 %s64, 1
    %p68 = scmp.eq.s32.totalorder %s9, 1
    %p69 = scmp.ne.s32.totalorder %s64, %s66
    %p70 = scmp.eq.s32.totalorder %s9, 0
    %p71 = por %p69, %p70
    %p72 = scmp.ne.s32.totalorder %s64, %s66
    %p73 = scmp.eq.s32.totalorder %s14, 1
    %p74 = por %p72, %p73
    %p75 = scmp.ne.s32.totalorder %s66, %s67
    %p76 = scmp.eq.s32.totalorder %s14, 0
    %p77 = por %p75, %p76
    %p78 = scmp.ne.s32.totalorder %s66, %s67
    %p79 = scmp.eq.s32.totalorder %s15, 1
    %p80 = por %p78, %p79
    %p82 = scmp.ne.s32.totalorder %s67, %s81
    %p83 = scmp.eq.s32.totalorder %s15, 0
    %p84 = por %p82, %p83
    %s85 = ssub.s32 %s9, %s16
    %p86 = scmp.eq.s32.totalorder %s85, 0
    %s88 = sadd.s32 %s87, 1
    %s89 = scalar_select %p86, %s87, %s88
    %p92 = pneg %p86
    %p93 = scmp.eq.s32.totalorder %s9, 1
    %p94 = por %p92, %p93
    %p95 = scmp.ne.s32.totalorder %s87, %s90
    %p96 = scmp.eq.s32.totalorder %s9, 0
    %p97 = por %p95, %p96
    %p98 = scmp.ne.s32.totalorder %s87, %s90
    %p99 = scmp.eq.s32.totalorder %s14, 1
    %p100 = por %p98, %p99
    %p101 = scmp.ne.s32.totalorder %s90, %s91
    %p102 = scmp.eq.s32.totalorder %s14, 0
    %p103 = por %p101, %p102
    %p104 = scmp.ne.s32.totalorder %s90, %s91
    %p105 = scmp.eq.s32.totalorder %s15, 1
    %p106 = por %p104, %p105
    %p108 = scmp.ne.s32.totalorder %s91, %s107
    %p109 = scmp.eq.s32.totalorder %s15, 0
    %p110 = por %p108, %p109
    %p111 = scmp.le.s32.totalorder 1, %s9
    %p112 = scmp.lt.s32.totalorder %s9, 3
    %p113 = pnand %p111, %p112
    %p114 = pneg %p113
    // Predicated region
    $region9: #{net_forward.3} parent=5 // pred_check
      _
    $region10: #{net_forward.3} parent=5 // pred_check_branch
      %116 = sbr.rel (%p113) target = $region12
    $region11: #{net_forward.3} parent=5 // pred_region
      %s117 = ssub.s32 %s9, 1
      // Predicated region
      $region13: #{net_forward.3} parent=11 // pred_check
        %p118 = pneg %p56
      $region14: #{net_forward.3} parent=11 // pred_check_branch
        %120 = sbr.rel (%p118) target = $region16
      $region15: #{net_forward.3} parent=11 // pred_region
        _
      $region16: #{net_forward.3} parent=11 // pred_fallthru
        _
      // Predicated region
      $region17: #{net_forward.3} parent=11 // pred_check
        %p121 = pneg %p77
      $region18: #{net_forward.3} parent=11 // pred_check_branch
        %123 = sbr.rel (%p121) target = $region20
      $region19: #{net_forward.3} parent=11 // pred_region
        _
      $region20: #{net_forward.3} parent=11 // pred_fallthru
        _
    $region12: #{net_forward.3} parent=5 // pred_fallthru
      _
    %p124 = scmp.lt.s32.totalorder %s9, 2
    // Predicated region
    $region21: #{net_forward.3} parent=5 // pred_check
      %p125 = pneg %p124
    $region22: #{net_forward.3} parent=5 // pred_check_branch
      %127 = sbr.rel (%p125) target = $region24
    $region23: #{net_forward.3} parent=5 // pred_region
      // Predicated region
      $region25: #{net_forward.3} parent=23 // pred_check
        %p128 = pneg %p29
      $region26: #{net_forward.3} parent=23 // pred_check_branch
        %130 = sbr.rel (%p128) target = $region28
      $region27: #{net_forward.3} parent=23 // pred_region
        %p131 = scmp.lt.s32.totalorder %s9, 1
        %s132 = scalar_select %p131, %s9, 1
        %s133 = smul.addr %s132, 116
        %s134 = smul.addr %s133, 4
        %s135 = scalar_lea.vmem %s0, %s134
      $region28: #{net_forward.3} parent=23 // pred_fallthru
        _
    $region24: #{net_forward.3} parent=5 // pred_fallthru
      _
    %p136 = scmp.le.s32.totalorder 1, %s9
    %p137 = scmp.lt.s32.totalorder %s9, 3
    %p138 = pnand %p136, %p137
    %p139 = pneg %p138
    // Predicated region
    $region29: #{net_forward.3} parent=5 // pred_check
      _
    $region30: #{net_forward.3} parent=5 // pred_check_branch
      %141 = sbr.rel (%p138) target = $region32
    $region31: #{net_forward.3} parent=5 // pred_region
      %s142 = ssub.s32 %s9, 1
      %p143 = scmp.lt.s32.totalorder %s14, 1
      %s144 = scalar_select %p143, %s14, 1
      %s145 = smul.addr %s144, 116
      %s146 = smul.addr %s145, 4
      %s147 = scalar_lea.vmem %s0, %s146
      %p148 = pneg %p35
      %p149 = pneg %p32
      %p150 = pneg %p56
      %p151 = pneg %p53
      %p152 = pneg %p77
      %p153 = pneg %p74
      %p154 = pneg %p103
      %p155 = pneg %p100
      %p156 = scmp.lt.s32.totalorder %s14, 1
      %s157 = scalar_select %p156, %s14, 1
      %s158 = smul.addr %s157, 29
      %s159 = smul.addr %s158, 8
      %s160 = scalar_lea.vmem %s3, %s159
      %p161 = scmp.lt.s32.totalorder %s14, 1
      %s162 = scalar_select %p161, %s14, 1
      %s163 = smul.addr %s162, 116
      %s164 = smul.addr %s163, 4
      %s165 = scalar_lea.vmem %s0, %s164
      %p166 = scmp.lt.s32.totalorder %s14, 1
      %s167 = scalar_select %p166, %s14, 1
      %s168 = smul.addr %s167, 29
      %s169 = smul.addr %s168, 8
      %s170 = scalar_lea.vmem %s3, %s169
      %v172 = vld [vmem:[%s1] sm:$0xf]
      %v173 = vld [vmem:[%s1 + $0x4] sm:$0xf]
      %v174 = vld [vmem:[%s1 + $0x8] sm:$0xf]
      %v175 = vld [vmem:[%s1 + $0xc] sm:$0x3]
      %v176 = vld [vmem:[%s165] sm:$0xf]
      %v177 = vld [vmem:[%s165 + $0x4] sm:$0xf]
      %v178 = vld [vmem:[%s165 + $0x8] sm:$0xf]
      %v179 = vld [vmem:[%s165 + $0xc] sm:$0xf]
      %v180 = vld [vmem:[%s165 + $0x10] sm:$0xf]
      %v181 = vld [vmem:[%s165 + $0x14] sm:$0xf]
      %v182 = vld [vmem:[%s165 + $0x18] sm:$0xf]
      %v183 = vld [vmem:[%s165 + $0x1c] sm:$0xf]
      %v184 = vld [vmem:[%s165 + $0x20] sm:$0xf]
      %v185 = vld [vmem:[%s165 + $0x24] sm:$0xf]
      %v186 = vld [vmem:[%s165 + $0x28] sm:$0xf]
      %v187 = vld [vmem:[%s165 + $0x2c] sm:$0xf]
      %v188 = vld [vmem:[%s165 + $0x30] sm:$0xf]
      %v189 = vld [vmem:[%s165 + $0x34] sm:$0xf]
      %v190 = vld [vmem:[%s165 + $0x38] sm:$0xf]
      %v191 = vld [vmem:[%s165 + $0x3c] sm:$0xf]
      %v192 = vld [vmem:[%s165 + $0x40] sm:$0xf]
      %v193 = vld [vmem:[%s165 + $0x44] sm:$0xf]
      %v194 = vld [vmem:[%s165 + $0x48] sm:$0xf]
      %v195 = vld [vmem:[%s165 + $0x4c] sm:$0xf]
      %v196 = vld [vmem:[%s165 + $0x50] sm:$0xf]
      %v197 = vld [vmem:[%s165 + $0x54] sm:$0xf]
      %v198 = vld [vmem:[%s165 + $0x58] sm:$0xf]
      %v199 = vld [vmem:[%s165 + $0x5c] sm:$0xf]
      %v200 = vld [vmem:[%s165 + $0x60] sm:$0xf]
      %v201 = vld [vmem:[%s165 + $0x64] sm:$0xf]
      %v202 = vld [vmem:[%s165 + $0x68] sm:$0xf]
      %v203 = vld [vmem:[%s165 + $0x6c] sm:$0xf]
      %v204 = vld [vmem:[%s165 + $0x70] sm:$0x1]
      %v234 = vunpack.c.l.b16 %v176
      %v235 = vunpack.c.l.b16 %v177
      %v236 = vunpack.c.l.b16 %v178
      %v237 = vunpack.c.l.b16 %v179
      %v238 = vunpack.c.l.b16 %v180
      %v239 = vunpack.c.l.b16 %v181
      %v240 = vunpack.c.l.b16 %v182
      %v241 = vunpack.c.l.b16 %v183
      %v242 = vunpack.c.l.b16 %v184
      %v243 = vunpack.c.l.b16 %v185
      %v244 = vunpack.c.l.b16 %v186
      %v245 = vunpack.c.l.b16 %v187
      %v246 = vunpack.c.l.b16 %v188
      %v247 = vunpack.c.l.b16 %v189
      %v248 = vunpack.c.l.b16 %v190
      %v249 = vunpack.c.l.b16 %v191
      %v250 = vunpack.c.l.b16 %v192
      %v251 = vunpack.c.l.b16 %v193
      %v252 = vunpack.c.l.b16 %v194
      %v253 = vunpack.c.l.b16 %v195
      %v254 = vunpack.c.l.b16 %v196
      %v255 = vunpack.c.l.b16 %v197
      %v256 = vunpack.c.l.b16 %v198
      %v257 = vunpack.c.l.b16 %v199
      %v258 = vunpack.c.l.b16 %v200
      %v259 = vunpack.c.l.b16 %v201
      %v260 = vunpack.c.l.b16 %v202
      %v261 = vunpack.c.l.b16 %v203
      %v262 = vunpack.c.l.b16 %v204
      %v263 = vpack.c.b16 %v235, %v234
      %v264 = vpack.c.b16 %v237, %v236
      %v265 = vpack.c.b16 %v239, %v238
      %v266 = vpack.c.b16 %v241, %v240
      %v267 = vpack.c.b16 %v243, %v242
      %v268 = vpack.c.b16 %v245, %v244
      %v269 = vpack.c.b16 %v247, %v246
      %v270 = vpack.c.b16 %v249, %v248
      %v271 = vpack.c.b16 %v251, %v250
      %v272 = vpack.c.b16 %v253, %v252
      %v273 = vpack.c.b16 %v255, %v254
      %v274 = vpack.c.b16 %v257, %v256
      %v275 = vpack.c.b16 %v259, %v258
      %v276 = vpack.c.b16 %v261, %v260
      %v277 = vpack.c.b16 %v262, %v262
      %v282 = vunpack.c.l.b16 %v172
      %v283 = vunpack.c.l.b16 %v173
      %v284 = vunpack.c.l.b16 %v174
      %v285 = vunpack.c.l.b16 %v175
      %v286 = vpack.c.b16 %v283, %v282
      %v287 = vpack.c.b16 %v285, %v284
      %vm289 = vcmask 220160
      %v291 = vsel %vm289, %v263, 0
      %v294 = vsel %vm289, %v264, 0
      %v297 = vsel %vm289, %v265, 0
      %v300 = vsel %vm289, %v266, 0
      %v303 = vsel %vm289, %v267, 0
      %v306 = vsel %vm289, %v268, 0
      %v309 = vsel %vm289, %v269, 0
      %v312 = vsel %vm289, %v270, 0
      %v315 = vsel %vm289, %v271, 0
      %v318 = vsel %vm289, %v272, 0
      %v321 = vsel %vm289, %v273, 0
      %v324 = vsel %vm289, %v274, 0
      %v327 = vsel %vm289, %v275, 0
      %v330 = vsel %vm289, %v276, 0
      %v333 = vsel %vm289, %v277, 0
      %vm335 = vcmask 1044480
      %vm336 = vcmask 1045504
      %v337 = vsel %vm335, 4294967295, 65535
      %v338 = vsel %vm336, %v337, 0
      %v340 = vand.u32 %v287, %v338
      %342 = vmatprep.subr.bf16.mxu0 0
      %343 = vmatpush1.bf16.msra.mxu0 %v286
      %344 = vmatprep.subr.bf16.mxu0 0
      %345 = vmatpush1.bf16.msra.mxu0 %v340
      %346 = vmatprep.subr.bf16.mxu0 0
      %347 = vmatpush1.bf16.msra.mxu0 0
      %348 = vmatprep.subr.bf16.mxu0 0
      %349 = vmatpush1.bf16.msra.mxu0 0
      %350 = vmatprep.subr.bf16.mxu0 0
      %351 = vmatpush1.bf16.msra.mxu0 0
      %352 = vmatprep.subr.bf16.mxu0 0
      %353 = vmatpush1.bf16.msra.mxu0 0
      %354 = vmatprep.subr.bf16.mxu0 0
      %355 = vmatpush1.bf16.msra.mxu0 0
      %356 = vmatprep.subr.bf16.mxu0 0
      %357 = vmatpush1.bf16.msra.mxu0 0
      %358 = vmatprep.subr.bf16.mxu0 0
      %359 = vmatpush1.bf16.msra.mxu0 0
      %360 = vmatprep.subr.bf16.mxu0 0
      %361 = vmatpush1.bf16.msra.mxu0 0
      %362 = vmatprep.subr.bf16.mxu0 0
      %363 = vmatpush1.bf16.msra.mxu0 0
      %364 = vmatprep.subr.bf16.mxu0 0
      %365 = vmatpush1.bf16.msra.mxu0 0
      %366 = vmatprep.subr.bf16.mxu0 0
      %367 = vmatpush1.bf16.msra.mxu0 0
      %368 = vmatprep.subr.bf16.mxu0 0
      %369 = vmatpush1.bf16.msra.mxu0 0
      %370 = vmatprep.subr.bf16.mxu0 0
      %371 = vmatpush1.bf16.msra.mxu0 0
      %372 = vmatprep.subr.bf16.mxu0 0
      %373 = vmatpush1.bf16.msra.mxu0 0
      %374 = vmatprep.mubr.bf16.mxu0 0
      %375 = vmatmul.mubr.bf16.gmra.mrb[0].mxu0 %v291
      %v376 = vpop.f32.mrb[0].mxu0
      %v377 = vadd.f32 0.0, %v376
      %v378 = vpop.f32.mrb[0].mxu0
      %v379 = vpop.f32.mrb[0].mxu0
      %v380 = vadd.f32 0.0, %v379
      %v381 = vpop.f32.mrb[0].mxu0
      %382 = vmatprep.mubr.bf16.mxu0 0
      %383 = vmatmul.mubr.bf16.gmra.mrb[0].mxu0 %v294
      %v384 = vpop.f32.mrb[0].mxu0
      %v385 = vadd.f32 0.0, %v384
      %v386 = vpop.f32.mrb[0].mxu0
      %v387 = vpop.f32.mrb[0].mxu0
      %v388 = vadd.f32 0.0, %v387
      %v389 = vpop.f32.mrb[0].mxu0
      %390 = vmatprep.mubr.bf16.mxu0 0
      %391 = vmatmul.mubr.bf16.gmra.mrb[0].mxu0 %v297
      %v392 = vpop.f32.mrb[0].mxu0
      %v393 = vadd.f32 0.0, %v392
      %v394 = vpop.f32.mrb[0].mxu0
      %v395 = vpop.f32.mrb[0].mxu0
      %v396 = vadd.f32 0.0, %v395
      %v397 = vpop.f32.mrb[0].mxu0
      %398 = vmatprep.mubr.bf16.mxu0 0
      %399 = vmatmul.mubr.bf16.gmra.mrb[0].mxu0 %v300
      %v400 = vpop.f32.mrb[0].mxu0
      %v401 = vadd.f32 0.0, %v400
      %v402 = vpop.f32.mrb[0].mxu0
      %v403 = vpop.f32.mrb[0].mxu0
      %v404 = vadd.f32 0.0, %v403
      %v405 = vpop.f32.mrb[0].mxu0
      %406 = vmatprep.mubr.bf16.mxu0 0
      %407 = vmatmul.mubr.bf16.gmra.mrb[0].mxu0 %v303
      %v408 = vpop.f32.mrb[0].mxu0
      %v409 = vadd.f32 0.0, %v408
      %v410 = vpop.f32.mrb[0].mxu0
      %v411 = vpop.f32.mrb[0].mxu0
      %v412 = vadd.f32 0.0, %v411
      %v413 = vpop.f32.mrb[0].mxu0
      %414 = vmatprep.mubr.bf16.mxu0 0
      %415 = vmatmul.mubr.bf16.gmra.mrb[0].mxu0 %v306
      %v416 = vpop.f32.mrb[0].mxu0
      %v417 = vadd.f32 0.0, %v416
      %v418 = vpop.f32.mrb[0].mxu0
      %v419 = vpop.f32.mrb[0].mxu0
      %v420 = vadd.f32 0.0, %v419
      %v421 = vpop.f32.mrb[0].mxu0
      %422 = vmatprep.mubr.bf16.mxu0 0
      %423 = vmatmul.mubr.bf16.gmra.mrb[0].mxu0 %v309
      %v424 = vpop.f32.mrb[0].mxu0
      %v425 = vadd.f32 0.0, %v424
      %v426 = vpop.f32.mrb[0].mxu0
      %v427 = vpop.f32.mrb[0].mxu0
      %v428 = vadd.f32 0.0, %v427
      %v429 = vpop.f32.mrb[0].mxu0
      %430 = vmatprep.mubr.bf16.mxu0 0
      %431 = vmatmul.mubr.bf16.gmra.mrb[0].mxu0 %v312
      %v432 = vpop.f32.mrb[0].mxu0
      %v433 = vadd.f32 0.0, %v432
      %v434 = vpop.f32.mrb[0].mxu0
      %v435 = vpop.f32.mrb[0].mxu0
      %v436 = vadd.f32 0.0, %v435
      %v437 = vpop.f32.mrb[0].mxu0
      %438 = vmatprep.mubr.bf16.mxu0 0
      %439 = vmatmul.mubr.bf16.gmra.mrb[0].mxu0 %v315
      %v440 = vpop.f32.mrb[0].mxu0
      %v441 = vadd.f32 0.0, %v440
      %v442 = vpop.f32.mrb[0].mxu0
      %v443 = vpop.f32.mrb[0].mxu0
      %v444 = vadd.f32 0.0, %v443
      %v445 = vpop.f32.mrb[0].mxu0
      %446 = vmatprep.mubr.bf16.mxu0 0
      %447 = vmatmul.mubr.bf16.gmra.mrb[0].mxu0 %v318
      %v448 = vpop.f32.mrb[0].mxu0
      %v449 = vadd.f32 0.0, %v448
      %v450 = vpop.f32.mrb[0].mxu0
      %v451 = vpop.f32.mrb[0].mxu0
      %v452 = vadd.f32 0.0, %v451
      %v453 = vpop.f32.mrb[0].mxu0
      %454 = vmatprep.mubr.bf16.mxu0 0
      %455 = vmatmul.mubr.bf16.gmra.mrb[0].mxu0 %v321
      %v456 = vpop.f32.mrb[0].mxu0
      %v457 = vadd.f32 0.0, %v456
      %v458 = vpop.f32.mrb[0].mxu0
      %v459 = vpop.f32.mrb[0].mxu0
      %v460 = vadd.f32 0.0, %v459
      %v461 = vpop.f32.mrb[0].mxu0
      %462 = vmatprep.mubr.bf16.mxu0 0
      %463 = vmatmul.mubr.bf16.gmra.mrb[0].mxu0 %v324
      %v464 = vpop.f32.mrb[0].mxu0
      %v465 = vadd.f32 0.0, %v464
      %v466 = vpop.f32.mrb[0].mxu0
      %v467 = vpop.f32.mrb[0].mxu0
      %v468 = vadd.f32 0.0, %v467
      %v469 = vpop.f32.mrb[0].mxu0
      %470 = vmatprep.mubr.bf16.mxu0 0
      %471 = vmatmul.mubr.bf16.gmra.mrb[0].mxu0 %v327
      %v472 = vpop.f32.mrb[0].mxu0
      %v473 = vadd.f32 0.0, %v472
      %v474 = vpop.f32.mrb[0].mxu0
      %v475 = vpop.f32.mrb[0].mxu0
      %v476 = vadd.f32 0.0, %v475
      %v477 = vpop.f32.mrb[0].mxu0
      %478 = vmatprep.mubr.bf16.mxu0 0
      %479 = vmatmul.mubr.bf16.gmra.mrb[0].mxu0 %v330
      %v480 = vpop.f32.mrb[0].mxu0
      %v481 = vadd.f32 0.0, %v480
      %v482 = vpop.f32.mrb[0].mxu0
      %v483 = vpop.f32.mrb[0].mxu0
      %v484 = vadd.f32 0.0, %v483
      %v485 = vpop.f32.mrb[0].mxu0
      %486 = vmatprep.mubr.bf16.mxu0 0
      %487 = vmatmul.mubr.bf16.gmra.mrb[0].mxu0 %v333
      %v488 = vpop.f32.mrb[0].mxu0
      %v489 = vadd.f32 0.0, %v488
      %v490 = vpop.f32.mrb[0].mxu0
      %v491 = vpop.f32.mrb[0].mxu0
      %v492 = vpop.f32.mrb[0].mxu0
      %493 = vdwg.mxu0
      %s494 = scalar_lea.vmem %s165, 116
      %v495 = vld [vmem:[%s494] sm:$0xf]
      %v496 = vld [vmem:[%s494 + $0x4] sm:$0xf]
      %v497 = vld [vmem:[%s494 + $0x8] sm:$0xf]
      %v498 = vld [vmem:[%s494 + $0xc] sm:$0xf]
      %v499 = vld [vmem:[%s494 + $0x10] sm:$0xf]
      %v500 = vld [vmem:[%s494 + $0x14] sm:$0xf]
      %v501 = vld [vmem:[%s494 + $0x18] sm:$0xf]
      %v502 = vld [vmem:[%s494 + $0x1c] sm:$0xf]
      %v503 = vld [vmem:[%s494 + $0x20] sm:$0xf]
      %v504 = vld [vmem:[%s494 + $0x24] sm:$0xf]
      %v505 = vld [vmem:[%s494 + $0x28] sm:$0xf]
      %v506 = vld [vmem:[%s494 + $0x2c] sm:$0xf]
      %v507 = vld [vmem:[%s494 + $0x30] sm:$0xf]
      %v508 = vld [vmem:[%s494 + $0x34] sm:$0xf]
      %v509 = vld [vmem:[%s494 + $0x38] sm:$0xf]
      %v510 = vld [vmem:[%s494 + $0x3c] sm:$0xf]
      %v511 = vld [vmem:[%s494 + $0x40] sm:$0xf]
      %v512 = vld [vmem:[%s494 + $0x44] sm:$0xf]
      %v513 = vld [vmem:[%s494 + $0x48] sm:$0xf]
      %v514 = vld [vmem:[%s494 + $0x4c] sm:$0xf]
      %v515 = vld [vmem:[%s494 + $0x50] sm:$0xf]
      %v516 = vld [vmem:[%s494 + $0x54] sm:$0xf]
      %v517 = vld [vmem:[%s494 + $0x58] sm:$0xf]
      %v518 = vld [vmem:[%s494 + $0x5c] sm:$0xf]
      %v519 = vld [vmem:[%s494 + $0x60] sm:$0xf]
      %v520 = vld [vmem:[%s494 + $0x64] sm:$0xf]
      %v521 = vld [vmem:[%s494 + $0x68] sm:$0xf]
      %v522 = vld [vmem:[%s494 + $0x6c] sm:$0xf]
      %v523 = vld [vmem:[%s494 + $0x70] sm:$0x1]
      %v553 = vunpack.c.l.b16 %v495
      %v554 = vunpack.c.l.b16 %v496
      %v555 = vunpack.c.l.b16 %v497
      %v556 = vunpack.c.l.b16 %v498
      %v557 = vunpack.c.l.b16 %v499
      %v558 = vunpack.c.l.b16 %v500
      %v559 = vunpack.c.l.b16 %v501
      %v560 = vunpack.c.l.b16 %v502
      %v561 = vunpack.c.l.b16 %v503
      %v562 = vunpack.c.l.b16 %v504
      %v563 = vunpack.c.l.b16 %v505
      %v564 = vunpack.c.l.b16 %v506
      %v565 = vunpack.c.l.b16 %v507
      %v566 = vunpack.c.l.b16 %v508
      %v567 = vunpack.c.l.b16 %v509
      %v568 = vunpack.c.l.b16 %v510
      %v569 = vunpack.c.l.b16 %v511
      %v570 = vunpack.c.l.b16 %v512
      %v571 = vunpack.c.l.b16 %v513
      %v572 = vunpack.c.l.b16 %v514
      %v573 = vunpack.c.l.b16 %v515
      %v574 = vunpack.c.l.b16 %v516
      %v575 = vunpack.c.l.b16 %v517
      %v576 = vunpack.c.l.b16 %v518
      %v577 = vunpack.c.l.b16 %v519
      %v578 = vunpack.c.l.b16 %v520
      %v579 = vunpack.c.l.b16 %v521
      %v580 = vunpack.c.l.b16 %v522
      %v581 = vunpack.c.l.b16 %v523
      %v582 = vpack.c.b16 %v554, %v553
      %v583 = vpack.c.b16 %v556, %v555
      %v584 = vpack.c.b16 %v558, %v557
      %v585 = vpack.c.b16 %v560, %v559
      %v586 = vpack.c.b16 %v562, %v561
      %v587 = vpack.c.b16 %v564, %v563
      %v588 = vpack.c.b16 %v566, %v565
      %v589 = vpack.c.b16 %v568, %v567
      %v590 = vpack.c.b16 %v570, %v569
      %v591 = vpack.c.b16 %v572, %v571
      %v592 = vpack.c.b16 %v574, %v573
      %v593 = vpack.c.b16 %v576, %v575
      %v594 = vpack.c.b16 %v578, %v577
      %v595 = vpack.c.b16 %v580, %v579
      %v596 = vpack.c.b16 %v581, %v581
      %v598 = vsel %vm289, %v582, 0
      %v601 = vsel %vm289, %v583, 0
      %v604 = vsel %vm289, %v584, 0
      %v607 = vsel %vm289, %v585, 0
      %v610 = vsel %vm289, %v586, 0
      %v613 = vsel %vm289, %v587, 0
      %v616 = vsel %vm289, %v588, 0
      %v619 = vsel %vm289, %v589, 0
      %v622 = vsel %vm289, %v590, 0
      %v625 = vsel %vm289, %v591, 0
      %v628 = vsel %vm289, %v592, 0
      %v631 = vsel %vm289, %v593, 0
      %v634 = vsel %vm289, %v594, 0
      %v637 = vsel %vm289, %v595, 0
      %v640 = vsel %vm289, %v596, 0
      %642 = vmatprep.subr.bf16.mxu0 0
      %643 = vmatpush1.bf16.msra.mxu0 %v286
      %644 = vmatprep.subr.bf16.mxu0 0
      %645 = vmatpush1.bf16.msra.mxu0 %v340
      %646 = vmatprep.subr.bf16.mxu0 0
      %647 = vmatpush1.bf16.msra.mxu0 0
      %648 = vmatprep.subr.bf16.mxu0 0
      %649 = vmatpush1.bf16.msra.mxu0 0
      %650 = vmatprep.subr.bf16.mxu0 0
      %651 = vmatpush1.bf16.msra.mxu0 0
      %652 = vmatprep.subr.bf16.mxu0 0
      %653 = vmatpush1.bf16.msra.mxu0 0
      %654 = vmatprep.subr.bf16.mxu0 0
      %655 = vmatpush1.bf16.msra.mxu0 0
      %656 = vmatprep.subr.bf16.mxu0 0
      %657 = vmatpush1.bf16.msra.mxu0 0
      %658 = vmatprep.subr.bf16.mxu0 0
      %659 = vmatpush1.bf16.msra.mxu0 0
      %660 = vmatprep.subr.bf16.mxu0 0
      %661 = vmatpush1.bf16.msra.mxu0 0
      %662 = vmatprep.subr.bf16.mxu0 0
      %663 = vmatpush1.bf16.msra.mxu0 0
      %664 = vmatprep.subr.bf16.mxu0 0
      %665 = vmatpush1.bf16.msra.mxu0 0
      %666 = vmatprep.subr.bf16.mxu0 0
      %667 = vmatpush1.bf16.msra.mxu0 0
      %668 = vmatprep.subr.bf16.mxu0 0
      %669 = vmatpush1.bf16.msra.mxu0 0
      %670 = vmatprep.subr.bf16.mxu0 0
      %671 = vmatpush1.bf16.msra.mxu0 0
      %672 = vmatprep.subr.bf16.mxu0 0
      %673 = vmatpush1.bf16.msra.mxu0 0
      %674 = vmatprep.mubr.bf16.mxu0 0
      %675 = vmatmul.mubr.bf16.gmra.mrb[0].mxu0 %v598
      %v676 = vpop.f32.mrb[0].mxu0
      %v677 = vadd.f32 0.0, %v676
      %v678 = vpop.f32.mrb[0].mxu0
      %v679 = vpop.f32.mrb[0].mxu0
      %v680 = vadd.f32 0.0, %v679
      %v681 = vpop.f32.mrb[0].mxu0
      %682 = vmatprep.mubr.bf16.mxu0 0
      %683 = vmatmul.mubr.bf16.gmra.mrb[0].mxu0 %v601
      %v684 = vpop.f32.mrb[0].mxu0
      %v685 = vadd.f32 0.0, %v684
      %v686 = vpop.f32.mrb[0].mxu0
      %v687 = vpop.f32.mrb[0].mxu0
      %v688 = vadd.f32 0.0, %v687
      %v689 = vpop.f32.mrb[0].mxu0
      %690 = vmatprep.mubr.bf16.mxu0 0
      %691 = vmatmul.mubr.bf16.gmra.mrb[0].mxu0 %v604
      %v692 = vpop.f32.mrb[0].mxu0
      %v693 = vadd.f32 0.0, %v692
      %v694 = vpop.f32.mrb[0].mxu0
      %v695 = vpop.f32.mrb[0].mxu0
      %v696 = vadd.f32 0.0, %v695
      %v697 = vpop.f32.mrb[0].mxu0
      %698 = vmatprep.mubr.bf16.mxu0 0
      %699 = vmatmul.mubr.bf16.gmra.mrb[0].mxu0 %v607
      %v700 = vpop.f32.mrb[0].mxu0
      %v701 = vadd.f32 0.0, %v700
      %v702 = vpop.f32.mrb[0].mxu0
      %v703 = vpop.f32.mrb[0].mxu0
      %v704 = vadd.f32 0.0, %v703
      %v705 = vpop.f32.mrb[0].mxu0
      %706 = vmatprep.mubr.bf16.mxu0 0
      %707 = vmatmul.mubr.bf16.gmra.mrb[0].mxu0 %v610
      %v708 = vpop.f32.mrb[0].mxu0
      %v709 = vadd.f32 0.0, %v708
      %v710 = vpop.f32.mrb[0].mxu0
      %v711 = vpop.f32.mrb[0].mxu0
      %v712 = vadd.f32 0.0, %v711
      %v713 = vpop.f32.mrb[0].mxu0
      %714 = vmatprep.mubr.bf16.mxu0 0
      %715 = vmatmul.mubr.bf16.gmra.mrb[0].mxu0 %v613
      %v716 = vpop.f32.mrb[0].mxu0
      %v717 = vadd.f32 0.0, %v716
      %v718 = vpop.f32.mrb[0].mxu0
      %v719 = vpop.f32.mrb[0].mxu0
      %v720 = vadd.f32 0.0, %v719
      %v721 = vpop.f32.mrb[0].mxu0
      %722 = vmatprep.mubr.bf16.mxu0 0
      %723 = vmatmul.mubr.bf16.gmra.mrb[0].mxu0 %v616
      %v724 = vpop.f32.mrb[0].mxu0
      %v725 = vadd.f32 0.0, %v724
      %v726 = vpop.f32.mrb[0].mxu0
      %v727 = vpop.f32.mrb[0].mxu0
      %v728 = vadd.f32 0.0, %v727
      %v729 = vpop.f32.mrb[0].mxu0
      %730 = vmatprep.mubr.bf16.mxu0 0
      %731 = vmatmul.mubr.bf16.gmra.mrb[0].mxu0 %v619
      %v732 = vpop.f32.mrb[0].mxu0
      %v733 = vadd.f32 0.0, %v732
      %v734 = vpop.f32.mrb[0].mxu0
      %v735 = vpop.f32.mrb[0].mxu0
      %v736 = vadd.f32 0.0, %v735
      %v737 = vpop.f32.mrb[0].mxu0
      %738 = vmatprep.mubr.bf16.mxu0 0
      %739 = vmatmul.mubr.bf16.gmra.mrb[0].mxu0 %v622
      %v740 = vpop.f32.mrb[0].mxu0
      %v741 = vadd.f32 0.0, %v740
      %v742 = vpop.f32.mrb[0].mxu0
      %v743 = vpop.f32.mrb[0].mxu0
      %v744 = vadd.f32 0.0, %v743
      %v745 = vpop.f32.mrb[0].mxu0
      %746 = vmatprep.mubr.bf16.mxu0 0
      %747 = vmatmul.mubr.bf16.gmra.mrb[0].mxu0 %v625
      %v748 = vpop.f32.mrb[0].mxu0
      %v749 = vadd.f32 0.0, %v748
      %v750 = vpop.f32.mrb[0].mxu0
      %v751 = vpop.f32.mrb[0].mxu0
      %v752 = vadd.f32 0.0, %v751
      %v753 = vpop.f32.mrb[0].mxu0
      %754 = vmatprep.mubr.bf16.mxu0 0
      %755 = vmatmul.mubr.bf16.gmra.mrb[0].mxu0 %v628
      %v756 = vpop.f32.mrb[0].mxu0
      %v757 = vadd.f32 0.0, %v756
      %v758 = vpop.f32.mrb[0].mxu0
      %v759 = vpop.f32.mrb[0].mxu0
      %v760 = vadd.f32 0.0, %v759
      %v761 = vpop.f32.mrb[0].mxu0
      %762 = vmatprep.mubr.bf16.mxu0 0
      %763 = vmatmul.mubr.bf16.gmra.mrb[0].mxu0 %v631
      %v764 = vpop.f32.mrb[0].mxu0
      %v765 = vadd.f32 0.0, %v764
      %v766 = vpop.f32.mrb[0].mxu0
      %v767 = vpop.f32.mrb[0].mxu0
      %v768 = vadd.f32 0.0, %v767
      %v769 = vpop.f32.mrb[0].mxu0
      %770 = vmatprep.mubr.bf16.mxu0 0
      %771 = vmatmul.mubr.bf16.gmra.mrb[0].mxu0 %v634
      %v772 = vpop.f32.mrb[0].mxu0
      %v773 = vadd.f32 0.0, %v772
      %v774 = vpop.f32.mrb[0].mxu0
      %v775 = vpop.f32.mrb[0].mxu0
      %v776 = vadd.f32 0.0, %v775
      %v777 = vpop.f32.mrb[0].mxu0
      %778 = vmatprep.mubr.bf16.mxu0 0
      %779 = vmatmul.mubr.bf16.gmra.mrb[0].mxu0 %v637
      %v780 = vpop.f32.mrb[0].mxu0
      %v781 = vadd.f32 0.0, %v780
      %v782 = vpop.f32.mrb[0].mxu0
      %v783 = vpop.f32.mrb[0].mxu0
      %v784 = vadd.f32 0.0, %v783
      %v785 = vpop.f32.mrb[0].mxu0
      %786 = vmatprep.mubr.bf16.mxu0 0
      %787 = vmatmul.mubr.bf16.gmra.mrb[0].mxu0 %v640
      %v788 = vpop.f32.mrb[0].mxu0
      %v789 = vadd.f32 0.0, %v788
      %v790 = vpop.f32.mrb[0].mxu0
      %v791 = vpop.f32.mrb[0].mxu0
      %v792 = vpop.f32.mrb[0].mxu0
      %793 = vdwg.mxu0
      %v794 = vmax.f32 %v377, %v677
      %v795 = vmax.f32 %v380, %v680
      %v796 = vmax.f32 %v385, %v685
      %v797 = vmax.f32 %v388, %v688
      %v798 = vmax.f32 %v393, %v693
      %v799 = vmax.f32 %v396, %v696
      %v800 = vmax.f32 %v401, %v701
      %v801 = vmax.f32 %v404, %v704
      %v802 = vmax.f32 %v409, %v709
      %v803 = vmax.f32 %v412, %v712
      %v804 = vmax.f32 %v417, %v717
      %v805 = vmax.f32 %v420, %v720
      %v806 = vmax.f32 %v425, %v725
      %v807 = vmax.f32 %v428, %v728
      %v808 = vmax.f32 %v433, %v733
      %v809 = vmax.f32 %v436, %v736
      %v810 = vmax.f32 %v441, %v741
      %v811 = vmax.f32 %v444, %v744
      %v812 = vmax.f32 %v449, %v749
      %v813 = vmax.f32 %v452, %v752
      %v814 = vmax.f32 %v457, %v757
      %v815 = vmax.f32 %v460, %v760
      %v816 = vmax.f32 %v465, %v765
      %v817 = vmax.f32 %v468, %v768
      %v818 = vmax.f32 %v473, %v773
      %v819 = vmax.f32 %v476, %v776
      %v820 = vmax.f32 %v481, %v781
      %v821 = vmax.f32 %v484, %v784
      %v822 = vmax.f32 %v489, %v789
      %s823 = scalar_lea.vmem %s165, 232
      %v824 = vld [vmem:[%s823] sm:$0xf]
      %v825 = vld [vmem:[%s823 + $0x4] sm:$0xf]
      %v826 = vld [vmem:[%s823 + $0x8] sm:$0xf]
      %v827 = vld [vmem:[%s823 + $0xc] sm:$0xf]
      %v828 = vld [vmem:[%s823 + $0x10] sm:$0xf]
      %v829 = vld [vmem:[%s823 + $0x14] sm:$0xf]
      %v830 = vld [vmem:[%s823 + $0x18] sm:$0xf]
      %v831 = vld [vmem:[%s823 + $0x1c] sm:$0xf]
      %v832 = vld [vmem:[%s823 + $0x20] sm:$0xf]
      %v833 = vld [vmem:[%s823 + $0x24] sm:$0xf]
      %v834 = vld [vmem:[%s823 + $0x28] sm:$0xf]
      %v835 = vld [vmem:[%s823 + $0x2c] sm:$0xf]
      %v836 = vld [vmem:[%s823 + $0x30] sm:$0xf]
      %v837 = vld [vmem:[%s823 + $0x34] sm:$0xf]
      %v838 = vld [vmem:[%s823 + $0x38] sm:$0xf]
      %v839 = vld [vmem:[%s823 + $0x3c] sm:$0xf]
      %v840 = vld [vmem:[%s823 + $0x40] sm:$0xf]
      %v841 = vld [vmem:[%s823 + $0x44] sm:$0xf]
      %v842 = vld [vmem:[%s823 + $0x48] sm:$0xf]
      %v843 = vld [vmem:[%s823 + $0x4c] sm:$0xf]
      %v844 = vld [vmem:[%s823 + $0x50] sm:$0xf]
      %v845 = vld [vmem:[%s823 + $0x54] sm:$0xf]
      %v846 = vld [vmem:[%s823 + $0x58] sm:$0xf]
      %v847 = vld [vmem:[%s823 + $0x5c] sm:$0xf]
      %v848 = vld [vmem:[%s823 + $0x60] sm:$0xf]
      %v849 = vld [vmem:[%s823 + $0x64] sm:$0xf]
      %v850 = vld [vmem:[%s823 + $0x68] sm:$0xf]
      %v851 = vld [vmem:[%s823 + $0x6c] sm:$0xf]
      %v852 = vld [vmem:[%s823 + $0x70] sm:$0x1]
      %v882 = vunpack.c.l.b16 %v824
      %v883 = vunpack.c.l.b16 %v825
      %v884 = vunpack.c.l.b16 %v826
      %v885 = vunpack.c.l.b16 %v827
      %v886 = vunpack.c.l.b16 %v828
      %v887 = vunpack.c.l.b16 %v829
      %v888 = vunpack.c.l.b16 %v830
      %v889 = vunpack.c.l.b16 %v831
      %v890 = vunpack.c.l.b16 %v832
      %v891 = vunpack.c.l.b16 %v833
      %v892 = vunpack.c.l.b16 %v834
      %v893 = vunpack.c.l.b16 %v835
      %v894 = vunpack.c.l.b16 %v836
      %v895 = vunpack.c.l.b16 %v837
      %v896 = vunpack.c.l.b16 %v838
      %v897 = vunpack.c.l.b16 %v839
      %v898 = vunpack.c.l.b16 %v840
      %v899 = vunpack.c.l.b16 %v841
      %v900 = vunpack.c.l.b16 %v842
      %v901 = vunpack.c.l.b16 %v843
      %v902 = vunpack.c.l.b16 %v844
      %v903 = vunpack.c.l.b16 %v845
      %v904 = vunpack.c.l.b16 %v846
      %v905 = vunpack.c.l.b16 %v847
      %v906 = vunpack.c.l.b16 %v848
      %v907 = vunpack.c.l.b16 %v849
      %v908 = vunpack.c.l.b16 %v850
      %v909 = vunpack.c.l.b16 %v851
      %v910 = vunpack.c.l.b16 %v852
      %v911 = vpack.c.b16 %v883, %v882
      %v912 = vpack.c.b16 %v885, %v884
      %v913 = vpack.c.b16 %v887, %v886
      %v914 = vpack.c.b16 %v889, %v888
      %v915 = vpack.c.b16 %v891, %v890
      %v916 = vpack.c.b16 %v893, %v892
      %v917 = vpack.c.b16 %v895, %v894
      %v918 = vpack.c.b16 %v897, %v896
      %v919 = vpack.c.b16 %v899, %v898
      %v920 = vpack.c.b16 %v901, %v900
      %v921 = vpack.c.b16 %v903, %v902
      %v922 = vpack.c.b16 %v905, %v904
      %v923 = vpack.c.b16 %v907, %v906
      %v924 = vpack.c.b16 %v909, %v908
      %v925 = vpack.c.b16 %v910, %v910
      %v927 = vsel %vm289, %v911, 0
      %v930 = vsel %vm289, %v912, 0
      %v933 = vsel %vm289, %v913, 0
      %v936 = vsel %vm289, %v914, 0
      %v939 = vsel %vm289, %v915, 0
      %v942 = vsel %vm289, %v916, 0
      %v945 = vsel %vm289, %v917, 0
      %v948 = vsel %vm289, %v918, 0
      %v951 = vsel %vm289, %v919, 0
      %v954 = vsel %vm289, %v920, 0
      %v957 = vsel %vm289, %v921, 0
      %v960 = vsel %vm289, %v922, 0
      %v963 = vsel %vm289, %v923, 0
      %v966 = vsel %vm289, %v924, 0
      %v969 = vsel %vm289, %v925, 0
      %971 = vmatprep.subr.bf16.mxu0 0
      %972 = vmatpush1.bf16.msra.mxu0 %v286
      %973 = vmatprep.subr.bf16.mxu0 0
      %974 = vmatpush1.bf16.msra.mxu0 %v340
      %975 = vmatprep.subr.bf16.mxu0 0
      %976 = vmatpush1.bf16.msra.mxu0 0
      %977 = vmatprep.subr.bf16.mxu0 0
      %978 = vmatpush1.bf16.msra.mxu0 0
      %979 = vmatprep.subr.bf16.mxu0 0
      %980 = vmatpush1.bf16.msra.mxu0 0
      %981 = vmatprep.subr.bf16.mxu0 0
      %982 = vmatpush1.bf16.msra.mxu0 0
      %983 = vmatprep.subr.bf16.mxu0 0
      %984 = vmatpush1.bf16.msra.mxu0 0
      %985 = vmatprep.subr.bf16.mxu0 0
      %986 = vmatpush1.bf16.msra.mxu0 0
      %987 = vmatprep.subr.bf16.mxu0 0
      %988 = vmatpush1.bf16.msra.mxu0 0
      %989 = vmatprep.subr.bf16.mxu0 0
      %990 = vmatpush1.bf16.msra.mxu0 0
      %991 = vmatprep.subr.bf16.mxu0 0
      %992 = vmatpush1.bf16.msra.mxu0 0
      %993 = vmatprep.subr.bf16.mxu0 0
      %994 = vmatpush1.bf16.msra.mxu0 0
      %995 = vmatprep.subr.bf16.mxu0 0
      %996 = vmatpush1.bf16.msra.mxu0 0
      %997 = vmatprep.subr.bf16.mxu0 0
      %998 = vmatpush1.bf16.msra.mxu0 0
      %999 = vmatprep.subr.bf16.mxu0 0
      %1000 = vmatpush1.bf16.msra.mxu0 0
      %1001 = vmatprep.subr.bf16.mxu0 0
      %1002 = vmatpush1.bf16.msra.mxu0 0
      %1003 = vmatprep.mubr.bf16.mxu0 0
      %1004 = vmatmul.mubr.bf16.gmra.mrb[0].mxu0 %v927
      %v1005 = vpop.f32.mrb[0].mxu0
      %v1006 = vadd.f32 0.0, %v1005
      %v1007 = vpop.f32.mrb[0].mxu0
      %v1008 = vpop.f32.mrb[0].mxu0
      %v1009 = vadd.f32 0.0, %v1008
      %v1010 = vpop.f32.mrb[0].mxu0
      %1011 = vmatprep.mubr.bf16.mxu0 0
      %1012 = vmatmul.mubr.bf16.gmra.mrb[0].mxu0 %v930
      %v1013 = vpop.f32.mrb[0].mxu0
      %v1014 = vadd.f32 0.0, %v1013
      %v1015 = vpop.f32.mrb[0].mxu0
      %v1016 = vpop.f32.mrb[0].mxu0
      %v1017 = vadd.f32 0.0, %v1016
      %v1018 = vpop.f32.mrb[0].mxu0
      %1019 = vmatprep.mubr.bf16.mxu0 0
      %1020 = vmatmul.mubr.bf16.gmra.mrb[0].mxu0 %v933
      %v1021 = vpop.f32.mrb[0].mxu0
      %v1022 = vadd.f32 0.0, %v1021
      %v1023 = vpop.f32.mrb[0].mxu0
      %v1024 = vpop.f32.mrb[0].mxu0
      %v1025 = vadd.f32 0.0, %v1024
      %v1026 = vpop.f32.mrb[0].mxu0
      %1027 = vmatprep.mubr.bf16.mxu0 0
      %1028 = vmatmul.mubr.bf16.gmra.mrb[0].mxu0 %v936
      %v1029 = vpop.f32.mrb[0].mxu0
      %v1030 = vadd.f32 0.0, %v1029
      %v1031 = vpop.f32.mrb[0].mxu0
      %v1032 = vpop.f32.mrb[0].mxu0
      %v1033 = vadd.f32 0.0, %v1032
      %v1034 = vpop.f32.mrb[0].mxu0
      %1035 = vmatprep.mubr.bf16.mxu0 0
      %1036 = vmatmul.mubr.bf16.gmra.mrb[0].mxu0 %v939
      %v1037 = vpop.f32.mrb[0].mxu0
      %v1038 = vadd.f32 0.0, %v1037
      %v1039 = vpop.f32.mrb[0].mxu0
      %v1040 = vpop.f32.mrb[0].mxu0
      %v1041 = vadd.f32 0.0, %v1040
      %v1042 = vpop.f32.mrb[0].mxu0
      %1043 = vmatprep.mubr.bf16.mxu0 0
      %1044 = vmatmul.mubr.bf16.gmra.mrb[0].mxu0 %v942
      %v1045 = vpop.f32.mrb[0].mxu0
      %v1046 = vadd.f32 0.0, %v1045
      %v1047 = vpop.f32.mrb[0].mxu0
      %v1048 = vpop.f32.mrb[0].mxu0
      %v1049 = vadd.f32 0.0, %v1048
      %v1050 = vpop.f32.mrb[0].mxu0
      %1051 = vmatprep.mubr.bf16.mxu0 0
      %1052 = vmatmul.mubr.bf16.gmra.mrb[0].mxu0 %v945
      %v1053 = vpop.f32.mrb[0].mxu0
      %v1054 = vadd.f32 0.0, %v1053
      %v1055 = vpop.f32.mrb[0].mxu0
      %v1056 = vpop.f32.mrb[0].mxu0
      %v1057 = vadd.f32 0.0, %v1056
      %v1058 = vpop.f32.mrb[0].mxu0
      %1059 = vmatprep.mubr.bf16.mxu0 0
      %1060 = vmatmul.mubr.bf16.gmra.mrb[0].mxu0 %v948
      %v1061 = vpop.f32.mrb[0].mxu0
      %v1062 = vadd.f32 0.0, %v1061
      %v1063 = vpop.f32.mrb[0].mxu0
      %v1064 = vpop.f32.mrb[0].mxu0
      %v1065 = vadd.f32 0.0, %v1064
      %v1066 = vpop.f32.mrb[0].mxu0
      %1067 = vmatprep.mubr.bf16.mxu0 0
      %1068 = vmatmul.mubr.bf16.gmra.mrb[0].mxu0 %v951
      %v1069 = vpop.f32.mrb[0].mxu0
      %v1070 = vadd.f32 0.0, %v1069
      %v1071 = vpop.f32.mrb[0].mxu0
      %v1072 = vpop.f32.mrb[0].mxu0
      %v1073 = vadd.f32 0.0, %v1072
      %v1074 = vpop.f32.mrb[0].mxu0
      %1075 = vmatprep.mubr.bf16.mxu0 0
      %1076 = vmatmul.mubr.bf16.gmra.mrb[0].mxu0 %v954
      %v1077 = vpop.f32.mrb[0].mxu0
      %v1078 = vadd.f32 0.0, %v1077
      %v1079 = vpop.f32.mrb[0].mxu0
      %v1080 = vpop.f32.mrb[0].mxu0
      %v1081 = vadd.f32 0.0, %v1080
      %v1082 = vpop.f32.mrb[0].mxu0
      %1083 = vmatprep.mubr.bf16.mxu0 0
      %1084 = vmatmul.mubr.bf16.gmra.mrb[0].mxu0 %v957
      %v1085 = vpop.f32.mrb[0].mxu0
      %v1086 = vadd.f32 0.0, %v1085
      %v1087 = vpop.f32.mrb[0].mxu0
      %v1088 = vpop.f32.mrb[0].mxu0
      %v1089 = vadd.f32 0.0, %v1088
      %v1090 = vpop.f32.mrb[0].mxu0
      %1091 = vmatprep.mubr.bf16.mxu0 0
      %1092 = vmatmul.mubr.bf16.gmra.mrb[0].mxu0 %v960
      %v1093 = vpop.f32.mrb[0].mxu0
      %v1094 = vadd.f32 0.0, %v1093
      %v1095 = vpop.f32.mrb[0].mxu0
      %v1096 = vpop.f32.mrb[0].mxu0
      %v1097 = vadd.f32 0.0, %v1096
      %v1098 = vpop.f32.mrb[0].mxu0
      %1099 = vmatprep.mubr.bf16.mxu0 0
      %1100 = vmatmul.mubr.bf16.gmra.mrb[0].mxu0 %v963
      %v1101 = vpop.f32.mrb[0].mxu0
      %v1102 = vadd.f32 0.0, %v1101
      %v1103 = vpop.f32.mrb[0].mxu0
      %v1104 = vpop.f32.mrb[0].mxu0
      %v1105 = vadd.f32 0.0, %v1104
      %v1106 = vpop.f32.mrb[0].mxu0
      %1107 = vmatprep.mubr.bf16.mxu0 0
      %1108 = vmatmul.mubr.bf16.gmra.mrb[0].mxu0 %v966
      %v1109 = vpop.f32.mrb[0].mxu0
      %v1110 = vadd.f32 0.0, %v1109
      %v1111 = vpop.f32.mrb[0].mxu0
      %v1112 = vpop.f32.mrb[0].mxu0
      %v1113 = vadd.f32 0.0, %v1112
      %v1114 = vpop.f32.mrb[0].mxu0
      %1115 = vmatprep.mubr.bf16.mxu0 0
      %1116 = vmatmul.mubr.bf16.gmra.mrb[0].mxu0 %v969
      %v1117 = vpop.f32.mrb[0].mxu0
      %v1118 = vadd.f32 0.0, %v1117
      %v1119 = vpop.f32.mrb[0].mxu0
      %v1120 = vpop.f32.mrb[0].mxu0
      %v1121 = vpop.f32.mrb[0].mxu0
      %1122 = vdwg.mxu0
      %v1123 = vmax.f32 %v794, %v1006
      %v1124 = vmax.f32 %v795, %v1009
      %v1125 = vmax.f32 %v796, %v1014
      %v1126 = vmax.f32 %v797, %v1017
      %v1127 = vmax.f32 %v798, %v1022
      %v1128 = vmax.f32 %v799, %v1025
      %v1129 = vmax.f32 %v800, %v1030
      %v1130 = vmax.f32 %v801, %v1033
      %v1131 = vmax.f32 %v802, %v1038
      %v1132 = vmax.f32 %v803, %v1041
      %v1133 = vmax.f32 %v804, %v1046
      %v1134 = vmax.f32 %v805, %v1049
      %v1135 = vmax.f32 %v806, %v1054
      %v1136 = vmax.f32 %v807, %v1057
      %v1137 = vmax.f32 %v808, %v1062
      %v1138 = vmax.f32 %v809, %v1065
      %v1139 = vmax.f32 %v810, %v1070
      %v1140 = vmax.f32 %v811, %v1073
      %v1141 = vmax.f32 %v812, %v1078
      %v1142 = vmax.f32 %v813, %v1081
      %v1143 = vmax.f32 %v814, %v1086
      %v1144 = vmax.f32 %v815, %v1089
      %v1145 = vmax.f32 %v816, %v1094
      %v1146 = vmax.f32 %v817, %v1097
      %v1147 = vmax.f32 %v818, %v1102
      %v1148 = vmax.f32 %v819, %v1105
      %v1149 = vmax.f32 %v820, %v1110
      %v1150 = vmax.f32 %v821, %v1113
      %v1151 = vmax.f32 %v822, %v1118
      %s1152 = scalar_lea.vmem %s165, 348
      %v1153 = vld [vmem:[%s1152] sm:$0xf]
      %v1154 = vld [vmem:[%s1152 + $0x4] sm:$0xf]
      %v1155 = vld [vmem:[%s1152 + $0x8] sm:$0xf]
      %v1156 = vld [vmem:[%s1152 + $0xc] sm:$0xf]
      %v1157 = vld [vmem:[%s1152 + $0x10] sm:$0xf]
      %v1158 = vld [vmem:[%s1152 + $0x14] sm:$0xf]
      %v1159 = vld [vmem:[%s1152 + $0x18] sm:$0xf]
      %v1160 = vld [vmem:[%s1152 + $0x1c] sm:$0xf]
      %v1161 = vld [vmem:[%s1152 + $0x20] sm:$0xf]
      %v1162 = vld [vmem:[%s1152 + $0x24] sm:$0xf]
      %v1163 = vld [vmem:[%s1152 + $0x28] sm:$0xf]
      %v1164 = vld [vmem:[%s1152 + $0x2c] sm:$0xf]
      %v1165 = vld [vmem:[%s1152 + $0x30] sm:$0xf]
      %v1166 = vld [vmem:[%s1152 + $0x34] sm:$0xf]
      %v1167 = vld [vmem:[%s1152 + $0x38] sm:$0xf]
      %v1168 = vld [vmem:[%s1152 + $0x3c] sm:$0xf]
      %v1169 = vld [vmem:[%s1152 + $0x40] sm:$0xf]
      %v1170 = vld [vmem:[%s1152 + $0x44] sm:$0xf]
      %v1171 = vld [vmem:[%s1152 + $0x48] sm:$0xf]
      %v1172 = vld [vmem:[%s1152 + $0x4c] sm:$0xf]
      %v1173 = vld [vmem:[%s1152 + $0x50] sm:$0xf]
      %v1174 = vld [vmem:[%s1152 + $0x54] sm:$0xf]
      %v1175 = vld [vmem:[%s1152 + $0x58] sm:$0xf]
      %v1176 = vld [vmem:[%s1152 + $0x5c] sm:$0xf]
      %v1177 = vld [vmem:[%s1152 + $0x60] sm:$0xf]
      %v1178 = vld [vmem:[%s1152 + $0x64] sm:$0xf]
      %v1179 = vld [vmem:[%s1152 + $0x68] sm:$0xf]
      %v1180 = vld [vmem:[%s1152 + $0x6c] sm:$0xf]
      %v1181 = vld [vmem:[%s1152 + $0x70] sm:$0x1]
      %v1211 = vunpack.c.l.b16 %v1153
      %v1212 = vunpack.c.l.b16 %v1154
      %v1213 = vunpack.c.l.b16 %v1155
      %v1214 = vunpack.c.l.b16 %v1156
      %v1215 = vunpack.c.l.b16 %v1157
      %v1216 = vunpack.c.l.b16 %v1158
      %v1217 = vunpack.c.l.b16 %v1159
      %v1218 = vunpack.c.l.b16 %v1160
      %v1219 = vunpack.c.l.b16 %v1161
      %v1220 = vunpack.c.l.b16 %v1162
      %v1221 = vunpack.c.l.b16 %v1163
      %v1222 = vunpack.c.l.b16 %v1164
      %v1223 = vunpack.c.l.b16 %v1165
      %v1224 = vunpack.c.l.b16 %v1166
      %v1225 = vunpack.c.l.b16 %v1167
      %v1226 = vunpack.c.l.b16 %v1168
      %v1227 = vunpack.c.l.b16 %v1169
      %v1228 = vunpack.c.l.b16 %v1170
      %v1229 = vunpack.c.l.b16 %v1171
      %v1230 = vunpack.c.l.b16 %v1172
      %v1231 = vunpack.c.l.b16 %v1173
      %v1232 = vunpack.c.l.b16 %v1174
      %v1233 = vunpack.c.l.b16 %v1175
      %v1234 = vunpack.c.l.b16 %v1176
      %v1235 = vunpack.c.l.b16 %v1177
      %v1236 = vunpack.c.l.b16 %v1178
      %v1237 = vunpack.c.l.b16 %v1179
      %v1238 = vunpack.c.l.b16 %v1180
      %v1239 = vunpack.c.l.b16 %v1181
      %v1240 = vpack.c.b16 %v1212, %v1211
      %v1241 = vpack.c.b16 %v1214, %v1213
      %v1242 = vpack.c.b16 %v1216, %v1215
      %v1243 = vpack.c.b16 %v1218, %v1217
      %v1244 = vpack.c.b16 %v1220, %v1219
      %v1245 = vpack.c.b16 %v1222, %v1221
      %v1246 = vpack.c.b16 %v1224, %v1223
      %v1247 = vpack.c.b16 %v1226, %v1225
      %v1248 = vpack.c.b16 %v1228, %v1227
      %v1249 = vpack.c.b16 %v1230, %v1229
      %v1250 = vpack.c.b16 %v1232, %v1231
      %v1251 = vpack.c.b16 %v1234, %v1233
      %v1252 = vpack.c.b16 %v1236, %v1235
      %v1253 = vpack.c.b16 %v1238, %v1237
      %v1254 = vpack.c.b16 %v1239, %v1239
      %v1256 = vsel %vm289, %v1240, 0
      %v1259 = vsel %vm289, %v1241, 0
      %v1262 = vsel %vm289, %v1242, 0
      %v1265 = vsel %vm289, %v1243, 0
      %v1268 = vsel %vm289, %v1244, 0
      %v1271 = vsel %vm289, %v1245, 0
      %v1274 = vsel %vm289, %v1246, 0
      %v1277 = vsel %vm289, %v1247, 0
      %v1280 = vsel %vm289, %v1248, 0
      %v1283 = vsel %vm289, %v1249, 0
      %v1286 = vsel %vm289, %v1250, 0
      %v1289 = vsel %vm289, %v1251, 0
      %v1292 = vsel %vm289, %v1252, 0
      %v1295 = vsel %vm289, %v1253, 0
      %v1298 = vsel %vm289, %v1254, 0
      %1300 = vmatprep.subr.bf16.mxu0 0
      %1301 = vmatpush1.bf16.msra.mxu0 %v286
      %1302 = vmatprep.subr.bf16.mxu0 0
      %1303 = vmatpush1.bf16.msra.mxu0 %v340
      %1304 = vmatprep.subr.bf16.mxu0 0
      %1305 = vmatpush1.bf16.msra.mxu0 0
      %1306 = vmatprep.subr.bf16.mxu0 0
      %1307 = vmatpush1.bf16.msra.mxu0 0
      %1308 = vmatprep.subr.bf16.mxu0 0
      %1309 = vmatpush1.bf16.msra.mxu0 0
      %1310 = vmatprep.subr.bf16.mxu0 0
      %1311 = vmatpush1.bf16.msra.mxu0 0
      %1312 = vmatprep.subr.bf16.mxu0 0
      %1313 = vmatpush1.bf16.msra.mxu0 0
      %1314 = vmatprep.subr.bf16.mxu0 0
      %1315 = vmatpush1.bf16.msra.mxu0 0
      %1316 = vmatprep.subr.bf16.mxu0 0
      %1317 = vmatpush1.bf16.msra.mxu0 0
      %1318 = vmatprep.subr.bf16.mxu0 0
      %1319 = vmatpush1.bf16.msra.mxu0 0
      %1320 = vmatprep.subr.bf16.mxu0 0
      %1321 = vmatpush1.bf16.msra.mxu0 0
      %1322 = vmatprep.subr.bf16.mxu0 0
      %1323 = vmatpush1.bf16.msra.mxu0 0
      %1324 = vmatprep.subr.bf16.mxu0 0
      %1325 = vmatpush1.bf16.msra.mxu0 0
      %1326 = vmatprep.subr.bf16.mxu0 0
      %1327 = vmatpush1.bf16.msra.mxu0 0
      %1328 = vmatprep.subr.bf16.mxu0 0
      %1329 = vmatpush1.bf16.msra.mxu0 0
      %1330 = vmatprep.subr.bf16.mxu0 0
      %1331 = vmatpush1.bf16.msra.mxu0 0
      %1332 = vmatprep.mubr.bf16.mxu0 0
      %1333 = vmatmul.mubr.bf16.gmra.mrb[0].mxu0 %v1256
      %v1334 = vpop.f32.mrb[0].mxu0
      %v1335 = vadd.f32 0.0, %v1334
      %v1336 = vpop.f32.mrb[0].mxu0
      %v1337 = vpop.f32.mrb[0].mxu0
      %v1338 = vadd.f32 0.0, %v1337
      %v1339 = vpop.f32.mrb[0].mxu0
      %1340 = vmatprep.mubr.bf16.mxu0 0
      %1341 = vmatmul.mubr.bf16.gmra.mrb[0].mxu0 %v1259
      %v1342 = vpop.f32.mrb[0].mxu0
      %v1343 = vadd.f32 0.0, %v1342
      %v1344 = vpop.f32.mrb[0].mxu0
      %v1345 = vpop.f32.mrb[0].mxu0
      %v1346 = vadd.f32 0.0, %v1345
      %v1347 = vpop.f32.mrb[0].mxu0
      %1348 = vmatprep.mubr.bf16.mxu0 0
      %1349 = vmatmul.mubr.bf16.gmra.mrb[0].mxu0 %v1262
      %v1350 = vpop.f32.mrb[0].mxu0
      %v1351 = vadd.f32 0.0, %v1350
      %v1352 = vpop.f32.mrb[0].mxu0
      %v1353 = vpop.f32.mrb[0].mxu0
      %v1354 = vadd.f32 0.0, %v1353
      %v1355 = vpop.f32.mrb[0].mxu0
      %1356 = vmatprep.mubr.bf16.mxu0 0
      %1357 = vmatmul.mubr.bf16.gmra.mrb[0].mxu0 %v1265
      %v1358 = vpop.f32.mrb[0].mxu0
      %v1359 = vadd.f32 0.0, %v1358
      %v1360 = vpop.f32.mrb[0].mxu0
      %v1361 = vpop.f32.mrb[0].mxu0
      %v1362 = vadd.f32 0.0, %v1361
      %v1363 = vpop.f32.mrb[0].mxu0
      %1364 = vmatprep.mubr.bf16.mxu0 0
      %1365 = vmatmul.mubr.bf16.gmra.mrb[0].mxu0 %v1268
      %v1366 = vpop.f32.mrb[0].mxu0
      %v1367 = vadd.f32 0.0, %v1366
      %v1368 = vpop.f32.mrb[0].mxu0
      %v1369 = vpop.f32.mrb[0].mxu0
      %v1370 = vadd.f32 0.0, %v1369
      %v1371 = vpop.f32.mrb[0].mxu0
      %1372 = vmatprep.mubr.bf16.mxu0 0
      %1373 = vmatmul.mubr.bf16.gmra.mrb[0].mxu0 %v1271
      %v1374 = vpop.f32.mrb[0].mxu0
      %v1375 = vadd.f32 0.0, %v1374
      %v1376 = vpop.f32.mrb[0].mxu0
      %v1377 = vpop.f32.mrb[0].mxu0
      %v1378 = vadd.f32 0.0, %v1377
      %v1379 = vpop.f32.mrb[0].mxu0
      %1380 = vmatprep.mubr.bf16.mxu0 0
      %1381 = vmatmul.mubr.bf16.gmra.mrb[0].mxu0 %v1274
      %v1382 = vpop.f32.mrb[0].mxu0
      %v1383 = vadd.f32 0.0, %v1382
      %v1384 = vpop.f32.mrb[0].mxu0
      %v1385 = vpop.f32.mrb[0].mxu0
      %v1386 = vadd.f32 0.0, %v1385
      %v1387 = vpop.f32.mrb[0].mxu0
      %1388 = vmatprep.mubr.bf16.mxu0 0
      %1389 = vmatmul.mubr.bf16.gmra.mrb[0].mxu0 %v1277
      %v1390 = vpop.f32.mrb[0].mxu0
      %v1391 = vadd.f32 0.0, %v1390
      %v1392 = vpop.f32.mrb[0].mxu0
      %v1393 = vpop.f32.mrb[0].mxu0
      %v1394 = vadd.f32 0.0, %v1393
      %v1395 = vpop.f32.mrb[0].mxu0
      %1396 = vmatprep.mubr.bf16.mxu0 0
      %1397 = vmatmul.mubr.bf16.gmra.mrb[0].mxu0 %v1280
      %v1398 = vpop.f32.mrb[0].mxu0
      %v1399 = vadd.f32 0.0, %v1398
      %v1400 = vpop.f32.mrb[0].mxu0
      %v1401 = vpop.f32.mrb[0].mxu0
      %v1402 = vadd.f32 0.0, %v1401
      %v1403 = vpop.f32.mrb[0].mxu0
      %1404 = vmatprep.mubr.bf16.mxu0 0
      %1405 = vmatmul.mubr.bf16.gmra.mrb[0].mxu0 %v1283
      %v1406 = vpop.f32.mrb[0].mxu0
      %v1407 = vadd.f32 0.0, %v1406
      %v1408 = vpop.f32.mrb[0].mxu0
      %v1409 = vpop.f32.mrb[0].mxu0
      %v1410 = vadd.f32 0.0, %v1409
      %v1411 = vpop.f32.mrb[0].mxu0
      %1412 = vmatprep.mubr.bf16.mxu0 0
      %1413 = vmatmul.mubr.bf16.gmra.mrb[0].mxu0 %v1286
      %v1414 = vpop.f32.mrb[0].mxu0
      %v1415 = vadd.f32 0.0, %v1414
      %v1416 = vpop.f32.mrb[0].mxu0
      %v1417 = vpop.f32.mrb[0].mxu0
      %v1418 = vadd.f32 0.0, %v1417
      %v1419 = vpop.f32.mrb[0].mxu0
      %1420 = vmatprep.mubr.bf16.mxu0 0
      %1421 = vmatmul.mubr.bf16.gmra.mrb[0].mxu0 %v1289
      %v1422 = vpop.f32.mrb[0].mxu0
      %v1423 = vadd.f32 0.0, %v1422
      %v1424 = vpop.f32.mrb[0].mxu0
      %v1425 = vpop.f32.mrb[0].mxu0
      %v1426 = vadd.f32 0.0, %v1425
      %v1427 = vpop.f32.mrb[0].mxu0
      %1428 = vmatprep.mubr.bf16.mxu0 0
      %1429 = vmatmul.mubr.bf16.gmra.mrb[0].mxu0 %v1292
      %v1430 = vpop.f32.mrb[0].mxu0
      %v1431 = vadd.f32 0.0, %v1430
      %v1432 = vpop.f32.mrb[0].mxu0
      %v1433 = vpop.f32.mrb[0].mxu0
      %v1434 = vadd.f32 0.0, %v1433
      %v1435 = vpop.f32.mrb[0].mxu0
      %1436 = vmatprep.mubr.bf16.mxu0 0
      %1437 = vmatmul.mubr.bf16.gmra.mrb[0].mxu0 %v1295
      %v1438 = vpop.f32.mrb[0].mxu0
      %v1439 = vadd.f32 0.0, %v1438
      %v1440 = vpop.f32.mrb[0].mxu0
      %v1441 = vpop.f32.mrb[0].mxu0
      %v1442 = vadd.f32 0.0, %v1441
      %v1443 = vpop.f32.mrb[0].mxu0
      %1444 = vmatprep.mubr.bf16.mxu0 0
      %1445 = vmatmul.mubr.bf16.gmra.mrb[0].mxu0 %v1298
      %v1446 = vpop.f32.mrb[0].mxu0
      %v1447 = vadd.f32 0.0, %v1446
      %v1448 = vpop.f32.mrb[0].mxu0
      %v1449 = vpop.f32.mrb[0].mxu0
      %v1450 = vpop.f32.mrb[0].mxu0
      %1451 = vdwg.mxu0
      %v1452 = vmax.f32 %v1123, %v1335
      %v1453 = vmax.f32 %v1124, %v1338
      %v1454 = vmax.f32 %v1125, %v1343
      %v1455 = vmax.f32 %v1126, %v1346
      %v1456 = vmax.f32 %v1127, %v1351
      %v1457 = vmax.f32 %v1128, %v1354
      %v1458 = vmax.f32 %v1129, %v1359
      %v1459 = vmax.f32 %v1130, %v1362
      %v1460 = vmax.f32 %v1131, %v1367
      %v1461 = vmax.f32 %v1132, %v1370
      %v1462 = vmax.f32 %v1133, %v1375
      %v1463 = vmax.f32 %v1134, %v1378
      %v1464 = vmax.f32 %v1135, %v1383
      %v1465 = vmax.f32 %v1136, %v1386
      %v1466 = vmax.f32 %v1137, %v1391
      %v1467 = vmax.f32 %v1138, %v1394
      %v1468 = vmax.f32 %v1139, %v1399
      %v1469 = vmax.f32 %v1140, %v1402
      %v1470 = vmax.f32 %v1141, %v1407
      %v1471 = vmax.f32 %v1142, %v1410
      %v1472 = vmax.f32 %v1143, %v1415
      %v1473 = vmax.f32 %v1144, %v1418
      %v1474 = vmax.f32 %v1145, %v1423
      %v1475 = vmax.f32 %v1146, %v1426
      %v1476 = vmax.f32 %v1147, %v1431
      %v1477 = vmax.f32 %v1148, %v1434
      %v1478 = vmax.f32 %v1149, %v1439
      %v1479 = vmax.f32 %v1150, %v1442
      %v1480 = vmax.f32 %v1151, %v1447
      %v1481 = vld [vmem:[%s2] sm:$0x1]
      %v1483 = vlaneseq
      %v1484 = vshrl.u32 %v1483, 7
      %v1485 = vsub.s32 0, %v1484
      %v1486 = vrot.slane %v1481, %v1485
      %v1488 = vadd.f32 %v1452, %v1486
      %v1489 = vadd.f32 %v1453, %v1486
      %v1490 = vadd.f32 %v1454, %v1486
      %v1491 = vadd.f32 %v1455, %v1486
      %v1492 = vadd.f32 %v1456, %v1486
      %v1493 = vadd.f32 %v1457, %v1486
      %v1494 = vadd.f32 %v1458, %v1486
      %v1495 = vadd.f32 %v1459, %v1486
      %v1496 = vadd.f32 %v1460, %v1486
      %v1497 = vadd.f32 %v1461, %v1486
      %v1498 = vadd.f32 %v1462, %v1486
      %v1499 = vadd.f32 %v1463, %v1486
      %v1500 = vadd.f32 %v1464, %v1486
      %v1501 = vadd.f32 %v1465, %v1486
      %v1502 = vadd.f32 %v1466, %v1486
      %v1503 = vadd.f32 %v1467, %v1486
      %v1504 = vadd.f32 %v1468, %v1486
      %v1505 = vadd.f32 %v1469, %v1486
      %v1506 = vadd.f32 %v1470, %v1486
      %v1507 = vadd.f32 %v1471, %v1486
      %v1508 = vadd.f32 %v1472, %v1486
      %v1509 = vadd.f32 %v1473, %v1486
      %v1510 = vadd.f32 %v1474, %v1486
      %v1511 = vadd.f32 %v1475, %v1486
      %v1512 = vadd.f32 %v1476, %v1486
      %v1513 = vadd.f32 %v1477, %v1486
      %v1514 = vadd.f32 %v1478, %v1486
      %v1515 = vadd.f32 %v1479, %v1486
      %v1516 = vadd.f32 %v1480, %v1486
      %v1517 = vmax.f32 %v1488, 0.0
      %v1518 = vmax.f32 %v1489, 0.0
      %v1519 = vmax.f32 %v1490, 0.0
      %v1520 = vmax.f32 %v1491, 0.0
      %v1521 = vmax.f32 %v1492, 0.0
      %v1522 = vmax.f32 %v1493, 0.0
      %v1523 = vmax.f32 %v1494, 0.0
      %v1524 = vmax.f32 %v1495, 0.0
      %v1525 = vmax.f32 %v1496, 0.0
      %v1526 = vmax.f32 %v1497, 0.0
      %v1527 = vmax.f32 %v1498, 0.0
      %v1528 = vmax.f32 %v1499, 0.0
      %v1529 = vmax.f32 %v1500, 0.0
      %v1530 = vmax.f32 %v1501, 0.0
      %v1531 = vmax.f32 %v1502, 0.0
      %v1532 = vmax.f32 %v1503, 0.0
      %v1533 = vmax.f32 %v1504, 0.0
      %v1534 = vmax.f32 %v1505, 0.0
      %v1535 = vmax.f32 %v1506, 0.0
      %v1536 = vmax.f32 %v1507, 0.0
      %v1537 = vmax.f32 %v1508, 0.0
      %v1538 = vmax.f32 %v1509, 0.0
      %v1539 = vmax.f32 %v1510, 0.0
      %v1540 = vmax.f32 %v1511, 0.0
      %v1541 = vmax.f32 %v1512, 0.0
      %v1542 = vmax.f32 %v1513, 0.0
      %v1543 = vmax.f32 %v1514, 0.0
      %v1544 = vmax.f32 %v1515, 0.0
      %v1545 = vmax.f32 %v1516, 0.0
      %vm1546 = vcmask 523264
      %1547 = vst.msk [vmem:[%s170] sm:$0xff] %vm1546, %v1517
      %1548 = vst.msk [vmem:[%s170 + $0x8] sm:$0xff] %vm1546, %v1518
      %1549 = vst.msk [vmem:[%s170 + $0x10] sm:$0xff] %vm1546, %v1519
      %1550 = vst.msk [vmem:[%s170 + $0x18] sm:$0xff] %vm1546, %v1520
      %1551 = vst.msk [vmem:[%s170 + $0x20] sm:$0xff] %vm1546, %v1521
      %1552 = vst.msk [vmem:[%s170 + $0x28] sm:$0xff] %vm1546, %v1522
      %1553 = vst.msk [vmem:[%s170 + $0x30] sm:$0xff] %vm1546, %v1523
      %1554 = vst.msk [vmem:[%s170 + $0x38] sm:$0xff] %vm1546, %v1524
      %1555 = vst.msk [vmem:[%s170 + $0x40] sm:$0xff] %vm1546, %v1525
      %1556 = vst.msk [vmem:[%s170 + $0x48] sm:$0xff] %vm1546, %v1526
      %1557 = vst.msk [vmem:[%s170 + $0x50] sm:$0xff] %vm1546, %v1527
      %1558 = vst.msk [vmem:[%s170 + $0x58] sm:$0xff] %vm1546, %v1528
      %1559 = vst.msk [vmem:[%s170 + $0x60] sm:$0xff] %vm1546, %v1529
      %1560 = vst.msk [vmem:[%s170 + $0x68] sm:$0xff] %vm1546, %v1530
      %1561 = vst.msk [vmem:[%s170 + $0x70] sm:$0xff] %vm1546, %v1531
      %1562 = vst.msk [vmem:[%s170 + $0x78] sm:$0xff] %vm1546, %v1532
      %1563 = vst.msk [vmem:[%s170 + $0x80] sm:$0xff] %vm1546, %v1533
      %1564 = vst.msk [vmem:[%s170 + $0x88] sm:$0xff] %vm1546, %v1534
      %1565 = vst.msk [vmem:[%s170 + $0x90] sm:$0xff] %vm1546, %v1535
      %1566 = vst.msk [vmem:[%s170 + $0x98] sm:$0xff] %vm1546, %v1536
      %1567 = vst.msk [vmem:[%s170 + $0xa0] sm:$0xff] %vm1546, %v1537
      %1568 = vst.msk [vmem:[%s170 + $0xa8] sm:$0xff] %vm1546, %v1538
      %1569 = vst.msk [vmem:[%s170 + $0xb0] sm:$0xff] %vm1546, %v1539
      %1570 = vst.msk [vmem:[%s170 + $0xb8] sm:$0xff] %vm1546, %v1540
      %1571 = vst.msk [vmem:[%s170 + $0xc0] sm:$0xff] %vm1546, %v1541
      %1572 = vst.msk [vmem:[%s170 + $0xc8] sm:$0xff] %vm1546, %v1542
      %1573 = vst.msk [vmem:[%s170 + $0xd0] sm:$0xff] %vm1546, %v1543
      %1574 = vst.msk [vmem:[%s170 + $0xd8] sm:$0xff] %vm1546, %v1544
      %vm1575 = vcmask 516096
      %1576 = vst.msk [vmem:[%s170 + $0xe0] sm:$0x1] %vm1575, %v1545
      %p1577 = scmp.lt.s32.totalorder %s14, 1
      %s1578 = scalar_select %p1577, %s14, 1
      %s1579 = smul.addr %s1578, 29
      %s1580 = smul.addr %s1579, 8
      %s1581 = scalar_lea.vmem %s3, %s1580
      // Predicated region
      $region33: #{net_forward.3} parent=31 // pred_check
        %p1582 = pneg %p100
      $region34: #{net_forward.3} parent=31 // pred_check_branch
        %1584 = sbr.rel (%p1582) target = $region36
      $region35: #{net_forward.3} parent=31 // pred_region
        _
      $region36: #{net_forward.3} parent=31 // pred_fallthru
        _
    $region32: #{net_forward.3} parent=5 // pred_fallthru
      _
    %p1585 = scmp.le.s32.totalorder 2, %s9
    // Predicated region
    $region37: #{net_forward.3} parent=5 // pred_check
      %p1586 = pneg %p1585
    $region38: #{net_forward.3} parent=5 // pred_check_branch
      %1588 = sbr.rel (%p1586) target = $region40
    $region39: #{net_forward.3} parent=5 // pred_region
      %s1589 = ssub.s32 %s9, 2
      // Predicated region
      $region41: #{net_forward.3} parent=39 // pred_check
        %p1590 = pneg %p106
      $region42: #{net_forward.3} parent=39 // pred_check_branch
        %1592 = sbr.rel (%p1590) target = $region44
      $region43: #{net_forward.3} parent=39 // pred_region
        %p1593 = scmp.lt.s32.totalorder %s15, 1
        %s1594 = scalar_select %p1593, %s15, 1
        %s1595 = smul.addr %s1594, 29
        %s1596 = smul.addr %s1595, 8
        %s1597 = scalar_lea.vmem %s3, %s1596
      $region44: #{net_forward.3} parent=39 // pred_fallthru
        _
    $region40: #{net_forward.3} parent=5 // pred_fallthru
      _
  $region6: #{net_forward.3} parent=0 // loop_footer
    %s13 = sadd.s32 1, %s9
  $region7: #{net_forward.3} parent=0 // loop_footer_branch
    %8 = sbr.rel target = $region3
  $region8: #{net_forward.3} parent=0 // loop_exit
    _

// kernel: net_forward.4
$region0: #{net_forward.4}
  #allocation0 [shape = 'u32[]', space=smem, size = 0x4, offset = 0x4, fixed_abs, tag = 'smem constant byte address 0x4 - core index']
  #allocation1 [shape = 'u32[144,128]{1,0:T(1,128)}', space=vmem, size = 0x12000, scoped, tag = 'internal scratch']
  %s0 = inlined_call_operand.vmem [shape: bf16[2,4,36,576], index: 0, kind: input, shape index: {}]
  %s1 = inlined_call_operand.vmem [shape: bf16[576,128], index: 1, kind: input, shape index: {}]
  %s2 = inlined_call_operand.vmem [shape: f32[1,128], index: 2, kind: input, shape index: {}]
  %s3 = inlined_call_operand.vmem [shape: f32[2,36,128], index: 3, kind: output, shape index: {}]
  %s4 = sld [smem:[#allocation0]]
  $region45: #{net_forward.4} parent=0
    _
  %s6 = ssub.s32 1, %s4
  %s7 = scalar_select 0, %s6, %s4
  loop: start=0, step=1, limit=4
  $region2: #{net_forward.4} parent=0 // loop_pre_header
    _
  $region3: #{net_forward.4} parent=0 // loop_header
    %s9 = sphi 0, %s13
    %p10 = scmp.ge.s32.totalorder %s9, 4
    %s19 = sphi 0, %s21
    %s22 = sphi 0, %s19
    %s23 = sphi 0, %s22
    %s39 = sphi 0, %s23
    %s43 = sphi 0, %s43
    %s45 = sphi 0, %s43
    %s46 = sphi 0, %s45
    %s60 = sphi 0, %s46
    %s64 = sphi 0, %s64
    %s66 = sphi 0, %s64
    %s67 = sphi 0, %s66
    %s81 = sphi 0, %s67
    %s87 = sphi 0, %s89
    %s90 = sphi 0, %s87
    %s91 = sphi 0, %s90
    %s107 = sphi 0, %s91
  $region4: #{net_forward.4} parent=0 // loop_header_branch
    %12 = sbr.rel (%p10) target = $region8
  $region5: #{net_forward.4} parent=0 // loop_body
    %s14 = ssub.s32 %s9, 1
    %s15 = ssub.s32 %s9, 2
    %s16 = sadd.s32 %s9, 1
    %s17 = ssub.s32 %s9, %s16
    %p18 = scmp.eq.s32.totalorder %s17, 0
    %s20 = sadd.s32 %s19, 1
    %s21 = scalar_select %p18, %s19, %s20
    %p24 = pneg %p18
    %p25 = scmp.eq.s32.totalorder %s9, 1
    %p26 = por %p24, %p25
    %p27 = scmp.ne.s32.totalorder %s19, %s22
    %p28 = scmp.eq.s32.totalorder %s9, 0
    %p29 = por %p27, %p28
    %p30 = scmp.ne.s32.totalorder %s19, %s22
    %p31 = scmp.eq.s32.totalorder %s14, 1
    %p32 = por %p30, %p31
    %p33 = scmp.ne.s32.totalorder %s22, %s23
    %p34 = scmp.eq.s32.totalorder %s14, 0
    %p35 = por %p33, %p34
    %p36 = scmp.ne.s32.totalorder %s22, %s23
    %p37 = scmp.eq.s32.totalorder %s15, 1
    %p38 = por %p36, %p37
    %p40 = scmp.ne.s32.totalorder %s23, %s39
    %p41 = scmp.eq.s32.totalorder %s15, 0
    %p42 = por %p40, %p41
    %s44 = sadd.s32 %s43, 1
    %p47 = scmp.eq.s32.totalorder %s9, 1
    %p48 = scmp.ne.s32.totalorder %s43, %s45
    %p49 = scmp.eq.s32.totalorder %s9, 0
    %p50 = por %p48, %p49
    %p51 = scmp.ne.s32.totalorder %s43, %s45
    %p52 = scmp.eq.s32.totalorder %s14, 1
    %p53 = por %p51, %p52
    %p54 = scmp.ne.s32.totalorder %s45, %s46
    %p55 = scmp.eq.s32.totalorder %s14, 0
    %p56 = por %p54, %p55
    %p57 = scmp.ne.s32.totalorder %s45, %s46
    %p58 = scmp.eq.s32.totalorder %s15, 1
    %p59 = por %p57, %p58
    %p61 = scmp.ne.s32.totalorder %s46, %s60
    %p62 = scmp.eq.s32.totalorder %s15, 0
    %p63 = por %p61, %p62
    %s65 = sadd.s32 %s64, 1
    %p68 = scmp.eq.s32.totalorder %s9, 1
    %p69 = scmp.ne.s32.totalorder %s64, %s66
    %p70 = scmp.eq.s32.totalorder %s9, 0
    %p71 = por %p69, %p70
    %p72 = scmp.ne.s32.totalorder %s64, %s66
    %p73 = scmp.eq.s32.totalorder %s14, 1
    %p74 = por %p72, %p73
    %p75 = scmp.ne.s32.totalorder %s66, %s67
    %p76 = scmp.eq.s32.totalorder %s14, 0
    %p77 = por %p75, %p76
    %p78 = scmp.ne.s32.totalorder %s66, %s67
    %p79 = scmp.eq.s32.totalorder %s15, 1
    %p80 = por %p78, %p79
    %p82 = scmp.ne.s32.totalorder %s67, %s81
    %p83 = scmp.eq.s32.totalorder %s15, 0
    %p84 = por %p82, %p83
    %s85 = ssub.s32 %s9, %s16
    %p86 = scmp.eq.s32.totalorder %s85, 0
    %s88 = sadd.s32 %s87, 1
    %s89 = scalar_select %p86, %s87, %s88
    %p92 = pneg %p86
    %p93 = scmp.eq.s32.totalorder %s9, 1
    %p94 = por %p92, %p93
    %p95 = scmp.ne.s32.totalorder %s87, %s90
    %p96 = scmp.eq.s32.totalorder %s9, 0
    %p97 = por %p95, %p96
    %p98 = scmp.ne.s32.totalorder %s87, %s90
    %p99 = scmp.eq.s32.totalorder %s14, 1
    %p100 = por %p98, %p99
    %p101 = scmp.ne.s32.totalorder %s90, %s91
    %p102 = scmp.eq.s32.totalorder %s14, 0
    %p103 = por %p101, %p102
    %p104 = scmp.ne.s32.totalorder %s90, %s91
    %p105 = scmp.eq.s32.totalorder %s15, 1
    %p106 = por %p104, %p105
    %p108 = scmp.ne.s32.totalorder %s91, %s107
    %p109 = scmp.eq.s32.totalorder %s15, 0
    %p110 = por %p108, %p109
    %p111 = scmp.le.s32.totalorder 1, %s9
    %p112 = scmp.lt.s32.totalorder %s9, 3
    %p113 = pnand %p111, %p112
    %p114 = pneg %p113
    // Predicated region
    $region9: #{net_forward.4} parent=5 // pred_check
      _
    $region10: #{net_forward.4} parent=5 // pred_check_branch
      %116 = sbr.rel (%p113) target = $region12
    $region11: #{net_forward.4} parent=5 // pred_region
      %s117 = ssub.s32 %s9, 1
      // Predicated region
      $region13: #{net_forward.4} parent=11 // pred_check
        %p118 = pneg %p56
      $region14: #{net_forward.4} parent=11 // pred_check_branch
        %120 = sbr.rel (%p118) target = $region16
      $region15: #{net_forward.4} parent=11 // pred_region
        _
      $region16: #{net_forward.4} parent=11 // pred_fallthru
        _
      // Predicated region
      $region17: #{net_forward.4} parent=11 // pred_check
        %p121 = pneg %p77
      $region18: #{net_forward.4} parent=11 // pred_check_branch
        %123 = sbr.rel (%p121) target = $region20
      $region19: #{net_forward.4} parent=11 // pred_region
        _
      $region20: #{net_forward.4} parent=11 // pred_fallthru
        _
    $region12: #{net_forward.4} parent=5 // pred_fallthru
      _
    %p124 = scmp.lt.s32.totalorder %s9, 2
    // Predicated region
    $region21: #{net_forward.4} parent=5 // pred_check
      %p125 = pneg %p124
    $region22: #{net_forward.4} parent=5 // pred_check_branch
      %127 = sbr.rel (%p125) target = $region24
    $region23: #{net_forward.4} parent=5 // pred_region
      // Predicated region
      $region25: #{net_forward.4} parent=23 // pred_check
        %p128 = pneg %p29
      $region26: #{net_forward.4} parent=23 // pred_check_branch
        %130 = sbr.rel (%p128) target = $region28
      $region27: #{net_forward.4} parent=23 // pred_region
        %p131 = scmp.lt.s32.totalorder %s9, 1
        %s132 = scalar_select %p131, %s9, 1
        %s133 = smul.addr %s132, 100
        %s134 = smul.addr %s133, 4
        %s135 = scalar_lea.vmem %s0, %s134
      $region28: #{net_forward.4} parent=23 // pred_fallthru
        _
    $region24: #{net_forward.4} parent=5 // pred_fallthru
      _
    %p136 = scmp.le.s32.totalorder 1, %s9
    %p137 = scmp.lt.s32.totalorder %s9, 3
    %p138 = pnand %p136, %p137
    %p139 = pneg %p138
    // Predicated region
    $region29: #{net_forward.4} parent=5 // pred_check
      _
    $region30: #{net_forward.4} parent=5 // pred_check_branch
      %141 = sbr.rel (%p138) target = $region32
    $region31: #{net_forward.4} parent=5 // pred_region
      %s142 = ssub.s32 %s9, 1
      %p143 = scmp.lt.s32.totalorder %s14, 1
      %s144 = scalar_select %p143, %s14, 1
      %s145 = smul.addr %s144, 100
      %s146 = smul.addr %s145, 4
      %s147 = scalar_lea.vmem %s0, %s146
      %p148 = pneg %p35
      %p149 = pneg %p32
      %p150 = pneg %p56
      %p151 = pneg %p53
      %p152 = pneg %p77
      %p153 = pneg %p74
      %p154 = pneg %p103
      %p155 = pneg %p100
      %p156 = scmp.lt.s32.totalorder %s14, 1
      %s157 = scalar_select %p156, %s14, 1
      %s158 = smul.addr %s157, 5
      %s159 = smul.addr %s158, 8
      %s160 = scalar_lea.vmem %s3, %s159
      %p161 = scmp.lt.s32.totalorder %s14, 1
      %s162 = scalar_select %p161, %s14, 1
      %s163 = smul.addr %s162, 100
      %s164 = smul.addr %s163, 4
      %s165 = scalar_lea.vmem %s0, %s164
      %p166 = scmp.lt.s32.totalorder %s14, 1
      %s167 = scalar_select %p166, %s14, 1
      %s168 = smul.addr %s167, 5
      %s169 = smul.addr %s168, 8
      %s170 = scalar_lea.vmem %s3, %s169
      %v172 = vld [vmem:[%s1] sm:$0xf]
      %v173 = vld [vmem:[%s1 + $0x4] sm:$0xf]
      %v174 = vld [vmem:[%s1 + $0x8] sm:$0xf]
      %v175 = vld [vmem:[%s1 + $0xc] sm:$0xf]
      %v176 = vld [vmem:[%s1 + $0x10] sm:$0xf]
      %v177 = vld [vmem:[%s1 + $0x14] sm:$0xf]
      %v178 = vld [vmem:[%s1 + $0x18] sm:$0xf]
      %v179 = vld [vmem:[%s1 + $0x1c] sm:$0xf]
      %v180 = vld [vmem:[%s1 + $0x20] sm:$0xf]
      %v181 = vld [vmem:[%s1 + $0x24] sm:$0xf]
      %v182 = vld [vmem:[%s1 + $0x28] sm:$0xf]
      %v183 = vld [vmem:[%s1 + $0x2c] sm:$0xf]
      %v184 = vld [vmem:[%s1 + $0x30] sm:$0xf]
      %v185 = vld [vmem:[%s1 + $0x34] sm:$0xf]
      %v186 = vld [vmem:[%s1 + $0x38] sm:$0xf]
      %v187 = vld [vmem:[%s1 + $0x3c] sm:$0xf]
      %v188 = vld [vmem:[%s1 + $0x40] sm:$0xf]
      %v189 = vld [vmem:[%s1 + $0x44] sm:$0xf]
      %v190 = vld [vmem:[%s1 + $0x48] sm:$0xf]
      %v191 = vld [vmem:[%s1 + $0x4c] sm:$0xf]
      %v192 = vld [vmem:[%s1 + $0x50] sm:$0xf]
      %v193 = vld [vmem:[%s1 + $0x54] sm:$0xf]
      %v194 = vld [vmem:[%s1 + $0x58] sm:$0xf]
      %v195 = vld [vmem:[%s1 + $0x5c] sm:$0xf]
      %v196 = vld [vmem:[%s1 + $0x60] sm:$0xf]
      %v197 = vld [vmem:[%s1 + $0x64] sm:$0xf]
      %v198 = vld [vmem:[%s1 + $0x68] sm:$0xf]
      %v199 = vld [vmem:[%s1 + $0x6c] sm:$0xf]
      %v200 = vld [vmem:[%s1 + $0x70] sm:$0xf]
      %v201 = vld [vmem:[%s1 + $0x74] sm:$0xf]
      %v202 = vld [vmem:[%s1 + $0x78] sm:$0xf]
      %v203 = vld [vmem:[%s1 + $0x7c] sm:$0xf]
      %v204 = vld [vmem:[%s1 + $0x80] sm:$0xf]
      %v205 = vld [vmem:[%s1 + $0x84] sm:$0xf]
      %v206 = vld [vmem:[%s1 + $0x88] sm:$0xf]
      %v207 = vld [vmem:[%s1 + $0x8c] sm:$0xf]
      %v208 = vld [vmem:[%s1 + $0x90] sm:$0xf]
      %v209 = vld [vmem:[%s1 + $0x94] sm:$0xf]
      %v210 = vld [vmem:[%s1 + $0x98] sm:$0xf]
      %v211 = vld [vmem:[%s1 + $0x9c] sm:$0xf]
      %v212 = vld [vmem:[%s1 + $0xa0] sm:$0xf]
      %v213 = vld [vmem:[%s1 + $0xa4] sm:$0xf]
      %v214 = vld [vmem:[%s1 + $0xa8] sm:$0xf]
      %v215 = vld [vmem:[%s1 + $0xac] sm:$0xf]
      %v216 = vld [vmem:[%s1 + $0xb0] sm:$0xf]
      %v217 = vld [vmem:[%s1 + $0xb4] sm:$0xf]
      %v218 = vld [vmem:[%s1 + $0xb8] sm:$0xf]
      %v219 = vld [vmem:[%s1 + $0xbc] sm:$0xf]
      %v220 = vld [vmem:[%s1 + $0xc0] sm:$0xf]
      %v221 = vld [vmem:[%s1 + $0xc4] sm:$0xf]
      %v222 = vld [vmem:[%s1 + $0xc8] sm:$0xf]
      %v223 = vld [vmem:[%s1 + $0xcc] sm:$0xf]
      %v224 = vld [vmem:[%s1 + $0xd0] sm:$0xf]
      %v225 = vld [vmem:[%s1 + $0xd4] sm:$0xf]
      %v226 = vld [vmem:[%s1 + $0xd8] sm:$0xf]
      %v227 = vld [vmem:[%s1 + $0xdc] sm:$0xf]
      %v228 = vld [vmem:[%s1 + $0xe0] sm:$0xf]
      %v229 = vld [vmem:[%s1 + $0xe4] sm:$0xf]
      %v230 = vld [vmem:[%s1 + $0xe8] sm:$0xf]
      %v231 = vld [vmem:[%s1 + $0xec] sm:$0xf]
      %v232 = vld [vmem:[%s1 + $0xf0] sm:$0xf]
      %v233 = vld [vmem:[%s1 + $0xf4] sm:$0xf]
      %v234 = vld [vmem:[%s1 + $0xf8] sm:$0xf]
      %v235 = vld [vmem:[%s1 + $0xfc] sm:$0xf]
      %v236 = vld [vmem:[%s1 + $0x100] sm:$0xf]
      %v237 = vld [vmem:[%s1 + $0x104] sm:$0xf]
      %v238 = vld [vmem:[%s1 + $0x108] sm:$0xf]
      %v239 = vld [vmem:[%s1 + $0x10c] sm:$0xf]
      %v240 = vld [vmem:[%s1 + $0x110] sm:$0xf]
      %v241 = vld [vmem:[%s1 + $0x114] sm:$0xf]
      %v242 = vld [vmem:[%s1 + $0x118] sm:$0xf]
      %v243 = vld [vmem:[%s1 + $0x11c] sm:$0xf]
      %v244 = vld [vmem:[%s165] sm:$0xff]
      %v245 = vld [vmem:[%s165 + $0x8] sm:$0xff]
      %v246 = vld [vmem:[%s165 + $0x10] sm:$0xf]
      %v247 = vld [vmem:[%s165 + $0x14] sm:$0xff]
      %v248 = vld [vmem:[%s165 + $0x1c] sm:$0xff]
      %v249 = vld [vmem:[%s165 + $0x24] sm:$0xf]
      %v250 = vld [vmem:[%s165 + $0x28] sm:$0xff]
      %v251 = vld [vmem:[%s165 + $0x30] sm:$0xff]
      %v252 = vld [vmem:[%s165 + $0x38] sm:$0xf]
      %v253 = vld [vmem:[%s165 + $0x3c] sm:$0xff]
      %v254 = vld [vmem:[%s165 + $0x44] sm:$0xff]
      %v255 = vld [vmem:[%s165 + $0x4c] sm:$0xf]
      %v256 = vld [vmem:[%s165 + $0x50] sm:$0x33]
      %v257 = vld [vmem:[%s165 + $0x58] sm:$0x33]
      %v258 = vld [vmem:[%s165 + $0x60] sm:$0x3]
      %v274 = vunpack.c.l.b16 %v244
      %v275 = vunpack.c.h.b16 %v244
      %v276 = vunpack.c.l.b16 %v245
      %v277 = vunpack.c.h.b16 %v245
      %v278 = vunpack.c.l.b16 %v246
      %v279 = vunpack.c.l.b16 %v247
      %v280 = vunpack.c.h.b16 %v247
      %v281 = vunpack.c.l.b16 %v248
      %v282 = vunpack.c.h.b16 %v248
      %v283 = vunpack.c.l.b16 %v249
      %v284 = vunpack.c.l.b16 %v250
      %v285 = vunpack.c.h.b16 %v250
      %v286 = vunpack.c.l.b16 %v251
      %v287 = vunpack.c.h.b16 %v251
      %v288 = vunpack.c.l.b16 %v252
      %v289 = vunpack.c.l.b16 %v253
      %v290 = vunpack.c.h.b16 %v253
      %v291 = vunpack.c.l.b16 %v254
      %v292 = vunpack.c.h.b16 %v254
      %v293 = vunpack.c.l.b16 %v255
      %v294 = vunpack.c.l.b16 %v256
      %v295 = vunpack.c.h.b16 %v256
      %v296 = vunpack.c.l.b16 %v257
      %v297 = vunpack.c.h.b16 %v257
      %v298 = vunpack.c.l.b16 %v258
      %v299 = vpack.c.b16 %v279, %v274
      %v300 = vpack.c.b16 %v280, %v275
      %v301 = vpack.c.b16 %v281, %v276
      %v302 = vpack.c.b16 %v282, %v277
      %v303 = vpack.c.b16 %v283, %v278
      %v304 = vpack.c.b16 %v289, %v284
      %v305 = vpack.c.b16 %v290, %v285
      %v306 = vpack.c.b16 %v291, %v286
      %v307 = vpack.c.b16 %v292, %v287
      %v308 = vpack.c.b16 %v293, %v288
      %v309 = vpack.c.b16 %v294, %v294
      %v310 = vpack.c.b16 %v295, %v295
      %v311 = vpack.c.b16 %v296, %v296
      %v312 = vpack.c.b16 %v297, %v297
      %v313 = vpack.c.b16 %v298, %v298
      %v398 = vunpack.c.l.b16 %v172
      %v399 = vunpack.c.l.b16 %v173
      %v400 = vunpack.c.l.b16 %v174
      %v401 = vunpack.c.l.b16 %v175
      %v402 = vunpack.c.l.b16 %v176
      %v403 = vunpack.c.l.b16 %v177
      %v404 = vunpack.c.l.b16 %v178
      %v405 = vunpack.c.l.b16 %v179
      %v406 = vunpack.c.l.b16 %v180
      %v407 = vunpack.c.l.b16 %v181
      %v408 = vunpack.c.l.b16 %v182
      %v409 = vunpack.c.l.b16 %v183
      %v410 = vunpack.c.l.b16 %v184
      %v411 = vunpack.c.l.b16 %v185
      %v412 = vunpack.c.l.b16 %v186
      %v413 = vunpack.c.l.b16 %v187
      %v414 = vunpack.c.l.b16 %v188
      %v415 = vunpack.c.l.b16 %v189
      %v416 = vunpack.c.l.b16 %v190
      %v417 = vunpack.c.l.b16 %v191
      %v418 = vunpack.c.l.b16 %v192
      %v419 = vunpack.c.l.b16 %v193
      %v420 = vunpack.c.l.b16 %v194
      %v421 = vunpack.c.l.b16 %v195
      %v422 = vunpack.c.l.b16 %v196
      %v423 = vunpack.c.l.b16 %v197
      %v424 = vunpack.c.l.b16 %v198
      %v425 = vunpack.c.l.b16 %v199
      %v426 = vunpack.c.l.b16 %v200
      %v427 = vunpack.c.l.b16 %v201
      %v428 = vunpack.c.l.b16 %v202
      %v429 = vunpack.c.l.b16 %v203
      %v430 = vunpack.c.l.b16 %v204
      %v431 = vunpack.c.l.b16 %v205
      %v432 = vunpack.c.l.b16 %v206
      %v433 = vunpack.c.l.b16 %v207
      %v434 = vunpack.c.l.b16 %v208
      %v435 = vunpack.c.l.b16 %v209
      %v436 = vunpack.c.l.b16 %v210
      %v437 = vunpack.c.l.b16 %v211
      %v438 = vunpack.c.l.b16 %v212
      %v439 = vunpack.c.l.b16 %v213
      %v440 = vunpack.c.l.b16 %v214
      %v441 = vunpack.c.l.b16 %v215
      %v442 = vunpack.c.l.b16 %v216
      %v443 = vunpack.c.l.b16 %v217
      %v444 = vunpack.c.l.b16 %v218
      %v445 = vunpack.c.l.b16 %v219
      %v446 = vunpack.c.l.b16 %v220
      %v447 = vunpack.c.l.b16 %v221
      %v448 = vunpack.c.l.b16 %v222
      %v449 = vunpack.c.l.b16 %v223
      %v450 = vunpack.c.l.b16 %v224
      %v451 = vunpack.c.l.b16 %v225
      %v452 = vunpack.c.l.b16 %v226
      %v453 = vunpack.c.l.b16 %v227
      %v454 = vunpack.c.l.b16 %v228
      %v455 = vunpack.c.l.b16 %v229
      %v456 = vunpack.c.l.b16 %v230
      %v457 = vunpack.c.l.b16 %v231
      %v458 = vunpack.c.l.b16 %v232
      %v459 = vunpack.c.l.b16 %v233
      %v460 = vunpack.c.l.b16 %v234
      %v461 = vunpack.c.l.b16 %v235
      %v462 = vunpack.c.l.b16 %v236
      %v463 = vunpack.c.l.b16 %v237
      %v464 = vunpack.c.l.b16 %v238
      %v465 = vunpack.c.l.b16 %v239
      %v466 = vunpack.c.l.b16 %v240
      %v467 = vunpack.c.l.b16 %v241
      %v468 = vunpack.c.l.b16 %v242
      %v469 = vunpack.c.l.b16 %v243
      %v470 = vpack.c.b16 %v399, %v398
      %v471 = vpack.c.b16 %v401, %v400
      %v472 = vpack.c.b16 %v403, %v402
      %v473 = vpack.c.b16 %v405, %v404
      %v474 = vpack.c.b16 %v407, %v406
      %v475 = vpack.c.b16 %v409, %v408
      %v476 = vpack.c.b16 %v411, %v410
      %v477 = vpack.c.b16 %v413, %v412
      %v478 = vpack.c.b16 %v415, %v414
      %v479 = vpack.c.b16 %v417, %v416
      %v480 = vpack.c.b16 %v419, %v418
      %v481 = vpack.c.b16 %v421, %v420
      %v482 = vpack.c.b16 %v423, %v422
      %v483 = vpack.c.b16 %v425, %v424
      %v484 = vpack.c.b16 %v427, %v426
      %v485 = vpack.c.b16 %v429, %v428
      %v486 = vpack.c.b16 %v431, %v430
      %v487 = vpack.c.b16 %v433, %v432
      %v488 = vpack.c.b16 %v435, %v434
      %v489 = vpack.c.b16 %v437, %v436
      %v490 = vpack.c.b16 %v439, %v438
      %v491 = vpack.c.b16 %v441, %v440
      %v492 = vpack.c.b16 %v443, %v442
      %v493 = vpack.c.b16 %v445, %v444
      %v494 = vpack.c.b16 %v447, %v446
      %v495 = vpack.c.b16 %v449, %v448
      %v496 = vpack.c.b16 %v451, %v450
      %v497 = vpack.c.b16 %v453, %v452
      %v498 = vpack.c.b16 %v455, %v454
      %v499 = vpack.c.b16 %v457, %v456
      %v500 = vpack.c.b16 %v459, %v458
      %v501 = vpack.c.b16 %v461, %v460
      %v502 = vpack.c.b16 %v463, %v462
      %v503 = vpack.c.b16 %v465, %v464
      %v504 = vpack.c.b16 %v467, %v466
      %v505 = vpack.c.b16 %v469, %v468
      %vm542 = vcmask 523264
      %v544 = vsel %vm542, %v303, 0
      %v547 = vsel %vm542, %v308, 0
      %v550 = vsel %vm542, %v313, 0
      %552 = vmatprep.subr.bf16.mxu0 0
      %553 = vmatpush1.bf16.msra.mxu0 %v470
      %554 = vmatprep.subr.bf16.mxu0 0
      %555 = vmatpush1.bf16.msra.mxu0 %v471
      %556 = vmatprep.subr.bf16.mxu0 0
      %557 = vmatpush1.bf16.msra.mxu0 %v472
      %558 = vmatprep.subr.bf16.mxu0 0
      %559 = vmatpush1.bf16.msra.mxu0 %v473
      %560 = vmatprep.subr.bf16.mxu0 0
      %561 = vmatpush1.bf16.msra.mxu0 %v474
      %562 = vmatprep.subr.bf16.mxu0 0
      %563 = vmatpush1.bf16.msra.mxu0 %v475
      %564 = vmatprep.subr.bf16.mxu0 0
      %565 = vmatpush1.bf16.msra.mxu0 %v476
      %566 = vmatprep.subr.bf16.mxu0 0
      %567 = vmatpush1.bf16.msra.mxu0 %v477
      %568 = vmatprep.subr.bf16.mxu0 0
      %569 = vmatpush1.bf16.msra.mxu0 %v478
      %570 = vmatprep.subr.bf16.mxu0 0
      %571 = vmatpush1.bf16.msra.mxu0 %v479
      %572 = vmatprep.subr.bf16.mxu0 0
      %573 = vmatpush1.bf16.msra.mxu0 %v480
      %574 = vmatprep.subr.bf16.mxu0 0
      %575 = vmatpush1.bf16.msra.mxu0 %v481
      %576 = vmatprep.subr.bf16.mxu0 0
      %577 = vmatpush1.bf16.msra.mxu0 %v482
      %578 = vmatprep.subr.bf16.mxu0 0
      %579 = vmatpush1.bf16.msra.mxu0 %v483
      %580 = vmatprep.subr.bf16.mxu0 0
      %581 = vmatpush1.bf16.msra.mxu0 %v484
      %582 = vmatprep.subr.bf16.mxu0 0
      %583 = vmatpush1.bf16.msra.mxu0 %v485
      %584 = vmatprep.mubr.bf16.mxu0 %v300
      %585 = vmatmul.mubr.bf16.gmra.mrb[0].mxu0 %v299
      %v586 = vpop.f32.mrb[0].mxu0
      %v587 = vadd.f32 0.0, %v586
      %v588 = vpop.f32.mrb[0].mxu0
      %v589 = vpop.f32.mrb[0].mxu0
      %v590 = vadd.f32 0.0, %v589
      %v591 = vpop.f32.mrb[0].mxu0
      %592 = vmatprep.mubr.bf16.mxu0 %v305
      %593 = vmatmul.mubr.bf16.gmra.mrb[0].mxu0 %v304
      %v594 = vpop.f32.mrb[0].mxu0
      %v595 = vadd.f32 0.0, %v594
      %v596 = vpop.f32.mrb[0].mxu0
      %v597 = vpop.f32.mrb[0].mxu0
      %v598 = vadd.f32 0.0, %v597
      %v599 = vpop.f32.mrb[0].mxu0
      %600 = vmatprep.mubr.bf16.mxu0 %v310
      %601 = vmatmul.mubr.bf16.gmra.mrb[0].mxu0 %v309
      %v602 = vpop.f32.mrb[0].mxu0
      %v603 = vadd.f32 0.0, %v602
      %v604 = vpop.f32.mrb[0].mxu0
      %v605 = vpop.f32.mrb[0].mxu0
      %v606 = vpop.f32.mrb[0].mxu0
      %607 = vdwg.mxu0
      %608 = vmatprep.subr.bf16.mxu0 0
      %609 = vmatpush1.bf16.msra.mxu0 %v486
      %610 = vmatprep.subr.bf16.mxu0 0
      %611 = vmatpush1.bf16.msra.mxu0 %v487
      %612 = vmatprep.subr.bf16.mxu0 0
      %613 = vmatpush1.bf16.msra.mxu0 %v488
      %614 = vmatprep.subr.bf16.mxu0 0
      %615 = vmatpush1.bf16.msra.mxu0 %v489
      %616 = vmatprep.subr.bf16.mxu0 0
      %617 = vmatpush1.bf16.msra.mxu0 %v490
      %618 = vmatprep.subr.bf16.mxu0 0
      %619 = vmatpush1.bf16.msra.mxu0 %v491
      %620 = vmatprep.subr.bf16.mxu0 0
      %621 = vmatpush1.bf16.msra.mxu0 %v492
      %622 = vmatprep.subr.bf16.mxu0 0
      %623 = vmatpush1.bf16.msra.mxu0 %v493
      %624 = vmatprep.subr.bf16.mxu0 0
      %625 = vmatpush1.bf16.msra.mxu0 %v494
      %626 = vmatprep.subr.bf16.mxu0 0
      %627 = vmatpush1.bf16.msra.mxu0 %v495
      %628 = vmatprep.subr.bf16.mxu0 0
      %629 = vmatpush1.bf16.msra.mxu0 %v496
      %630 = vmatprep.subr.bf16.mxu0 0
      %631 = vmatpush1.bf16.msra.mxu0 %v497
      %632 = vmatprep.subr.bf16.mxu0 0
      %633 = vmatpush1.bf16.msra.mxu0 %v498
      %634 = vmatprep.subr.bf16.mxu0 0
      %635 = vmatpush1.bf16.msra.mxu0 %v499
      %636 = vmatprep.subr.bf16.mxu0 0
      %637 = vmatpush1.bf16.msra.mxu0 %v500
      %638 = vmatprep.subr.bf16.mxu0 0
      %639 = vmatpush1.bf16.msra.mxu0 %v501
      %640 = vmatprep.mubr.bf16.mxu0 %v302
      %641 = vmatmul.mubr.bf16.gmra.mrb[0].mxu0 %v301
      %v642 = vpop.f32.mrb[0].mxu0
      %v643 = vadd.f32 %v587, %v642
      %v644 = vpop.f32.mrb[0].mxu0
      %v645 = vpop.f32.mrb[0].mxu0
      %v646 = vadd.f32 %v590, %v645
      %v647 = vpop.f32.mrb[0].mxu0
      %648 = vmatprep.mubr.bf16.mxu0 %v307
      %649 = vmatmul.mubr.bf16.gmra.mrb[0].mxu0 %v306
      %v650 = vpop.f32.mrb[0].mxu0
      %v651 = vadd.f32 %v595, %v650
      %v652 = vpop.f32.mrb[0].mxu0
      %v653 = vpop.f32.mrb[0].mxu0
      %v654 = vadd.f32 %v598, %v653
      %v655 = vpop.f32.mrb[0].mxu0
      %656 = vmatprep.mubr.bf16.mxu0 %v312
      %657 = vmatmul.mubr.bf16.gmra.mrb[0].mxu0 %v311
      %v658 = vpop.f32.mrb[0].mxu0
      %v659 = vadd.f32 %v603, %v658
      %v660 = vpop.f32.mrb[0].mxu0
      %v661 = vpop.f32.mrb[0].mxu0
      %v662 = vpop.f32.mrb[0].mxu0
      %663 = vdwg.mxu0
      %664 = vmatprep.subr.bf16.mxu0 0
      %665 = vmatpush1.bf16.msra.mxu0 %v502
      %666 = vmatprep.subr.bf16.mxu0 0
      %667 = vmatpush1.bf16.msra.mxu0 %v503
      %668 = vmatprep.subr.bf16.mxu0 0
      %669 = vmatpush1.bf16.msra.mxu0 %v504
      %670 = vmatprep.subr.bf16.mxu0 0
      %671 = vmatpush1.bf16.msra.mxu0 %v505
      %672 = vmatprep.subr.bf16.mxu0 0
      %673 = vmatpush1.bf16.msra.mxu0 0
      %674 = vmatprep.subr.bf16.mxu0 0
      %675 = vmatpush1.bf16.msra.mxu0 0
      %676 = vmatprep.subr.bf16.mxu0 0
      %677 = vmatpush1.bf16.msra.mxu0 0
      %678 = vmatprep.subr.bf16.mxu0 0
      %679 = vmatpush1.bf16.msra.mxu0 0
      %680 = vmatprep.subr.bf16.mxu0 0
      %681 = vmatpush1.bf16.msra.mxu0 0
      %682 = vmatprep.subr.bf16.mxu0 0
      %683 = vmatpush1.bf16.msra.mxu0 0
      %684 = vmatprep.subr.bf16.mxu0 0
      %685 = vmatpush1.bf16.msra.mxu0 0
      %686 = vmatprep.subr.bf16.mxu0 0
      %687 = vmatpush1.bf16.msra.mxu0 0
      %688 = vmatprep.subr.bf16.mxu0 0
      %689 = vmatpush1.bf16.msra.mxu0 0
      %690 = vmatprep.subr.bf16.mxu0 0
      %691 = vmatpush1.bf16.msra.mxu0 0
      %692 = vmatprep.subr.bf16.mxu0 0
      %693 = vmatpush1.bf16.msra.mxu0 0
      %694 = vmatprep.subr.bf16.mxu0 0
      %695 = vmatpush1.bf16.msra.mxu0 0
      %696 = vmatprep.mubr.bf16.mxu0 0
      %697 = vmatmul.mubr.bf16.gmra.mrb[0].mxu0 %v544
      %v698 = vpop.f32.mrb[0].mxu0
      %v699 = vadd.f32 %v643, %v698
      %v700 = vpop.f32.mrb[0].mxu0
      %v701 = vpop.f32.mrb[0].mxu0
      %v702 = vadd.f32 %v646, %v701
      %v703 = vpop.f32.mrb[0].mxu0
      %704 = vmatprep.mubr.bf16.mxu0 0
      %705 = vmatmul.mubr.bf16.gmra.mrb[0].mxu0 %v547
      %v706 = vpop.f32.mrb[0].mxu0
      %v707 = vadd.f32 %v651, %v706
      %v708 = vpop.f32.mrb[0].mxu0
      %v709 = vpop.f32.mrb[0].mxu0
      %v710 = vadd.f32 %v654, %v709
      %v711 = vpop.f32.mrb[0].mxu0
      %712 = vmatprep.mubr.bf16.mxu0 0
      %713 = vmatmul.mubr.bf16.gmra.mrb[0].mxu0 %v550
      %v714 = vpop.f32.mrb[0].mxu0
      %v715 = vadd.f32 %v659, %v714
      %v716 = vpop.f32.mrb[0].mxu0
      %v717 = vpop.f32.mrb[0].mxu0
      %v718 = vpop.f32.mrb[0].mxu0
      %719 = vdwg.mxu0
      %s720 = scalar_lea.vmem %s165, 100
      %v721 = vld [vmem:[%s720] sm:$0xff]
      %v722 = vld [vmem:[%s720 + $0x8] sm:$0xff]
      %v723 = vld [vmem:[%s720 + $0x10] sm:$0xf]
      %v724 = vld [vmem:[%s720 + $0x14] sm:$0xff]
      %v725 = vld [vmem:[%s720 + $0x1c] sm:$0xff]
      %v726 = vld [vmem:[%s720 + $0x24] sm:$0xf]
      %v727 = vld [vmem:[%s720 + $0x28] sm:$0xff]
      %v728 = vld [vmem:[%s720 + $0x30] sm:$0xff]
      %v729 = vld [vmem:[%s720 + $0x38] sm:$0xf]
      %v730 = vld [vmem:[%s720 + $0x3c] sm:$0xff]
      %v731 = vld [vmem:[%s720 + $0x44] sm:$0xff]
      %v732 = vld [vmem:[%s720 + $0x4c] sm:$0xf]
      %v733 = vld [vmem:[%s720 + $0x50] sm:$0x33]
      %v734 = vld [vmem:[%s720 + $0x58] sm:$0x33]
      %v735 = vld [vmem:[%s720 + $0x60] sm:$0x3]
      %v751 = vunpack.c.l.b16 %v721
      %v752 = vunpack.c.h.b16 %v721
      %v753 = vunpack.c.l.b16 %v722
      %v754 = vunpack.c.h.b16 %v722
      %v755 = vunpack.c.l.b16 %v723
      %v756 = vunpack.c.l.b16 %v724
      %v757 = vunpack.c.h.b16 %v724
      %v758 = vunpack.c.l.b16 %v725
      %v759 = vunpack.c.h.b16 %v725
      %v760 = vunpack.c.l.b16 %v726
      %v761 = vunpack.c.l.b16 %v727
      %v762 = vunpack.c.h.b16 %v727
      %v763 = vunpack.c.l.b16 %v728
      %v764 = vunpack.c.h.b16 %v728
      %v765 = vunpack.c.l.b16 %v729
      %v766 = vunpack.c.l.b16 %v730
      %v767 = vunpack.c.h.b16 %v730
      %v768 = vunpack.c.l.b16 %v731
      %v769 = vunpack.c.h.b16 %v731
      %v770 = vunpack.c.l.b16 %v732
      %v771 = vunpack.c.l.b16 %v733
      %v772 = vunpack.c.h.b16 %v733
      %v773 = vunpack.c.l.b16 %v734
      %v774 = vunpack.c.h.b16 %v734
      %v775 = vunpack.c.l.b16 %v735
      %v776 = vpack.c.b16 %v756, %v751
      %v777 = vpack.c.b16 %v757, %v752
      %v778 = vpack.c.b16 %v758, %v753
      %v779 = vpack.c.b16 %v759, %v754
      %v780 = vpack.c.b16 %v760, %v755
      %v781 = vpack.c.b16 %v766, %v761
      %v782 = vpack.c.b16 %v767, %v762
      %v783 = vpack.c.b16 %v768, %v763
      %v784 = vpack.c.b16 %v769, %v764
      %v785 = vpack.c.b16 %v770, %v765
      %v786 = vpack.c.b16 %v771, %v771
      %v787 = vpack.c.b16 %v772, %v772
      %v788 = vpack.c.b16 %v773, %v773
      %v789 = vpack.c.b16 %v774, %v774
      %v790 = vpack.c.b16 %v775, %v775
      %v804 = vsel %vm542, %v780, 0
      %v807 = vsel %vm542, %v785, 0
      %v810 = vsel %vm542, %v790, 0
      %812 = vmatprep.subr.bf16.mxu0 0
      %813 = vmatpush1.bf16.msra.mxu0 %v470
      %814 = vmatprep.subr.bf16.mxu0 0
      %815 = vmatpush1.bf16.msra.mxu0 %v471
      %816 = vmatprep.subr.bf16.mxu0 0
      %817 = vmatpush1.bf16.msra.mxu0 %v472
      %818 = vmatprep.subr.bf16.mxu0 0
      %819 = vmatpush1.bf16.msra.mxu0 %v473
      %820 = vmatprep.subr.bf16.mxu0 0
      %821 = vmatpush1.bf16.msra.mxu0 %v474
      %822 = vmatprep.subr.bf16.mxu0 0
      %823 = vmatpush1.bf16.msra.mxu0 %v475
      %824 = vmatprep.subr.bf16.mxu0 0
      %825 = vmatpush1.bf16.msra.mxu0 %v476
      %826 = vmatprep.subr.bf16.mxu0 0
      %827 = vmatpush1.bf16.msra.mxu0 %v477
      %828 = vmatprep.subr.bf16.mxu0 0
      %829 = vmatpush1.bf16.msra.mxu0 %v478
      %830 = vmatprep.subr.bf16.mxu0 0
      %831 = vmatpush1.bf16.msra.mxu0 %v479
      %832 = vmatprep.subr.bf16.mxu0 0
      %833 = vmatpush1.bf16.msra.mxu0 %v480
      %834 = vmatprep.subr.bf16.mxu0 0
      %835 = vmatpush1.bf16.msra.mxu0 %v481
      %836 = vmatprep.subr.bf16.mxu0 0
      %837 = vmatpush1.bf16.msra.mxu0 %v482
      %838 = vmatprep.subr.bf16.mxu0 0
      %839 = vmatpush1.bf16.msra.mxu0 %v483
      %840 = vmatprep.subr.bf16.mxu0 0
      %841 = vmatpush1.bf16.msra.mxu0 %v484
      %842 = vmatprep.subr.bf16.mxu0 0
      %843 = vmatpush1.bf16.msra.mxu0 %v485
      %844 = vmatprep.mubr.bf16.mxu0 %v777
      %845 = vmatmul.mubr.bf16.gmra.mrb[0].mxu0 %v776
      %v846 = vpop.f32.mrb[0].mxu0
      %v847 = vadd.f32 0.0, %v846
      %v848 = vpop.f32.mrb[0].mxu0
      %v849 = vpop.f32.mrb[0].mxu0
      %v850 = vadd.f32 0.0, %v849
      %v851 = vpop.f32.mrb[0].mxu0
      %852 = vmatprep.mubr.bf16.mxu0 %v782
      %853 = vmatmul.mubr.bf16.gmra.mrb[0].mxu0 %v781
      %v854 = vpop.f32.mrb[0].mxu0
      %v855 = vadd.f32 0.0, %v854
      %v856 = vpop.f32.mrb[0].mxu0
      %v857 = vpop.f32.mrb[0].mxu0
      %v858 = vadd.f32 0.0, %v857
      %v859 = vpop.f32.mrb[0].mxu0
      %860 = vmatprep.mubr.bf16.mxu0 %v787
      %861 = vmatmul.mubr.bf16.gmra.mrb[0].mxu0 %v786
      %v862 = vpop.f32.mrb[0].mxu0
      %v863 = vadd.f32 0.0, %v862
      %v864 = vpop.f32.mrb[0].mxu0
      %v865 = vpop.f32.mrb[0].mxu0
      %v866 = vpop.f32.mrb[0].mxu0
      %867 = vdwg.mxu0
      %868 = vmatprep.subr.bf16.mxu0 0
      %869 = vmatpush1.bf16.msra.mxu0 %v486
      %870 = vmatprep.subr.bf16.mxu0 0
      %871 = vmatpush1.bf16.msra.mxu0 %v487
      %872 = vmatprep.subr.bf16.mxu0 0
      %873 = vmatpush1.bf16.msra.mxu0 %v488
      %874 = vmatprep.subr.bf16.mxu0 0
      %875 = vmatpush1.bf16.msra.mxu0 %v489
      %876 = vmatprep.subr.bf16.mxu0 0
      %877 = vmatpush1.bf16.msra.mxu0 %v490
      %878 = vmatprep.subr.bf16.mxu0 0
      %879 = vmatpush1.bf16.msra.mxu0 %v491
      %880 = vmatprep.subr.bf16.mxu0 0
      %881 = vmatpush1.bf16.msra.mxu0 %v492
      %882 = vmatprep.subr.bf16.mxu0 0
      %883 = vmatpush1.bf16.msra.mxu0 %v493
      %884 = vmatprep.subr.bf16.mxu0 0
      %885 = vmatpush1.bf16.msra.mxu0 %v494
      %886 = vmatprep.subr.bf16.mxu0 0
      %887 = vmatpush1.bf16.msra.mxu0 %v495
      %888 = vmatprep.subr.bf16.mxu0 0
      %889 = vmatpush1.bf16.msra.mxu0 %v496
      %890 = vmatprep.subr.bf16.mxu0 0
      %891 = vmatpush1.bf16.msra.mxu0 %v497
      %892 = vmatprep.subr.bf16.mxu0 0
      %893 = vmatpush1.bf16.msra.mxu0 %v498
      %894 = vmatprep.subr.bf16.mxu0 0
      %895 = vmatpush1.bf16.msra.mxu0 %v499
      %896 = vmatprep.subr.bf16.mxu0 0
      %897 = vmatpush1.bf16.msra.mxu0 %v500
      %898 = vmatprep.subr.bf16.mxu0 0
      %899 = vmatpush1.bf16.msra.mxu0 %v501
      %900 = vmatprep.mubr.bf16.mxu0 %v779
      %901 = vmatmul.mubr.bf16.gmra.mrb[0].mxu0 %v778
      %v902 = vpop.f32.mrb[0].mxu0
      %v903 = vadd.f32 %v847, %v902
      %v904 = vpop.f32.mrb[0].mxu0
      %v905 = vpop.f32.mrb[0].mxu0
      %v906 = vadd.f32 %v850, %v905
      %v907 = vpop.f32.mrb[0].mxu0
      %908 = vmatprep.mubr.bf16.mxu0 %v784
      %909 = vmatmul.mubr.bf16.gmra.mrb[0].mxu0 %v783
      %v910 = vpop.f32.mrb[0].mxu0
      %v911 = vadd.f32 %v855, %v910
      %v912 = vpop.f32.mrb[0].mxu0
      %v913 = vpop.f32.mrb[0].mxu0
      %v914 = vadd.f32 %v858, %v913
      %v915 = vpop.f32.mrb[0].mxu0
      %916 = vmatprep.mubr.bf16.mxu0 %v789
      %917 = vmatmul.mubr.bf16.gmra.mrb[0].mxu0 %v788
      %v918 = vpop.f32.mrb[0].mxu0
      %v919 = vadd.f32 %v863, %v918
      %v920 = vpop.f32.mrb[0].mxu0
      %v921 = vpop.f32.mrb[0].mxu0
      %v922 = vpop.f32.mrb[0].mxu0
      %923 = vdwg.mxu0
      %924 = vmatprep.subr.bf16.mxu0 0
      %925 = vmatpush1.bf16.msra.mxu0 %v502
      %926 = vmatprep.subr.bf16.mxu0 0
      %927 = vmatpush1.bf16.msra.mxu0 %v503
      %928 = vmatprep.subr.bf16.mxu0 0
      %929 = vmatpush1.bf16.msra.mxu0 %v504
      %930 = vmatprep.subr.bf16.mxu0 0
      %931 = vmatpush1.bf16.msra.mxu0 %v505
      %932 = vmatprep.subr.bf16.mxu0 0
      %933 = vmatpush1.bf16.msra.mxu0 0
      %934 = vmatprep.subr.bf16.mxu0 0
      %935 = vmatpush1.bf16.msra.mxu0 0
      %936 = vmatprep.subr.bf16.mxu0 0
      %937 = vmatpush1.bf16.msra.mxu0 0
      %938 = vmatprep.subr.bf16.mxu0 0
      %939 = vmatpush1.bf16.msra.mxu0 0
      %940 = vmatprep.subr.bf16.mxu0 0
      %941 = vmatpush1.bf16.msra.mxu0 0
      %942 = vmatprep.subr.bf16.mxu0 0
      %943 = vmatpush1.bf16.msra.mxu0 0
      %944 = vmatprep.subr.bf16.mxu0 0
      %945 = vmatpush1.bf16.msra.mxu0 0
      %946 = vmatprep.subr.bf16.mxu0 0
      %947 = vmatpush1.bf16.msra.mxu0 0
      %948 = vmatprep.subr.bf16.mxu0 0
      %949 = vmatpush1.bf16.msra.mxu0 0
      %950 = vmatprep.subr.bf16.mxu0 0
      %951 = vmatpush1.bf16.msra.mxu0 0
      %952 = vmatprep.subr.bf16.mxu0 0
      %953 = vmatpush1.bf16.msra.mxu0 0
      %954 = vmatprep.subr.bf16.mxu0 0
      %955 = vmatpush1.bf16.msra.mxu0 0
      %956 = vmatprep.mubr.bf16.mxu0 0
      %957 = vmatmul.mubr.bf16.gmra.mrb[0].mxu0 %v804
      %v958 = vpop.f32.mrb[0].mxu0
      %v959 = vadd.f32 %v903, %v958
      %v960 = vpop.f32.mrb[0].mxu0
      %v961 = vpop.f32.mrb[0].mxu0
      %v962 = vadd.f32 %v906, %v961
      %v963 = vpop.f32.mrb[0].mxu0
      %964 = vmatprep.mubr.bf16.mxu0 0
      %965 = vmatmul.mubr.bf16.gmra.mrb[0].mxu0 %v807
      %v966 = vpop.f32.mrb[0].mxu0
      %v967 = vadd.f32 %v911, %v966
      %v968 = vpop.f32.mrb[0].mxu0
      %v969 = vpop.f32.mrb[0].mxu0
      %v970 = vadd.f32 %v914, %v969
      %v971 = vpop.f32.mrb[0].mxu0
      %972 = vmatprep.mubr.bf16.mxu0 0
      %973 = vmatmul.mubr.bf16.gmra.mrb[0].mxu0 %v810
      %v974 = vpop.f32.mrb[0].mxu0
      %v975 = vadd.f32 %v919, %v974
      %v976 = vpop.f32.mrb[0].mxu0
      %v977 = vpop.f32.mrb[0].mxu0
      %v978 = vpop.f32.mrb[0].mxu0
      %979 = vdwg.mxu0
      %v980 = vmax.f32 %v699, %v959
      %v981 = vmax.f32 %v702, %v962
      %v982 = vmax.f32 %v707, %v967
      %v983 = vmax.f32 %v710, %v970
      %v984 = vmax.f32 %v715, %v975
      %s985 = scalar_lea.vmem %s165, 200
      %v986 = vld [vmem:[%s985] sm:$0xff]
      %v987 = vld [vmem:[%s985 + $0x8] sm:$0xff]
      %v988 = vld [vmem:[%s985 + $0x10] sm:$0xf]
      %v989 = vld [vmem:[%s985 + $0x14] sm:$0xff]
      %v990 = vld [vmem:[%s985 + $0x1c] sm:$0xff]
      %v991 = vld [vmem:[%s985 + $0x24] sm:$0xf]
      %v992 = vld [vmem:[%s985 + $0x28] sm:$0xff]
      %v993 = vld [vmem:[%s985 + $0x30] sm:$0xff]
      %v994 = vld [vmem:[%s985 + $0x38] sm:$0xf]
      %v995 = vld [vmem:[%s985 + $0x3c] sm:$0xff]
      %v996 = vld [vmem:[%s985 + $0x44] sm:$0xff]
      %v997 = vld [vmem:[%s985 + $0x4c] sm:$0xf]
      %v998 = vld [vmem:[%s985 + $0x50] sm:$0x33]
      %v999 = vld [vmem:[%s985 + $0x58] sm:$0x33]
      %v1000 = vld [vmem:[%s985 + $0x60] sm:$0x3]
      %v1016 = vunpack.c.l.b16 %v986
      %v1017 = vunpack.c.h.b16 %v986
      %v1018 = vunpack.c.l.b16 %v987
      %v1019 = vunpack.c.h.b16 %v987
      %v1020 = vunpack.c.l.b16 %v988
      %v1021 = vunpack.c.l.b16 %v989
      %v1022 = vunpack.c.h.b16 %v989
      %v1023 = vunpack.c.l.b16 %v990
      %v1024 = vunpack.c.h.b16 %v990
      %v1025 = vunpack.c.l.b16 %v991
      %v1026 = vunpack.c.l.b16 %v992
      %v1027 = vunpack.c.h.b16 %v992
      %v1028 = vunpack.c.l.b16 %v993
      %v1029 = vunpack.c.h.b16 %v993
      %v1030 = vunpack.c.l.b16 %v994
      %v1031 = vunpack.c.l.b16 %v995
      %v1032 = vunpack.c.h.b16 %v995
      %v1033 = vunpack.c.l.b16 %v996
      %v1034 = vunpack.c.h.b16 %v996
      %v1035 = vunpack.c.l.b16 %v997
      %v1036 = vunpack.c.l.b16 %v998
      %v1037 = vunpack.c.h.b16 %v998
      %v1038 = vunpack.c.l.b16 %v999
      %v1039 = vunpack.c.h.b16 %v999
      %v1040 = vunpack.c.l.b16 %v1000
      %v1041 = vpack.c.b16 %v1021, %v1016
      %v1042 = vpack.c.b16 %v1022, %v1017
      %v1043 = vpack.c.b16 %v1023, %v1018
      %v1044 = vpack.c.b16 %v1024, %v1019
      %v1045 = vpack.c.b16 %v1025, %v1020
      %v1046 = vpack.c.b16 %v1031, %v1026
      %v1047 = vpack.c.b16 %v1032, %v1027
      %v1048 = vpack.c.b16 %v1033, %v1028
      %v1049 = vpack.c.b16 %v1034, %v1029
      %v1050 = vpack.c.b16 %v1035, %v1030
      %v1051 = vpack.c.b16 %v1036, %v1036
      %v1052 = vpack.c.b16 %v1037, %v1037
      %v1053 = vpack.c.b16 %v1038, %v1038
      %v1054 = vpack.c.b16 %v1039, %v1039
      %v1055 = vpack.c.b16 %v1040, %v1040
      %v1069 = vsel %vm542, %v1045, 0
      %v1072 = vsel %vm542, %v1050, 0
      %v1075 = vsel %vm542, %v1055, 0
      %1077 = vmatprep.subr.bf16.mxu0 0
      %1078 = vmatpush1.bf16.msra.mxu0 %v470
      %1079 = vmatprep.subr.bf16.mxu0 0
      %1080 = vmatpush1.bf16.msra.mxu0 %v471
      %1081 = vmatprep.subr.bf16.mxu0 0
      %1082 = vmatpush1.bf16.msra.mxu0 %v472
      %1083 = vmatprep.subr.bf16.mxu0 0
      %1084 = vmatpush1.bf16.msra.mxu0 %v473
      %1085 = vmatprep.subr.bf16.mxu0 0
      %1086 = vmatpush1.bf16.msra.mxu0 %v474
      %1087 = vmatprep.subr.bf16.mxu0 0
      %1088 = vmatpush1.bf16.msra.mxu0 %v475
      %1089 = vmatprep.subr.bf16.mxu0 0
      %1090 = vmatpush1.bf16.msra.mxu0 %v476
      %1091 = vmatprep.subr.bf16.mxu0 0
      %1092 = vmatpush1.bf16.msra.mxu0 %v477
      %1093 = vmatprep.subr.bf16.mxu0 0
      %1094 = vmatpush1.bf16.msra.mxu0 %v478
      %1095 = vmatprep.subr.bf16.mxu0 0
      %1096 = vmatpush1.bf16.msra.mxu0 %v479
      %1097 = vmatprep.subr.bf16.mxu0 0
      %1098 = vmatpush1.bf16.msra.mxu0 %v480
      %1099 = vmatprep.subr.bf16.mxu0 0
      %1100 = vmatpush1.bf16.msra.mxu0 %v481
      %1101 = vmatprep.subr.bf16.mxu0 0
      %1102 = vmatpush1.bf16.msra.mxu0 %v482
      %1103 = vmatprep.subr.bf16.mxu0 0
      %1104 = vmatpush1.bf16.msra.mxu0 %v483
      %1105 = vmatprep.subr.bf16.mxu0 0
      %1106 = vmatpush1.bf16.msra.mxu0 %v484
      %1107 = vmatprep.subr.bf16.mxu0 0
      %1108 = vmatpush1.bf16.msra.mxu0 %v485
      %1109 = vmatprep.mubr.bf16.mxu0 %v1042
      %1110 = vmatmul.mubr.bf16.gmra.mrb[0].mxu0 %v1041
      %v1111 = vpop.f32.mrb[0].mxu0
      %v1112 = vadd.f32 0.0, %v1111
      %v1113 = vpop.f32.mrb[0].mxu0
      %v1114 = vpop.f32.mrb[0].mxu0
      %v1115 = vadd.f32 0.0, %v1114
      %v1116 = vpop.f32.mrb[0].mxu0
      %1117 = vmatprep.mubr.bf16.mxu0 %v1047
      %1118 = vmatmul.mubr.bf16.gmra.mrb[0].mxu0 %v1046
      %v1119 = vpop.f32.mrb[0].mxu0
      %v1120 = vadd.f32 0.0, %v1119
      %v1121 = vpop.f32.mrb[0].mxu0
      %v1122 = vpop.f32.mrb[0].mxu0
      %v1123 = vadd.f32 0.0, %v1122
      %v1124 = vpop.f32.mrb[0].mxu0
      %1125 = vmatprep.mubr.bf16.mxu0 %v1052
      %1126 = vmatmul.mubr.bf16.gmra.mrb[0].mxu0 %v1051
      %v1127 = vpop.f32.mrb[0].mxu0
      %v1128 = vadd.f32 0.0, %v1127
      %v1129 = vpop.f32.mrb[0].mxu0
      %v1130 = vpop.f32.mrb[0].mxu0
      %v1131 = vpop.f32.mrb[0].mxu0
      %1132 = vdwg.mxu0
      %1133 = vmatprep.subr.bf16.mxu0 0
      %1134 = vmatpush1.bf16.msra.mxu0 %v486
      %1135 = vmatprep.subr.bf16.mxu0 0
      %1136 = vmatpush1.bf16.msra.mxu0 %v487
      %1137 = vmatprep.subr.bf16.mxu0 0
      %1138 = vmatpush1.bf16.msra.mxu0 %v488
      %1139 = vmatprep.subr.bf16.mxu0 0
      %1140 = vmatpush1.bf16.msra.mxu0 %v489
      %1141 = vmatprep.subr.bf16.mxu0 0
      %1142 = vmatpush1.bf16.msra.mxu0 %v490
      %1143 = vmatprep.subr.bf16.mxu0 0
      %1144 = vmatpush1.bf16.msra.mxu0 %v491
      %1145 = vmatprep.subr.bf16.mxu0 0
      %1146 = vmatpush1.bf16.msra.mxu0 %v492
      %1147 = vmatprep.subr.bf16.mxu0 0
      %1148 = vmatpush1.bf16.msra.mxu0 %v493
      %1149 = vmatprep.subr.bf16.mxu0 0
      %1150 = vmatpush1.bf16.msra.mxu0 %v494
      %1151 = vmatprep.subr.bf16.mxu0 0
      %1152 = vmatpush1.bf16.msra.mxu0 %v495
      %1153 = vmatprep.subr.bf16.mxu0 0
      %1154 = vmatpush1.bf16.msra.mxu0 %v496
      %1155 = vmatprep.subr.bf16.mxu0 0
      %1156 = vmatpush1.bf16.msra.mxu0 %v497
      %1157 = vmatprep.subr.bf16.mxu0 0
      %1158 = vmatpush1.bf16.msra.mxu0 %v498
      %1159 = vmatprep.subr.bf16.mxu0 0
      %1160 = vmatpush1.bf16.msra.mxu0 %v499
      %1161 = vmatprep.subr.bf16.mxu0 0
      %1162 = vmatpush1.bf16.msra.mxu0 %v500
      %1163 = vmatprep.subr.bf16.mxu0 0
      %1164 = vmatpush1.bf16.msra.mxu0 %v501
      %1165 = vmatprep.mubr.bf16.mxu0 %v1044
      %1166 = vmatmul.mubr.bf16.gmra.mrb[0].mxu0 %v1043
      %v1167 = vpop.f32.mrb[0].mxu0
      %v1168 = vadd.f32 %v1112, %v1167
      %v1169 = vpop.f32.mrb[0].mxu0
      %v1170 = vpop.f32.mrb[0].mxu0
      %v1171 = vadd.f32 %v1115, %v1170
      %v1172 = vpop.f32.mrb[0].mxu0
      %1173 = vmatprep.mubr.bf16.mxu0 %v1049
      %1174 = vmatmul.mubr.bf16.gmra.mrb[0].mxu0 %v1048
      %v1175 = vpop.f32.mrb[0].mxu0
      %v1176 = vadd.f32 %v1120, %v1175
      %v1177 = vpop.f32.mrb[0].mxu0
      %v1178 = vpop.f32.mrb[0].mxu0
      %v1179 = vadd.f32 %v1123, %v1178
      %v1180 = vpop.f32.mrb[0].mxu0
      %1181 = vmatprep.mubr.bf16.mxu0 %v1054
      %1182 = vmatmul.mubr.bf16.gmra.mrb[0].mxu0 %v1053
      %v1183 = vpop.f32.mrb[0].mxu0
      %v1184 = vadd.f32 %v1128, %v1183
      %v1185 = vpop.f32.mrb[0].mxu0
      %v1186 = vpop.f32.mrb[0].mxu0
      %v1187 = vpop.f32.mrb[0].mxu0
      %1188 = vdwg.mxu0
      %1189 = vmatprep.subr.bf16.mxu0 0
      %1190 = vmatpush1.bf16.msra.mxu0 %v502
      %1191 = vmatprep.subr.bf16.mxu0 0
      %1192 = vmatpush1.bf16.msra.mxu0 %v503
      %1193 = vmatprep.subr.bf16.mxu0 0
      %1194 = vmatpush1.bf16.msra.mxu0 %v504
      %1195 = vmatprep.subr.bf16.mxu0 0
      %1196 = vmatpush1.bf16.msra.mxu0 %v505
      %1197 = vmatprep.subr.bf16.mxu0 0
      %1198 = vmatpush1.bf16.msra.mxu0 0
      %1199 = vmatprep.subr.bf16.mxu0 0
      %1200 = vmatpush1.bf16.msra.mxu0 0
      %1201 = vmatprep.subr.bf16.mxu0 0
      %1202 = vmatpush1.bf16.msra.mxu0 0
      %1203 = vmatprep.subr.bf16.mxu0 0
      %1204 = vmatpush1.bf16.msra.mxu0 0
      %1205 = vmatprep.subr.bf16.mxu0 0
      %1206 = vmatpush1.bf16.msra.mxu0 0
      %1207 = vmatprep.subr.bf16.mxu0 0
      %1208 = vmatpush1.bf16.msra.mxu0 0
      %1209 = vmatprep.subr.bf16.mxu0 0
      %1210 = vmatpush1.bf16.msra.mxu0 0
      %1211 = vmatprep.subr.bf16.mxu0 0
      %1212 = vmatpush1.bf16.msra.mxu0 0
      %1213 = vmatprep.subr.bf16.mxu0 0
      %1214 = vmatpush1.bf16.msra.mxu0 0
      %1215 = vmatprep.subr.bf16.mxu0 0
      %1216 = vmatpush1.bf16.msra.mxu0 0
      %1217 = vmatprep.subr.bf16.mxu0 0
      %1218 = vmatpush1.bf16.msra.mxu0 0
      %1219 = vmatprep.subr.bf16.mxu0 0
      %1220 = vmatpush1.bf16.msra.mxu0 0
      %1221 = vmatprep.mubr.bf16.mxu0 0
      %1222 = vmatmul.mubr.bf16.gmra.mrb[0].mxu0 %v1069
      %v1223 = vpop.f32.mrb[0].mxu0
      %v1224 = vadd.f32 %v1168, %v1223
      %v1225 = vpop.f32.mrb[0].mxu0
      %v1226 = vpop.f32.mrb[0].mxu0
      %v1227 = vadd.f32 %v1171, %v1226
      %v1228 = vpop.f32.mrb[0].mxu0
      %1229 = vmatprep.mubr.bf16.mxu0 0
      %1230 = vmatmul.mubr.bf16.gmra.mrb[0].mxu0 %v1072
      %v1231 = vpop.f32.mrb[0].mxu0
      %v1232 = vadd.f32 %v1176, %v1231
      %v1233 = vpop.f32.mrb[0].mxu0
      %v1234 = vpop.f32.mrb[0].mxu0
      %v1235 = vadd.f32 %v1179, %v1234
      %v1236 = vpop.f32.mrb[0].mxu0
      %1237 = vmatprep.mubr.bf16.mxu0 0
      %1238 = vmatmul.mubr.bf16.gmra.mrb[0].mxu0 %v1075
      %v1239 = vpop.f32.mrb[0].mxu0
      %v1240 = vadd.f32 %v1184, %v1239
      %v1241 = vpop.f32.mrb[0].mxu0
      %v1242 = vpop.f32.mrb[0].mxu0
      %v1243 = vpop.f32.mrb[0].mxu0
      %1244 = vdwg.mxu0
      %v1245 = vmax.f32 %v980, %v1224
      %v1246 = vmax.f32 %v981, %v1227
      %v1247 = vmax.f32 %v982, %v1232
      %v1248 = vmax.f32 %v983, %v1235
      %v1249 = vmax.f32 %v984, %v1240
      %s1250 = scalar_lea.vmem %s165, 300
      %v1251 = vld [vmem:[%s1250] sm:$0xff]
      %v1252 = vld [vmem:[%s1250 + $0x8] sm:$0xff]
      %v1253 = vld [vmem:[%s1250 + $0x10] sm:$0xf]
      %v1254 = vld [vmem:[%s1250 + $0x14] sm:$0xff]
      %v1255 = vld [vmem:[%s1250 + $0x1c] sm:$0xff]
      %v1256 = vld [vmem:[%s1250 + $0x24] sm:$0xf]
      %v1257 = vld [vmem:[%s1250 + $0x28] sm:$0xff]
      %v1258 = vld [vmem:[%s1250 + $0x30] sm:$0xff]
      %v1259 = vld [vmem:[%s1250 + $0x38] sm:$0xf]
      %v1260 = vld [vmem:[%s1250 + $0x3c] sm:$0xff]
      %v1261 = vld [vmem:[%s1250 + $0x44] sm:$0xff]
      %v1262 = vld [vmem:[%s1250 + $0x4c] sm:$0xf]
      %v1263 = vld [vmem:[%s1250 + $0x50] sm:$0x33]
      %v1264 = vld [vmem:[%s1250 + $0x58] sm:$0x33]
      %v1265 = vld [vmem:[%s1250 + $0x60] sm:$0x3]
      %v1281 = vunpack.c.l.b16 %v1251
      %v1282 = vunpack.c.h.b16 %v1251
      %v1283 = vunpack.c.l.b16 %v1252
      %v1284 = vunpack.c.h.b16 %v1252
      %v1285 = vunpack.c.l.b16 %v1253
      %v1286 = vunpack.c.l.b16 %v1254
      %v1287 = vunpack.c.h.b16 %v1254
      %v1288 = vunpack.c.l.b16 %v1255
      %v1289 = vunpack.c.h.b16 %v1255
      %v1290 = vunpack.c.l.b16 %v1256
      %v1291 = vunpack.c.l.b16 %v1257
      %v1292 = vunpack.c.h.b16 %v1257
      %v1293 = vunpack.c.l.b16 %v1258
      %v1294 = vunpack.c.h.b16 %v1258
      %v1295 = vunpack.c.l.b16 %v1259
      %v1296 = vunpack.c.l.b16 %v1260
      %v1297 = vunpack.c.h.b16 %v1260
      %v1298 = vunpack.c.l.b16 %v1261
      %v1299 = vunpack.c.h.b16 %v1261
      %v1300 = vunpack.c.l.b16 %v1262
      %v1301 = vunpack.c.l.b16 %v1263
      %v1302 = vunpack.c.h.b16 %v1263
      %v1303 = vunpack.c.l.b16 %v1264
      %v1304 = vunpack.c.h.b16 %v1264
      %v1305 = vunpack.c.l.b16 %v1265
      %v1306 = vpack.c.b16 %v1286, %v1281
      %v1307 = vpack.c.b16 %v1287, %v1282
      %v1308 = vpack.c.b16 %v1288, %v1283
      %v1309 = vpack.c.b16 %v1289, %v1284
      %v1310 = vpack.c.b16 %v1290, %v1285
      %v1311 = vpack.c.b16 %v1296, %v1291
      %v1312 = vpack.c.b16 %v1297, %v1292
      %v1313 = vpack.c.b16 %v1298, %v1293
      %v1314 = vpack.c.b16 %v1299, %v1294
      %v1315 = vpack.c.b16 %v1300, %v1295
      %v1316 = vpack.c.b16 %v1301, %v1301
      %v1317 = vpack.c.b16 %v1302, %v1302
      %v1318 = vpack.c.b16 %v1303, %v1303
      %v1319 = vpack.c.b16 %v1304, %v1304
      %v1320 = vpack.c.b16 %v1305, %v1305
      %v1334 = vsel %vm542, %v1310, 0
      %v1337 = vsel %vm542, %v1315, 0
      %v1340 = vsel %vm542, %v1320, 0
      %1342 = vmatprep.subr.bf16.mxu0 0
      %1343 = vmatpush1.bf16.msra.mxu0 %v470
      %1344 = vmatprep.subr.bf16.mxu0 0
      %1345 = vmatpush1.bf16.msra.mxu0 %v471
      %1346 = vmatprep.subr.bf16.mxu0 0
      %1347 = vmatpush1.bf16.msra.mxu0 %v472
      %1348 = vmatprep.subr.bf16.mxu0 0
      %1349 = vmatpush1.bf16.msra.mxu0 %v473
      %1350 = vmatprep.subr.bf16.mxu0 0
      %1351 = vmatpush1.bf16.msra.mxu0 %v474
      %1352 = vmatprep.subr.bf16.mxu0 0
      %1353 = vmatpush1.bf16.msra.mxu0 %v475
      %1354 = vmatprep.subr.bf16.mxu0 0
      %1355 = vmatpush1.bf16.msra.mxu0 %v476
      %1356 = vmatprep.subr.bf16.mxu0 0
      %1357 = vmatpush1.bf16.msra.mxu0 %v477
      %1358 = vmatprep.subr.bf16.mxu0 0
      %1359 = vmatpush1.bf16.msra.mxu0 %v478
      %1360 = vmatprep.subr.bf16.mxu0 0
      %1361 = vmatpush1.bf16.msra.mxu0 %v479
      %1362 = vmatprep.subr.bf16.mxu0 0
      %1363 = vmatpush1.bf16.msra.mxu0 %v480
      %1364 = vmatprep.subr.bf16.mxu0 0
      %1365 = vmatpush1.bf16.msra.mxu0 %v481
      %1366 = vmatprep.subr.bf16.mxu0 0
      %1367 = vmatpush1.bf16.msra.mxu0 %v482
      %1368 = vmatprep.subr.bf16.mxu0 0
      %1369 = vmatpush1.bf16.msra.mxu0 %v483
      %1370 = vmatprep.subr.bf16.mxu0 0
      %1371 = vmatpush1.bf16.msra.mxu0 %v484
      %1372 = vmatprep.subr.bf16.mxu0 0
      %1373 = vmatpush1.bf16.msra.mxu0 %v485
      %1374 = vmatprep.mubr.bf16.mxu0 %v1307
      %1375 = vmatmul.mubr.bf16.gmra.mrb[0].mxu0 %v1306
      %v1376 = vpop.f32.mrb[0].mxu0
      %v1377 = vadd.f32 0.0, %v1376
      %v1378 = vpop.f32.mrb[0].mxu0
      %v1379 = vpop.f32.mrb[0].mxu0
      %v1380 = vadd.f32 0.0, %v1379
      %v1381 = vpop.f32.mrb[0].mxu0
      %1382 = vmatprep.mubr.bf16.mxu0 %v1312
      %1383 = vmatmul.mubr.bf16.gmra.mrb[0].mxu0 %v1311
      %v1384 = vpop.f32.mrb[0].mxu0
      %v1385 = vadd.f32 0.0, %v1384
      %v1386 = vpop.f32.mrb[0].mxu0
      %v1387 = vpop.f32.mrb[0].mxu0
      %v1388 = vadd.f32 0.0, %v1387
      %v1389 = vpop.f32.mrb[0].mxu0
      %1390 = vmatprep.mubr.bf16.mxu0 %v1317
      %1391 = vmatmul.mubr.bf16.gmra.mrb[0].mxu0 %v1316
      %v1392 = vpop.f32.mrb[0].mxu0
      %v1393 = vadd.f32 0.0, %v1392
      %v1394 = vpop.f32.mrb[0].mxu0
      %v1395 = vpop.f32.mrb[0].mxu0
      %v1396 = vpop.f32.mrb[0].mxu0
      %1397 = vdwg.mxu0
      %1398 = vmatprep.subr.bf16.mxu0 0
      %1399 = vmatpush1.bf16.msra.mxu0 %v486
      %1400 = vmatprep.subr.bf16.mxu0 0
      %1401 = vmatpush1.bf16.msra.mxu0 %v487
      %1402 = vmatprep.subr.bf16.mxu0 0
      %1403 = vmatpush1.bf16.msra.mxu0 %v488
      %1404 = vmatprep.subr.bf16.mxu0 0
      %1405 = vmatpush1.bf16.msra.mxu0 %v489
      %1406 = vmatprep.subr.bf16.mxu0 0
      %1407 = vmatpush1.bf16.msra.mxu0 %v490
      %1408 = vmatprep.subr.bf16.mxu0 0
      %1409 = vmatpush1.bf16.msra.mxu0 %v491
      %1410 = vmatprep.subr.bf16.mxu0 0
      %1411 = vmatpush1.bf16.msra.mxu0 %v492
      %1412 = vmatprep.subr.bf16.mxu0 0
      %1413 = vmatpush1.bf16.msra.mxu0 %v493
      %1414 = vmatprep.subr.bf16.mxu0 0
      %1415 = vmatpush1.bf16.msra.mxu0 %v494
      %1416 = vmatprep.subr.bf16.mxu0 0
      %1417 = vmatpush1.bf16.msra.mxu0 %v495
      %1418 = vmatprep.subr.bf16.mxu0 0
      %1419 = vmatpush1.bf16.msra.mxu0 %v496
      %1420 = vmatprep.subr.bf16.mxu0 0
      %1421 = vmatpush1.bf16.msra.mxu0 %v497
      %1422 = vmatprep.subr.bf16.mxu0 0
      %1423 = vmatpush1.bf16.msra.mxu0 %v498
      %1424 = vmatprep.subr.bf16.mxu0 0
      %1425 = vmatpush1.bf16.msra.mxu0 %v499
      %1426 = vmatprep.subr.bf16.mxu0 0
      %1427 = vmatpush1.bf16.msra.mxu0 %v500
      %1428 = vmatprep.subr.bf16.mxu0 0
      %1429 = vmatpush1.bf16.msra.mxu0 %v501
      %1430 = vmatprep.mubr.bf16.mxu0 %v1309
      %1431 = vmatmul.mubr.bf16.gmra.mrb[0].mxu0 %v1308
      %v1432 = vpop.f32.mrb[0].mxu0
      %v1433 = vadd.f32 %v1377, %v1432
      %v1434 = vpop.f32.mrb[0].mxu0
      %v1435 = vpop.f32.mrb[0].mxu0
      %v1436 = vadd.f32 %v1380, %v1435
      %v1437 = vpop.f32.mrb[0].mxu0
      %1438 = vmatprep.mubr.bf16.mxu0 %v1314
      %1439 = vmatmul.mubr.bf16.gmra.mrb[0].mxu0 %v1313
      %v1440 = vpop.f32.mrb[0].mxu0
      %v1441 = vadd.f32 %v1385, %v1440
      %v1442 = vpop.f32.mrb[0].mxu0
      %v1443 = vpop.f32.mrb[0].mxu0
      %v1444 = vadd.f32 %v1388, %v1443
      %v1445 = vpop.f32.mrb[0].mxu0
      %1446 = vmatprep.mubr.bf16.mxu0 %v1319
      %1447 = vmatmul.mubr.bf16.gmra.mrb[0].mxu0 %v1318
      %v1448 = vpop.f32.mrb[0].mxu0
      %v1449 = vadd.f32 %v1393, %v1448
      %v1450 = vpop.f32.mrb[0].mxu0
      %v1451 = vpop.f32.mrb[0].mxu0
      %v1452 = vpop.f32.mrb[0].mxu0
      %1453 = vdwg.mxu0
      %1454 = vmatprep.subr.bf16.mxu0 0
      %1455 = vmatpush1.bf16.msra.mxu0 %v502
      %1456 = vmatprep.subr.bf16.mxu0 0
      %1457 = vmatpush1.bf16.msra.mxu0 %v503
      %1458 = vmatprep.subr.bf16.mxu0 0
      %1459 = vmatpush1.bf16.msra.mxu0 %v504
      %1460 = vmatprep.subr.bf16.mxu0 0
      %1461 = vmatpush1.bf16.msra.mxu0 %v505
      %1462 = vmatprep.subr.bf16.mxu0 0
      %1463 = vmatpush1.bf16.msra.mxu0 0
      %1464 = vmatprep.subr.bf16.mxu0 0
      %1465 = vmatpush1.bf16.msra.mxu0 0
      %1466 = vmatprep.subr.bf16.mxu0 0
      %1467 = vmatpush1.bf16.msra.mxu0 0
      %1468 = vmatprep.subr.bf16.mxu0 0
      %1469 = vmatpush1.bf16.msra.mxu0 0
      %1470 = vmatprep.subr.bf16.mxu0 0
      %1471 = vmatpush1.bf16.msra.mxu0 0
      %1472 = vmatprep.subr.bf16.mxu0 0
      %1473 = vmatpush1.bf16.msra.mxu0 0
      %1474 = vmatprep.subr.bf16.mxu0 0
      %1475 = vmatpush1.bf16.msra.mxu0 0
      %1476 = vmatprep.subr.bf16.mxu0 0
      %1477 = vmatpush1.bf16.msra.mxu0 0
      %1478 = vmatprep.subr.bf16.mxu0 0
      %1479 = vmatpush1.bf16.msra.mxu0 0
      %1480 = vmatprep.subr.bf16.mxu0 0
      %1481 = vmatpush1.bf16.msra.mxu0 0
      %1482 = vmatprep.subr.bf16.mxu0 0
      %1483 = vmatpush1.bf16.msra.mxu0 0
      %1484 = vmatprep.subr.bf16.mxu0 0
      %1485 = vmatpush1.bf16.msra.mxu0 0
      %1486 = vmatprep.mubr.bf16.mxu0 0
      %1487 = vmatmul.mubr.bf16.gmra.mrb[0].mxu0 %v1334
      %v1488 = vpop.f32.mrb[0].mxu0
      %v1489 = vadd.f32 %v1433, %v1488
      %v1490 = vpop.f32.mrb[0].mxu0
      %v1491 = vpop.f32.mrb[0].mxu0
      %v1492 = vadd.f32 %v1436, %v1491
      %v1493 = vpop.f32.mrb[0].mxu0
      %1494 = vmatprep.mubr.bf16.mxu0 0
      %1495 = vmatmul.mubr.bf16.gmra.mrb[0].mxu0 %v1337
      %v1496 = vpop.f32.mrb[0].mxu0
      %v1497 = vadd.f32 %v1441, %v1496
      %v1498 = vpop.f32.mrb[0].mxu0
      %v1499 = vpop.f32.mrb[0].mxu0
      %v1500 = vadd.f32 %v1444, %v1499
      %v1501 = vpop.f32.mrb[0].mxu0
      %1502 = vmatprep.mubr.bf16.mxu0 0
      %1503 = vmatmul.mubr.bf16.gmra.mrb[0].mxu0 %v1340
      %v1504 = vpop.f32.mrb[0].mxu0
      %v1505 = vadd.f32 %v1449, %v1504
      %v1506 = vpop.f32.mrb[0].mxu0
      %v1507 = vpop.f32.mrb[0].mxu0
      %v1508 = vpop.f32.mrb[0].mxu0
      %1509 = vdwg.mxu0
      %v1510 = vmax.f32 %v1245, %v1489
      %v1511 = vmax.f32 %v1246, %v1492
      %v1512 = vmax.f32 %v1247, %v1497
      %v1513 = vmax.f32 %v1248, %v1500
      %v1514 = vmax.f32 %v1249, %v1505
      %v1515 = vld [vmem:[%s2] sm:$0x1]
      %v1517 = vlaneseq
      %v1518 = vshrl.u32 %v1517, 7
      %v1519 = vsub.s32 0, %v1518
      %v1520 = vrot.slane %v1515, %v1519
      %v1522 = vadd.f32 %v1510, %v1520
      %v1523 = vadd.f32 %v1511, %v1520
      %v1524 = vadd.f32 %v1512, %v1520
      %v1525 = vadd.f32 %v1513, %v1520
      %v1526 = vadd.f32 %v1514, %v1520
      %v1527 = vmax.f32 %v1522, 0.0
      %v1528 = vmax.f32 %v1523, 0.0
      %v1529 = vmax.f32 %v1524, 0.0
      %v1530 = vmax.f32 %v1525, 0.0
      %v1531 = vmax.f32 %v1526, 0.0
      %1532 = vst [vmem:[%s170] sm:$0xff] %v1527
      %1533 = vst [vmem:[%s170 + $0x8] sm:$0xff] %v1528
      %1534 = vst [vmem:[%s170 + $0x10] sm:$0xff] %v1529
      %1535 = vst [vmem:[%s170 + $0x18] sm:$0xff] %v1530
      %1536 = vst [vmem:[%s170 + $0x20] sm:$0xf] %v1531
      %p1537 = scmp.lt.s32.totalorder %s14, 1
      %s1538 = scalar_select %p1537, %s14, 1
      %s1539 = smul.addr %s1538, 5
      %s1540 = smul.addr %s1539, 8
      %s1541 = scalar_lea.vmem %s3, %s1540
      // Predicated region
      $region33: #{net_forward.4} parent=31 // pred_check
        %p1542 = pneg %p100
      $region34: #{net_forward.4} parent=31 // pred_check_branch
        %1544 = sbr.rel (%p1542) target = $region36
      $region35: #{net_forward.4} parent=31 // pred_region
        _
      $region36: #{net_forward.4} parent=31 // pred_fallthru
        _
    $region32: #{net_forward.4} parent=5 // pred_fallthru
      _
    %p1545 = scmp.le.s32.totalorder 2, %s9
    // Predicated region
    $region37: #{net_forward.4} parent=5 // pred_check
      %p1546 = pneg %p1545
    $region38: #{net_forward.4} parent=5 // pred_check_branch
      %1548 = sbr.rel (%p1546) target = $region40
    $region39: #{net_forward.4} parent=5 // pred_region
      %s1549 = ssub.s32 %s9, 2
      // Predicated region
      $region41: #{net_forward.4} parent=39 // pred_check
        %p1550 = pneg %p106
      $region42: #{net_forward.4} parent=39 // pred_check_branch
        %1552 = sbr.rel (%p1550) target = $region44
      $region43: #{net_forward.4} parent=39 // pred_region
        %p1553 = scmp.lt.s32.totalorder %s15, 1
        %s1554 = scalar_select %p1553, %s15, 1
        %s1555 = smul.addr %s1554, 5
        %s1556 = smul.addr %s1555, 8
        %s1557 = scalar_lea.vmem %s3, %s1556
      $region44: #{net_forward.4} parent=39 // pred_fallthru
        _
    $region40: #{net_forward.4} parent=5 // pred_fallthru
      _
  $region6: #{net_forward.4} parent=0 // loop_footer
    %s13 = sadd.s32 1, %s9
  $region7: #{net_forward.4} parent=0 // loop_footer_branch
    %8 = sbr.rel target = $region3
  $region8: #{net_forward.4} parent=0 // loop_exit
    _

// kernel: net_forward.5
$region0: #{net_forward.5}
  #allocation0 [shape = 'u32[]', space=smem, size = 0x4, offset = 0x4, fixed_abs, tag = 'smem constant byte address 0x4 - core index']
  #allocation1 [shape = 'u32[144,128]{1,0:T(1,128)}', space=vmem, size = 0x12000, scoped, tag = 'internal scratch']
  %s0 = inlined_call_operand.vmem [shape: bf16[2,4608], index: 0, kind: input, shape index: {}]
  %s1 = inlined_call_operand.vmem [shape: bf16[4608,120], index: 1, kind: input, shape index: {}]
  %s2 = inlined_call_operand.vmem [shape: f32[1,120], index: 2, kind: input, shape index: {}]
  %s3 = inlined_call_operand.vmem [shape: bf16[120,84], index: 3, kind: input, shape index: {}]
  %s4 = inlined_call_operand.vmem [shape: f32[1,84], index: 4, kind: input, shape index: {}]
  %s5 = inlined_call_operand.vmem [shape: bf16[84,10], index: 5, kind: input, shape index: {}]
  %s6 = inlined_call_operand.vmem [shape: f32[1,10], index: 6, kind: input, shape index: {}]
  %s7 = inlined_call_operand.hbm [shape: f32[2,10], index: 7, kind: output, shape index: {}]
  %s8 = sld [smem:[#allocation0]]
  $region38: #{net_forward.5} parent=0
    _
  %s10 = ssub.s32 1, %s8
  %s11 = scalar_select 0, %s10, %s8
  $region1: #{net_forward.5} parent=0
    #allocation2 [shape = 'u8[1024]{0}', space=vmem, size = 0x400, scoped, tag = 'output window, operand 0, single buffered']
    #allocation3 [shape = 's32[1]{0}', space=sflag, size = 0x4, scoped, tag = 'scoped memory for net_forward.5']
    %12 = vsyncpa [#allocation3], 0
    // Predicated region
    $region2: #{net_forward.5} parent=1 // pred_check
      _
    $region3: #{net_forward.5} parent=1 // pred_check_branch
      %14 = sbr.rel (0) target = $region5
    $region4: #{net_forward.5} parent=1 // pred_region
      _
    $region5: #{net_forward.5} parent=1 // pred_fallthru
      _
    // Predicated region
    $region6: #{net_forward.5} parent=1 // pred_check
      _
    $region7: #{net_forward.5} parent=1 // pred_check_branch
      %16 = sbr.rel (0) target = $region9
    $region8: #{net_forward.5} parent=1 // pred_region
      _
    $region9: #{net_forward.5} parent=1 // pred_fallthru
      _
    // Predicated region
    $region10: #{net_forward.5} parent=1 // pred_check
      _
    $region11: #{net_forward.5} parent=1 // pred_check_branch
      %18 = sbr.rel (0) target = $region13
    $region12: #{net_forward.5} parent=1 // pred_region
      _
    $region13: #{net_forward.5} parent=1 // pred_fallthru
      _
    // Predicated region
    $region14: #{net_forward.5} parent=1 // pred_check
      _
    $region15: #{net_forward.5} parent=1 // pred_check_branch
      %20 = sbr.rel (0) target = $region17
    $region16: #{net_forward.5} parent=1 // pred_region
      _
    $region17: #{net_forward.5} parent=1 // pred_fallthru
      _
    // Predicated region
    $region18: #{net_forward.5} parent=1 // pred_check
      _
    $region19: #{net_forward.5} parent=1 // pred_check_branch
      %22 = sbr.rel (0) target = $region21
    $region20: #{net_forward.5} parent=1 // pred_region
      _
    $region21: #{net_forward.5} parent=1 // pred_fallthru
      _
    // Predicated region
    $region22: #{net_forward.5} parent=1 // pred_check
      _
    $region23: #{net_forward.5} parent=1 // pred_check_branch
      %24 = sbr.rel (0) target = $region25
    $region24: #{net_forward.5} parent=1 // pred_region
      _
    $region25: #{net_forward.5} parent=1 // pred_fallthru
      _
    // Predicated region
    $region26: #{net_forward.5} parent=1 // pred_check
      _
    $region27: #{net_forward.5} parent=1 // pred_check_branch
      %26 = sbr.rel (0) target = $region29
    $region28: #{net_forward.5} parent=1 // pred_region
      _
    $region29: #{net_forward.5} parent=1 // pred_fallthru
      _
    %v28 = vld [vmem:[%s0] sm:$0xff]
    %v29 = vld [vmem:[%s0 + $0x8] sm:$0xff]
    %v30 = vld [vmem:[%s0 + $0x10] sm:$0xff]
    %v31 = vld [vmem:[%s0 + $0x18] sm:$0xff]
    %v32 = vld [vmem:[%s0 + $0x20] sm:$0xf]
    %v33 = vld [vmem:[%s1] sm:$0xf]
    %v34 = vld [vmem:[%s1 + $0x4] sm:$0xf]
    %v35 = vld [vmem:[%s1 + $0x8] sm:$0xf]
    %v36 = vld [vmem:[%s1 + $0xc] sm:$0xf]
    %v37 = vld [vmem:[%s1 + $0x10] sm:$0xf]
    %v38 = vld [vmem:[%s1 + $0x14] sm:$0xf]
    %v39 = vld [vmem:[%s1 + $0x18] sm:$0xf]
    %v40 = vld [vmem:[%s1 + $0x1c] sm:$0xf]
    %v41 = vld [vmem:[%s1 + $0x20] sm:$0xf]
    %v42 = vld [vmem:[%s1 + $0x24] sm:$0xf]
    %v43 = vld [vmem:[%s1 + $0x28] sm:$0xf]
    %v44 = vld [vmem:[%s1 + $0x2c] sm:$0xf]
    %v45 = vld [vmem:[%s1 + $0x30] sm:$0xf]
    %v46 = vld [vmem:[%s1 + $0x34] sm:$0xf]
    %v47 = vld [vmem:[%s1 + $0x38] sm:$0xf]
    %v48 = vld [vmem:[%s1 + $0x3c] sm:$0xf]
    %v49 = vld [vmem:[%s1 + $0x40] sm:$0xf]
    %v50 = vld [vmem:[%s1 + $0x44] sm:$0xf]
    %v51 = vld [vmem:[%s1 + $0x48] sm:$0xf]
    %v52 = vld [vmem:[%s1 + $0x4c] sm:$0xf]
    %v53 = vld [vmem:[%s1 + $0x50] sm:$0xf]
    %v54 = vld [vmem:[%s1 + $0x54] sm:$0xf]
    %v55 = vld [vmem:[%s1 + $0x58] sm:$0xf]
    %v56 = vld [vmem:[%s1 + $0x5c] sm:$0xf]
    %v57 = vld [vmem:[%s1 + $0x60] sm:$0xf]
    %v58 = vld [vmem:[%s1 + $0x64] sm:$0xf]
    %v59 = vld [vmem:[%s1 + $0x68] sm:$0xf]
    %v60 = vld [vmem:[%s1 + $0x6c] sm:$0xf]
    %v61 = vld [vmem:[%s1 + $0x70] sm:$0xf]
    %v62 = vld [vmem:[%s1 + $0x74] sm:$0xf]
    %v63 = vld [vmem:[%s1 + $0x78] sm:$0xf]
    %v64 = vld [vmem:[%s1 + $0x7c] sm:$0xf]
    %v65 = vld [vmem:[%s1 + $0x80] sm:$0xf]
    %v66 = vld [vmem:[%s1 + $0x84] sm:$0xf]
    %v67 = vld [vmem:[%s1 + $0x88] sm:$0xf]
    %v68 = vld [vmem:[%s1 + $0x8c] sm:$0xf]
    %v69 = vld [vmem:[%s1 + $0x90] sm:$0xf]
    %v70 = vld [vmem:[%s1 + $0x94] sm:$0xf]
    %v71 = vld [vmem:[%s1 + $0x98] sm:$0xf]
    %v72 = vld [vmem:[%s1 + $0x9c] sm:$0xf]
    %v73 = vld [vmem:[%s1 + $0xa0] sm:$0xf]
    %v74 = vld [vmem:[%s1 + $0xa4] sm:$0xf]
    %v75 = vld [vmem:[%s1 + $0xa8] sm:$0xf]
    %v76 = vld [vmem:[%s1 + $0xac] sm:$0xf]
    %v77 = vld [vmem:[%s1 + $0xb0] sm:$0xf]
    %v78 = vld [vmem:[%s1 + $0xb4] sm:$0xf]
    %v79 = vld [vmem:[%s1 + $0xb8] sm:$0xf]
    %v80 = vld [vmem:[%s1 + $0xbc] sm:$0xf]
    %v81 = vld [vmem:[%s1 + $0xc0] sm:$0xf]
    %v82 = vld [vmem:[%s1 + $0xc4] sm:$0xf]
    %v83 = vld [vmem:[%s1 + $0xc8] sm:$0xf]
    %v84 = vld [vmem:[%s1 + $0xcc] sm:$0xf]
    %v85 = vld [vmem:[%s1 + $0xd0] sm:$0xf]
    %v86 = vld [vmem:[%s1 + $0xd4] sm:$0xf]
    %v87 = vld [vmem:[%s1 + $0xd8] sm:$0xf]
    %v88 = vld [vmem:[%s1 + $0xdc] sm:$0xf]
    %v89 = vld [vmem:[%s1 + $0xe0] sm:$0xf]
    %v90 = vld [vmem:[%s1 + $0xe4] sm:$0xf]
    %v91 = vld [vmem:[%s1 + $0xe8] sm:$0xf]
    %v92 = vld [vmem:[%s1 + $0xec] sm:$0xf]
    %v93 = vld [vmem:[%s1 + $0xf0] sm:$0xf]
    %v94 = vld [vmem:[%s1 + $0xf4] sm:$0xf]
    %v95 = vld [vmem:[%s1 + $0xf8] sm:$0xf]
    %v96 = vld [vmem:[%s1 + $0xfc] sm:$0xf]
    %v97 = vld [vmem:[%s1 + $0x100] sm:$0xf]
    %v98 = vld [vmem:[%s1 + $0x104] sm:$0xf]
    %v99 = vld [vmem:[%s1 + $0x108] sm:$0xf]
    %v100 = vld [vmem:[%s1 + $0x10c] sm:$0xf]
    %v101 = vld [vmem:[%s1 + $0x110] sm:$0xf]
    %v102 = vld [vmem:[%s1 + $0x114] sm:$0xf]
    %v103 = vld [vmem:[%s1 + $0x118] sm:$0xf]
    %v104 = vld [vmem:[%s1 + $0x11c] sm:$0xf]
    %v105 = vld [vmem:[%s1 + $0x120] sm:$0xf]
    %v106 = vld [vmem:[%s1 + $0x124] sm:$0xf]
    %v107 = vld [vmem:[%s1 + $0x128] sm:$0xf]
    %v108 = vld [vmem:[%s1 + $0x12c] sm:$0xf]
    %v109 = vld [vmem:[%s1 + $0x130] sm:$0xf]
    %v110 = vld [vmem:[%s1 + $0x134] sm:$0xf]
    %v111 = vld [vmem:[%s1 + $0x138] sm:$0xf]
    %v112 = vld [vmem:[%s1 + $0x13c] sm:$0xf]
    %v113 = vld [vmem:[%s1 + $0x140] sm:$0xf]
    %v114 = vld [vmem:[%s1 + $0x144] sm:$0xf]
    %v115 = vld [vmem:[%s1 + $0x148] sm:$0xf]
    %v116 = vld [vmem:[%s1 + $0x14c] sm:$0xf]
    %v117 = vld [vmem:[%s1 + $0x150] sm:$0xf]
    %v118 = vld [vmem:[%s1 + $0x154] sm:$0xf]
    %v119 = vld [vmem:[%s1 + $0x158] sm:$0xf]
    %v120 = vld [vmem:[%s1 + $0x15c] sm:$0xf]
    %v121 = vld [vmem:[%s1 + $0x160] sm:$0xf]
    %v122 = vld [vmem:[%s1 + $0x164] sm:$0xf]
    %v123 = vld [vmem:[%s1 + $0x168] sm:$0xf]
    %v124 = vld [vmem:[%s1 + $0x16c] sm:$0xf]
    %v125 = vld [vmem:[%s1 + $0x170] sm:$0xf]
    %v126 = vld [vmem:[%s1 + $0x174] sm:$0xf]
    %v127 = vld [vmem:[%s1 + $0x178] sm:$0xf]
    %v128 = vld [vmem:[%s1 + $0x17c] sm:$0xf]
    %v129 = vld [vmem:[%s1 + $0x180] sm:$0xf]
    %v130 = vld [vmem:[%s1 + $0x184] sm:$0xf]
    %v131 = vld [vmem:[%s1 + $0x188] sm:$0xf]
    %v132 = vld [vmem:[%s1 + $0x18c] sm:$0xf]
    %v133 = vld [vmem:[%s1 + $0x190] sm:$0xf]
    %v134 = vld [vmem:[%s1 + $0x194] sm:$0xf]
    %v135 = vld [vmem:[%s1 + $0x198] sm:$0xf]
    %v136 = vld [vmem:[%s1 + $0x19c] sm:$0xf]
    %v137 = vld [vmem:[%s1 + $0x1a0] sm:$0xf]
    %v138 = vld [vmem:[%s1 + $0x1a4] sm:$0xf]
    %v139 = vld [vmem:[%s1 + $0x1a8] sm:$0xf]
    %v140 = vld [vmem:[%s1 + $0x1ac] sm:$0xf]
    %v141 = vld [vmem:[%s1 + $0x1b0] sm:$0xf]
    %v142 = vld [vmem:[%s1 + $0x1b4] sm:$0xf]
    %v143 = vld [vmem:[%s1 + $0x1b8] sm:$0xf]
    %v144 = vld [vmem:[%s1 + $0x1bc] sm:$0xf]
    %v145 = vld [vmem:[%s1 + $0x1c0] sm:$0xf]
    %v146 = vld [vmem:[%s1 + $0x1c4] sm:$0xf]
    %v147 = vld [vmem:[%s1 + $0x1c8] sm:$0xf]
    %v148 = vld [vmem:[%s1 + $0x1cc] sm:$0xf]
    %v149 = vld [vmem:[%s1 + $0x1d0] sm:$0xf]
    %v150 = vld [vmem:[%s1 + $0x1d4] sm:$0xf]
    %v151 = vld [vmem:[%s1 + $0x1d8] sm:$0xf]
    %v152 = vld [vmem:[%s1 + $0x1dc] sm:$0xf]
    %v153 = vld [vmem:[%s1 + $0x1e0] sm:$0xf]
    %v154 = vld [vmem:[%s1 + $0x1e4] sm:$0xf]
    %v155 = vld [vmem:[%s1 + $0x1e8] sm:$0xf]
    %v156 = vld [vmem:[%s1 + $0x1ec] sm:$0xf]
    %v157 = vld [vmem:[%s1 + $0x1f0] sm:$0xf]
    %v158 = vld [vmem:[%s1 + $0x1f4] sm:$0xf]
    %v159 = vld [vmem:[%s1 + $0x1f8] sm:$0xf]
    %v160 = vld [vmem:[%s1 + $0x1fc] sm:$0xf]
    %v161 = vld [vmem:[%s1 + $0x200] sm:$0xf]
    %v162 = vld [vmem:[%s1 + $0x204] sm:$0xf]
    %v163 = vld [vmem:[%s1 + $0x208] sm:$0xf]
    %v164 = vld [vmem:[%s1 + $0x20c] sm:$0xf]
    %v165 = vld [vmem:[%s1 + $0x210] sm:$0xf]
    %v166 = vld [vmem:[%s1 + $0x214] sm:$0xf]
    %v167 = vld [vmem:[%s1 + $0x218] sm:$0xf]
    %v168 = vld [vmem:[%s1 + $0x21c] sm:$0xf]
    %v169 = vld [vmem:[%s1 + $0x220] sm:$0xf]
    %v170 = vld [vmem:[%s1 + $0x224] sm:$0xf]
    %v171 = vld [vmem:[%s1 + $0x228] sm:$0xf]
    %v172 = vld [vmem:[%s1 + $0x22c] sm:$0xf]
    %v173 = vld [vmem:[%s1 + $0x230] sm:$0xf]
    %v174 = vld [vmem:[%s1 + $0x234] sm:$0xf]
    %v175 = vld [vmem:[%s1 + $0x238] sm:$0xf]
    %v176 = vld [vmem:[%s1 + $0x23c] sm:$0xf]
    %v177 = vld [vmem:[%s1 + $0x240] sm:$0xf]
    %v178 = vld [vmem:[%s1 + $0x244] sm:$0xf]
    %v179 = vld [vmem:[%s1 + $0x248] sm:$0xf]
    %v180 = vld [vmem:[%s1 + $0x24c] sm:$0xf]
    %v181 = vld [vmem:[%s1 + $0x250] sm:$0xf]
    %v182 = vld [vmem:[%s1 + $0x254] sm:$0xf]
    %v183 = vld [vmem:[%s1 + $0x258] sm:$0xf]
    %v184 = vld [vmem:[%s1 + $0x25c] sm:$0xf]
    %v185 = vld [vmem:[%s1 + $0x260] sm:$0xf]
    %v186 = vld [vmem:[%s1 + $0x264] sm:$0xf]
    %v187 = vld [vmem:[%s1 + $0x268] sm:$0xf]
    %v188 = vld [vmem:[%s1 + $0x26c] sm:$0xf]
    %v189 = vld [vmem:[%s1 + $0x270] sm:$0xf]
    %v190 = vld [vmem:[%s1 + $0x274] sm:$0xf]
    %v191 = vld [vmem:[%s1 + $0x278] sm:$0xf]
    %v192 = vld [vmem:[%s1 + $0x27c] sm:$0xf]
    %v193 = vld [vmem:[%s1 + $0x280] sm:$0xf]
    %v194 = vld [vmem:[%s1 + $0x284] sm:$0xf]
    %v195 = vld [vmem:[%s1 + $0x288] sm:$0xf]
    %v196 = vld [vmem:[%s1 + $0x28c] sm:$0xf]
    %v197 = vld [vmem:[%s1 + $0x290] sm:$0xf]
    %v198 = vld [vmem:[%s1 + $0x294] sm:$0xf]
    %v199 = vld [vmem:[%s1 + $0x298] sm:$0xf]
    %v200 = vld [vmem:[%s1 + $0x29c] sm:$0xf]
    %v201 = vld [vmem:[%s1 + $0x2a0] sm:$0xf]
    %v202 = vld [vmem:[%s1 + $0x2a4] sm:$0xf]
    %v203 = vld [vmem:[%s1 + $0x2a8] sm:$0xf]
    %v204 = vld [vmem:[%s1 + $0x2ac] sm:$0xf]
    %v205 = vld [vmem:[%s1 + $0x2b0] sm:$0xf]
    %v206 = vld [vmem:[%s1 + $0x2b4] sm:$0xf]
    %v207 = vld [vmem:[%s1 + $0x2b8] sm:$0xf]
    %v208 = vld [vmem:[%s1 + $0x2bc] sm:$0xf]
    %v209 = vld [vmem:[%s1 + $0x2c0] sm:$0xf]
    %v210 = vld [vmem:[%s1 + $0x2c4] sm:$0xf]
    %v211 = vld [vmem:[%s1 + $0x2c8] sm:$0xf]
    %v212 = vld [vmem:[%s1 + $0x2cc] sm:$0xf]
    %v213 = vld [vmem:[%s1 + $0x2d0] sm:$0xf]
    %v214 = vld [vmem:[%s1 + $0x2d4] sm:$0xf]
    %v215 = vld [vmem:[%s1 + $0x2d8] sm:$0xf]
    %v216 = vld [vmem:[%s1 + $0x2dc] sm:$0xf]
    %v217 = vld [vmem:[%s1 + $0x2e0] sm:$0xf]
    %v218 = vld [vmem:[%s1 + $0x2e4] sm:$0xf]
    %v219 = vld [vmem:[%s1 + $0x2e8] sm:$0xf]
    %v220 = vld [vmem:[%s1 + $0x2ec] sm:$0xf]
    %v221 = vld [vmem:[%s1 + $0x2f0] sm:$0xf]
    %v222 = vld [vmem:[%s1 + $0x2f4] sm:$0xf]
    %v223 = vld [vmem:[%s1 + $0x2f8] sm:$0xf]
    %v224 = vld [vmem:[%s1 + $0x2fc] sm:$0xf]
    %v225 = vld [vmem:[%s1 + $0x300] sm:$0xf]
    %v226 = vld [vmem:[%s1 + $0x304] sm:$0xf]
    %v227 = vld [vmem:[%s1 + $0x308] sm:$0xf]
    %v228 = vld [vmem:[%s1 + $0x30c] sm:$0xf]
    %v229 = vld [vmem:[%s1 + $0x310] sm:$0xf]
    %v230 = vld [vmem:[%s1 + $0x314] sm:$0xf]
    %v231 = vld [vmem:[%s1 + $0x318] sm:$0xf]
    %v232 = vld [vmem:[%s1 + $0x31c] sm:$0xf]
    %v233 = vld [vmem:[%s1 + $0x320] sm:$0xf]
    %v234 = vld [vmem:[%s1 + $0x324] sm:$0xf]
    %v235 = vld [vmem:[%s1 + $0x328] sm:$0xf]
    %v236 = vld [vmem:[%s1 + $0x32c] sm:$0xf]
    %v237 = vld [vmem:[%s1 + $0x330] sm:$0xf]
    %v238 = vld [vmem:[%s1 + $0x334] sm:$0xf]
    %v239 = vld [vmem:[%s1 + $0x338] sm:$0xf]
    %v240 = vld [vmem:[%s1 + $0x33c] sm:$0xf]
    %v241 = vld [vmem:[%s1 + $0x340] sm:$0xf]
    %v242 = vld [vmem:[%s1 + $0x344] sm:$0xf]
    %v243 = vld [vmem:[%s1 + $0x348] sm:$0xf]
    %v244 = vld [vmem:[%s1 + $0x34c] sm:$0xf]
    %v245 = vld [vmem:[%s1 + $0x350] sm:$0xf]
    %v246 = vld [vmem:[%s1 + $0x354] sm:$0xf]
    %v247 = vld [vmem:[%s1 + $0x358] sm:$0xf]
    %v248 = vld [vmem:[%s1 + $0x35c] sm:$0xf]
    %v249 = vld [vmem:[%s1 + $0x360] sm:$0xf]
    %v250 = vld [vmem:[%s1 + $0x364] sm:$0xf]
    %v251 = vld [vmem:[%s1 + $0x368] sm:$0xf]
    %v252 = vld [vmem:[%s1 + $0x36c] sm:$0xf]
    %v253 = vld [vmem:[%s1 + $0x370] sm:$0xf]
    %v254 = vld [vmem:[%s1 + $0x374] sm:$0xf]
    %v255 = vld [vmem:[%s1 + $0x378] sm:$0xf]
    %v256 = vld [vmem:[%s1 + $0x37c] sm:$0xf]
    %v257 = vld [vmem:[%s1 + $0x380] sm:$0xf]
    %v258 = vld [vmem:[%s1 + $0x384] sm:$0xf]
    %v259 = vld [vmem:[%s1 + $0x388] sm:$0xf]
    %v260 = vld [vmem:[%s1 + $0x38c] sm:$0xf]
    %v261 = vld [vmem:[%s1 + $0x390] sm:$0xf]
    %v262 = vld [vmem:[%s1 + $0x394] sm:$0xf]
    %v263 = vld [vmem:[%s1 + $0x398] sm:$0xf]
    %v264 = vld [vmem:[%s1 + $0x39c] sm:$0xf]
    %v265 = vld [vmem:[%s1 + $0x3a0] sm:$0xf]
    %v266 = vld [vmem:[%s1 + $0x3a4] sm:$0xf]
    %v267 = vld [vmem:[%s1 + $0x3a8] sm:$0xf]
    %v268 = vld [vmem:[%s1 + $0x3ac] sm:$0xf]
    %v269 = vld [vmem:[%s1 + $0x3b0] sm:$0xf]
    %v270 = vld [vmem:[%s1 + $0x3b4] sm:$0xf]
    %v271 = vld [vmem:[%s1 + $0x3b8] sm:$0xf]
    %v272 = vld [vmem:[%s1 + $0x3bc] sm:$0xf]
    %v273 = vld [vmem:[%s1 + $0x3c0] sm:$0xf]
    %v274 = vld [vmem:[%s1 + $0x3c4] sm:$0xf]
    %v275 = vld [vmem:[%s1 + $0x3c8] sm:$0xf]
    %v276 = vld [vmem:[%s1 + $0x3cc] sm:$0xf]
    %v277 = vld [vmem:[%s1 + $0x3d0] sm:$0xf]
    %v278 = vld [vmem:[%s1 + $0x3d4] sm:$0xf]
    %v279 = vld [vmem:[%s1 + $0x3d8] sm:$0xf]
    %v280 = vld [vmem:[%s1 + $0x3dc] sm:$0xf]
    %v281 = vld [vmem:[%s1 + $0x3e0] sm:$0xf]
    %v282 = vld [vmem:[%s1 + $0x3e4] sm:$0xf]
    %v283 = vld [vmem:[%s1 + $0x3e8] sm:$0xf]
    %v284 = vld [vmem:[%s1 + $0x3ec] sm:$0xf]
    %v285 = vld [vmem:[%s1 + $0x3f0] sm:$0xf]
    %v286 = vld [vmem:[%s1 + $0x3f4] sm:$0xf]
    %v287 = vld [vmem:[%s1 + $0x3f8] sm:$0xf]
    %v288 = vld [vmem:[%s1 + $0x3fc] sm:$0xf]
    %v289 = vld [vmem:[%s1 + $0x400] sm:$0xf]
    %v290 = vld [vmem:[%s1 + $0x404] sm:$0xf]
    %v291 = vld [vmem:[%s1 + $0x408] sm:$0xf]
    %v292 = vld [vmem:[%s1 + $0x40c] sm:$0xf]
    %v293 = vld [vmem:[%s1 + $0x410] sm:$0xf]
    %v294 = vld [vmem:[%s1 + $0x414] sm:$0xf]
    %v295 = vld [vmem:[%s1 + $0x418] sm:$0xf]
    %v296 = vld [vmem:[%s1 + $0x41c] sm:$0xf]
    %v297 = vld [vmem:[%s1 + $0x420] sm:$0xf]
    %v298 = vld [vmem:[%s1 + $0x424] sm:$0xf]
    %v299 = vld [vmem:[%s1 + $0x428] sm:$0xf]
    %v300 = vld [vmem:[%s1 + $0x42c] sm:$0xf]
    %v301 = vld [vmem:[%s1 + $0x430] sm:$0xf]
    %v302 = vld [vmem:[%s1 + $0x434] sm:$0xf]
    %v303 = vld [vmem:[%s1 + $0x438] sm:$0xf]
    %v304 = vld [vmem:[%s1 + $0x43c] sm:$0xf]
    %v305 = vld [vmem:[%s1 + $0x440] sm:$0xf]
    %v306 = vld [vmem:[%s1 + $0x444] sm:$0xf]
    %v307 = vld [vmem:[%s1 + $0x448] sm:$0xf]
    %v308 = vld [vmem:[%s1 + $0x44c] sm:$0xf]
    %v309 = vld [vmem:[%s1 + $0x450] sm:$0xf]
    %v310 = vld [vmem:[%s1 + $0x454] sm:$0xf]
    %v311 = vld [vmem:[%s1 + $0x458] sm:$0xf]
    %v312 = vld [vmem:[%s1 + $0x45c] sm:$0xf]
    %v313 = vld [vmem:[%s1 + $0x460] sm:$0xf]
    %v314 = vld [vmem:[%s1 + $0x464] sm:$0xf]
    %v315 = vld [vmem:[%s1 + $0x468] sm:$0xf]
    %v316 = vld [vmem:[%s1 + $0x46c] sm:$0xf]
    %v317 = vld [vmem:[%s1 + $0x470] sm:$0xf]
    %v318 = vld [vmem:[%s1 + $0x474] sm:$0xf]
    %v319 = vld [vmem:[%s1 + $0x478] sm:$0xf]
    %v320 = vld [vmem:[%s1 + $0x47c] sm:$0xf]
    %v321 = vld [vmem:[%s1 + $0x480] sm:$0xf]
    %v322 = vld [vmem:[%s1 + $0x484] sm:$0xf]
    %v323 = vld [vmem:[%s1 + $0x488] sm:$0xf]
    %v324 = vld [vmem:[%s1 + $0x48c] sm:$0xf]
    %v325 = vld [vmem:[%s1 + $0x490] sm:$0xf]
    %v326 = vld [vmem:[%s1 + $0x494] sm:$0xf]
    %v327 = vld [vmem:[%s1 + $0x498] sm:$0xf]
    %v328 = vld [vmem:[%s1 + $0x49c] sm:$0xf]
    %v329 = vld [vmem:[%s1 + $0x4a0] sm:$0xf]
    %v330 = vld [vmem:[%s1 + $0x4a4] sm:$0xf]
    %v331 = vld [vmem:[%s1 + $0x4a8] sm:$0xf]
    %v332 = vld [vmem:[%s1 + $0x4ac] sm:$0xf]
    %v333 = vld [vmem:[%s1 + $0x4b0] sm:$0xf]
    %v334 = vld [vmem:[%s1 + $0x4b4] sm:$0xf]
    %v335 = vld [vmem:[%s1 + $0x4b8] sm:$0xf]
    %v336 = vld [vmem:[%s1 + $0x4bc] sm:$0xf]
    %v337 = vld [vmem:[%s1 + $0x4c0] sm:$0xf]
    %v338 = vld [vmem:[%s1 + $0x4c4] sm:$0xf]
    %v339 = vld [vmem:[%s1 + $0x4c8] sm:$0xf]
    %v340 = vld [vmem:[%s1 + $0x4cc] sm:$0xf]
    %v341 = vld [vmem:[%s1 + $0x4d0] sm:$0xf]
    %v342 = vld [vmem:[%s1 + $0x4d4] sm:$0xf]
    %v343 = vld [vmem:[%s1 + $0x4d8] sm:$0xf]
    %v344 = vld [vmem:[%s1 + $0x4dc] sm:$0xf]
    %v345 = vld [vmem:[%s1 + $0x4e0] sm:$0xf]
    %v346 = vld [vmem:[%s1 + $0x4e4] sm:$0xf]
    %v347 = vld [vmem:[%s1 + $0x4e8] sm:$0xf]
    %v348 = vld [vmem:[%s1 + $0x4ec] sm:$0xf]
    %v349 = vld [vmem:[%s1 + $0x4f0] sm:$0xf]
    %v350 = vld [vmem:[%s1 + $0x4f4] sm:$0xf]
    %v351 = vld [vmem:[%s1 + $0x4f8] sm:$0xf]
    %v352 = vld [vmem:[%s1 + $0x4fc] sm:$0xf]
    %v353 = vld [vmem:[%s1 + $0x500] sm:$0xf]
    %v354 = vld [vmem:[%s1 + $0x504] sm:$0xf]
    %v355 = vld [vmem:[%s1 + $0x508] sm:$0xf]
    %v356 = vld [vmem:[%s1 + $0x50c] sm:$0xf]
    %v357 = vld [vmem:[%s1 + $0x510] sm:$0xf]
    %v358 = vld [vmem:[%s1 + $0x514] sm:$0xf]
    %v359 = vld [vmem:[%s1 + $0x518] sm:$0xf]
    %v360 = vld [vmem:[%s1 + $0x51c] sm:$0xf]
    %v361 = vld [vmem:[%s1 + $0x520] sm:$0xf]
    %v362 = vld [vmem:[%s1 + $0x524] sm:$0xf]
    %v363 = vld [vmem:[%s1 + $0x528] sm:$0xf]
    %v364 = vld [vmem:[%s1 + $0x52c] sm:$0xf]
    %v365 = vld [vmem:[%s1 + $0x530] sm:$0xf]
    %v366 = vld [vmem:[%s1 + $0x534] sm:$0xf]
    %v367 = vld [vmem:[%s1 + $0x538] sm:$0xf]
    %v368 = vld [vmem:[%s1 + $0x53c] sm:$0xf]
    %v369 = vld [vmem:[%s1 + $0x540] sm:$0xf]
    %v370 = vld [vmem:[%s1 + $0x544] sm:$0xf]
    %v371 = vld [vmem:[%s1 + $0x548] sm:$0xf]
    %v372 = vld [vmem:[%s1 + $0x54c] sm:$0xf]
    %v373 = vld [vmem:[%s1 + $0x550] sm:$0xf]
    %v374 = vld [vmem:[%s1 + $0x554] sm:$0xf]
    %v375 = vld [vmem:[%s1 + $0x558] sm:$0xf]
    %v376 = vld [vmem:[%s1 + $0x55c] sm:$0xf]
    %v377 = vld [vmem:[%s1 + $0x560] sm:$0xf]
    %v378 = vld [vmem:[%s1 + $0x564] sm:$0xf]
    %v379 = vld [vmem:[%s1 + $0x568] sm:$0xf]
    %v380 = vld [vmem:[%s1 + $0x56c] sm:$0xf]
    %v381 = vld [vmem:[%s1 + $0x570] sm:$0xf]
    %v382 = vld [vmem:[%s1 + $0x574] sm:$0xf]
    %v383 = vld [vmem:[%s1 + $0x578] sm:$0xf]
    %v384 = vld [vmem:[%s1 + $0x57c] sm:$0xf]
    %v385 = vld [vmem:[%s1 + $0x580] sm:$0xf]
    %v386 = vld [vmem:[%s1 + $0x584] sm:$0xf]
    %v387 = vld [vmem:[%s1 + $0x588] sm:$0xf]
    %v388 = vld [vmem:[%s1 + $0x58c] sm:$0xf]
    %v389 = vld [vmem:[%s1 + $0x590] sm:$0xf]
    %v390 = vld [vmem:[%s1 + $0x594] sm:$0xf]
    %v391 = vld [vmem:[%s1 + $0x598] sm:$0xf]
    %v392 = vld [vmem:[%s1 + $0x59c] sm:$0xf]
    %v393 = vld [vmem:[%s1 + $0x5a0] sm:$0xf]
    %v394 = vld [vmem:[%s1 + $0x5a4] sm:$0xf]
    %v395 = vld [vmem:[%s1 + $0x5a8] sm:$0xf]
    %v396 = vld [vmem:[%s1 + $0x5ac] sm:$0xf]
    %v397 = vld [vmem:[%s1 + $0x5b0] sm:$0xf]
    %v398 = vld [vmem:[%s1 + $0x5b4] sm:$0xf]
    %v399 = vld [vmem:[%s1 + $0x5b8] sm:$0xf]
    %v400 = vld [vmem:[%s1 + $0x5bc] sm:$0xf]
    %v401 = vld [vmem:[%s1 + $0x5c0] sm:$0xf]
    %v402 = vld [vmem:[%s1 + $0x5c4] sm:$0xf]
    %v403 = vld [vmem:[%s1 + $0x5c8] sm:$0xf]
    %v404 = vld [vmem:[%s1 + $0x5cc] sm:$0xf]
    %v405 = vld [vmem:[%s1 + $0x5d0] sm:$0xf]
    %v406 = vld [vmem:[%s1 + $0x5d4] sm:$0xf]
    %v407 = vld [vmem:[%s1 + $0x5d8] sm:$0xf]
    %v408 = vld [vmem:[%s1 + $0x5dc] sm:$0xf]
    %v409 = vld [vmem:[%s1 + $0x5e0] sm:$0xf]
    %v410 = vld [vmem:[%s1 + $0x5e4] sm:$0xf]
    %v411 = vld [vmem:[%s1 + $0x5e8] sm:$0xf]
    %v412 = vld [vmem:[%s1 + $0x5ec] sm:$0xf]
    %v413 = vld [vmem:[%s1 + $0x5f0] sm:$0xf]
    %v414 = vld [vmem:[%s1 + $0x5f4] sm:$0xf]
    %v415 = vld [vmem:[%s1 + $0x5f8] sm:$0xf]
    %v416 = vld [vmem:[%s1 + $0x5fc] sm:$0xf]
    %v417 = vld [vmem:[%s1 + $0x600] sm:$0xf]
    %v418 = vld [vmem:[%s1 + $0x604] sm:$0xf]
    %v419 = vld [vmem:[%s1 + $0x608] sm:$0xf]
    %v420 = vld [vmem:[%s1 + $0x60c] sm:$0xf]
    %v421 = vld [vmem:[%s1 + $0x610] sm:$0xf]
    %v422 = vld [vmem:[%s1 + $0x614] sm:$0xf]
    %v423 = vld [vmem:[%s1 + $0x618] sm:$0xf]
    %v424 = vld [vmem:[%s1 + $0x61c] sm:$0xf]
    %v425 = vld [vmem:[%s1 + $0x620] sm:$0xf]
    %v426 = vld [vmem:[%s1 + $0x624] sm:$0xf]
    %v427 = vld [vmem:[%s1 + $0x628] sm:$0xf]
    %v428 = vld [vmem:[%s1 + $0x62c] sm:$0xf]
    %v429 = vld [vmem:[%s1 + $0x630] sm:$0xf]
    %v430 = vld [vmem:[%s1 + $0x634] sm:$0xf]
    %v431 = vld [vmem:[%s1 + $0x638] sm:$0xf]
    %v432 = vld [vmem:[%s1 + $0x63c] sm:$0xf]
    %v433 = vld [vmem:[%s1 + $0x640] sm:$0xf]
    %v434 = vld [vmem:[%s1 + $0x644] sm:$0xf]
    %v435 = vld [vmem:[%s1 + $0x648] sm:$0xf]
    %v436 = vld [vmem:[%s1 + $0x64c] sm:$0xf]
    %v437 = vld [vmem:[%s1 + $0x650] sm:$0xf]
    %v438 = vld [vmem:[%s1 + $0x654] sm:$0xf]
    %v439 = vld [vmem:[%s1 + $0x658] sm:$0xf]
    %v440 = vld [vmem:[%s1 + $0x65c] sm:$0xf]
    %v441 = vld [vmem:[%s1 + $0x660] sm:$0xf]
    %v442 = vld [vmem:[%s1 + $0x664] sm:$0xf]
    %v443 = vld [vmem:[%s1 + $0x668] sm:$0xf]
    %v444 = vld [vmem:[%s1 + $0x66c] sm:$0xf]
    %v445 = vld [vmem:[%s1 + $0x670] sm:$0xf]
    %v446 = vld [vmem:[%s1 + $0x674] sm:$0xf]
    %v447 = vld [vmem:[%s1 + $0x678] sm:$0xf]
    %v448 = vld [vmem:[%s1 + $0x67c] sm:$0xf]
    %v449 = vld [vmem:[%s1 + $0x680] sm:$0xf]
    %v450 = vld [vmem:[%s1 + $0x684] sm:$0xf]
    %v451 = vld [vmem:[%s1 + $0x688] sm:$0xf]
    %v452 = vld [vmem:[%s1 + $0x68c] sm:$0xf]
    %v453 = vld [vmem:[%s1 + $0x690] sm:$0xf]
    %v454 = vld [vmem:[%s1 + $0x694] sm:$0xf]
    %v455 = vld [vmem:[%s1 + $0x698] sm:$0xf]
    %v456 = vld [vmem:[%s1 + $0x69c] sm:$0xf]
    %v457 = vld [vmem:[%s1 + $0x6a0] sm:$0xf]
    %v458 = vld [vmem:[%s1 + $0x6a4] sm:$0xf]
    %v459 = vld [vmem:[%s1 + $0x6a8] sm:$0xf]
    %v460 = vld [vmem:[%s1 + $0x6ac] sm:$0xf]
    %v461 = vld [vmem:[%s1 + $0x6b0] sm:$0xf]
    %v462 = vld [vmem:[%s1 + $0x6b4] sm:$0xf]
    %v463 = vld [vmem:[%s1 + $0x6b8] sm:$0xf]
    %v464 = vld [vmem:[%s1 + $0x6bc] sm:$0xf]
    %v465 = vld [vmem:[%s1 + $0x6c0] sm:$0xf]
    %v466 = vld [vmem:[%s1 + $0x6c4] sm:$0xf]
    %v467 = vld [vmem:[%s1 + $0x6c8] sm:$0xf]
    %v468 = vld [vmem:[%s1 + $0x6cc] sm:$0xf]
    %v469 = vld [vmem:[%s1 + $0x6d0] sm:$0xf]
    %v470 = vld [vmem:[%s1 + $0x6d4] sm:$0xf]
    %v471 = vld [vmem:[%s1 + $0x6d8] sm:$0xf]
    %v472 = vld [vmem:[%s1 + $0x6dc] sm:$0xf]
    %v473 = vld [vmem:[%s1 + $0x6e0] sm:$0xf]
    %v474 = vld [vmem:[%s1 + $0x6e4] sm:$0xf]
    %v475 = vld [vmem:[%s1 + $0x6e8] sm:$0xf]
    %v476 = vld [vmem:[%s1 + $0x6ec] sm:$0xf]
    %v477 = vld [vmem:[%s1 + $0x6f0] sm:$0xf]
    %v478 = vld [vmem:[%s1 + $0x6f4] sm:$0xf]
    %v479 = vld [vmem:[%s1 + $0x6f8] sm:$0xf]
    %v480 = vld [vmem:[%s1 + $0x6fc] sm:$0xf]
    %v481 = vld [vmem:[%s1 + $0x700] sm:$0xf]
    %v482 = vld [vmem:[%s1 + $0x704] sm:$0xf]
    %v483 = vld [vmem:[%s1 + $0x708] sm:$0xf]
    %v484 = vld [vmem:[%s1 + $0x70c] sm:$0xf]
    %v485 = vld [vmem:[%s1 + $0x710] sm:$0xf]
    %v486 = vld [vmem:[%s1 + $0x714] sm:$0xf]
    %v487 = vld [vmem:[%s1 + $0x718] sm:$0xf]
    %v488 = vld [vmem:[%s1 + $0x71c] sm:$0xf]
    %v489 = vld [vmem:[%s1 + $0x720] sm:$0xf]
    %v490 = vld [vmem:[%s1 + $0x724] sm:$0xf]
    %v491 = vld [vmem:[%s1 + $0x728] sm:$0xf]
    %v492 = vld [vmem:[%s1 + $0x72c] sm:$0xf]
    %v493 = vld [vmem:[%s1 + $0x730] sm:$0xf]
    %v494 = vld [vmem:[%s1 + $0x734] sm:$0xf]
    %v495 = vld [vmem:[%s1 + $0x738] sm:$0xf]
    %v496 = vld [vmem:[%s1 + $0x73c] sm:$0xf]
    %v497 = vld [vmem:[%s1 + $0x740] sm:$0xf]
    %v498 = vld [vmem:[%s1 + $0x744] sm:$0xf]
    %v499 = vld [vmem:[%s1 + $0x748] sm:$0xf]
    %v500 = vld [vmem:[%s1 + $0x74c] sm:$0xf]
    %v501 = vld [vmem:[%s1 + $0x750] sm:$0xf]
    %v502 = vld [vmem:[%s1 + $0x754] sm:$0xf]
    %v503 = vld [vmem:[%s1 + $0x758] sm:$0xf]
    %v504 = vld [vmem:[%s1 + $0x75c] sm:$0xf]
    %v505 = vld [vmem:[%s1 + $0x760] sm:$0xf]
    %v506 = vld [vmem:[%s1 + $0x764] sm:$0xf]
    %v507 = vld [vmem:[%s1 + $0x768] sm:$0xf]
    %v508 = vld [vmem:[%s1 + $0x76c] sm:$0xf]
    %v509 = vld [vmem:[%s1 + $0x770] sm:$0xf]
    %v510 = vld [vmem:[%s1 + $0x774] sm:$0xf]
    %v511 = vld [vmem:[%s1 + $0x778] sm:$0xf]
    %v512 = vld [vmem:[%s1 + $0x77c] sm:$0xf]
    %v513 = vld [vmem:[%s1 + $0x780] sm:$0xf]
    %v514 = vld [vmem:[%s1 + $0x784] sm:$0xf]
    %v515 = vld [vmem:[%s1 + $0x788] sm:$0xf]
    %v516 = vld [vmem:[%s1 + $0x78c] sm:$0xf]
    %v517 = vld [vmem:[%s1 + $0x790] sm:$0xf]
    %v518 = vld [vmem:[%s1 + $0x794] sm:$0xf]
    %v519 = vld [vmem:[%s1 + $0x798] sm:$0xf]
    %v520 = vld [vmem:[%s1 + $0x79c] sm:$0xf]
    %v521 = vld [vmem:[%s1 + $0x7a0] sm:$0xf]
    %v522 = vld [vmem:[%s1 + $0x7a4] sm:$0xf]
    %v523 = vld [vmem:[%s1 + $0x7a8] sm:$0xf]
    %v524 = vld [vmem:[%s1 + $0x7ac] sm:$0xf]
    %v525 = vld [vmem:[%s1 + $0x7b0] sm:$0xf]
    %v526 = vld [vmem:[%s1 + $0x7b4] sm:$0xf]
    %v527 = vld [vmem:[%s1 + $0x7b8] sm:$0xf]
    %v528 = vld [vmem:[%s1 + $0x7bc] sm:$0xf]
    %v529 = vld [vmem:[%s1 + $0x7c0] sm:$0xf]
    %v530 = vld [vmem:[%s1 + $0x7c4] sm:$0xf]
    %v531 = vld [vmem:[%s1 + $0x7c8] sm:$0xf]
    %v532 = vld [vmem:[%s1 + $0x7cc] sm:$0xf]
    %v533 = vld [vmem:[%s1 + $0x7d0] sm:$0xf]
    %v534 = vld [vmem:[%s1 + $0x7d4] sm:$0xf]
    %v535 = vld [vmem:[%s1 + $0x7d8] sm:$0xf]
    %v536 = vld [vmem:[%s1 + $0x7dc] sm:$0xf]
    %v537 = vld [vmem:[%s1 + $0x7e0] sm:$0xf]
    %v538 = vld [vmem:[%s1 + $0x7e4] sm:$0xf]
    %v539 = vld [vmem:[%s1 + $0x7e8] sm:$0xf]
    %v540 = vld [vmem:[%s1 + $0x7ec] sm:$0xf]
    %v541 = vld [vmem:[%s1 + $0x7f0] sm:$0xf]
    %v542 = vld [vmem:[%s1 + $0x7f4] sm:$0xf]
    %v543 = vld [vmem:[%s1 + $0x7f8] sm:$0xf]
    %v544 = vld [vmem:[%s1 + $0x7fc] sm:$0xf]
    %v545 = vld [vmem:[%s1 + $0x800] sm:$0xf]
    %v546 = vld [vmem:[%s1 + $0x804] sm:$0xf]
    %v547 = vld [vmem:[%s1 + $0x808] sm:$0xf]
    %v548 = vld [vmem:[%s1 + $0x80c] sm:$0xf]
    %v549 = vld [vmem:[%s1 + $0x810] sm:$0xf]
    %v550 = vld [vmem:[%s1 + $0x814] sm:$0xf]
    %v551 = vld [vmem:[%s1 + $0x818] sm:$0xf]
    %v552 = vld [vmem:[%s1 + $0x81c] sm:$0xf]
    %v553 = vld [vmem:[%s1 + $0x820] sm:$0xf]
    %v554 = vld [vmem:[%s1 + $0x824] sm:$0xf]
    %v555 = vld [vmem:[%s1 + $0x828] sm:$0xf]
    %v556 = vld [vmem:[%s1 + $0x82c] sm:$0xf]
    %v557 = vld [vmem:[%s1 + $0x830] sm:$0xf]
    %v558 = vld [vmem:[%s1 + $0x834] sm:$0xf]
    %v559 = vld [vmem:[%s1 + $0x838] sm:$0xf]
    %v560 = vld [vmem:[%s1 + $0x83c] sm:$0xf]
    %v561 = vld [vmem:[%s1 + $0x840] sm:$0xf]
    %v562 = vld [vmem:[%s1 + $0x844] sm:$0xf]
    %v563 = vld [vmem:[%s1 + $0x848] sm:$0xf]
    %v564 = vld [vmem:[%s1 + $0x84c] sm:$0xf]
    %v565 = vld [vmem:[%s1 + $0x850] sm:$0xf]
    %v566 = vld [vmem:[%s1 + $0x854] sm:$0xf]
    %v567 = vld [vmem:[%s1 + $0x858] sm:$0xf]
    %v568 = vld [vmem:[%s1 + $0x85c] sm:$0xf]
    %v569 = vld [vmem:[%s1 + $0x860] sm:$0xf]
    %v570 = vld [vmem:[%s1 + $0x864] sm:$0xf]
    %v571 = vld [vmem:[%s1 + $0x868] sm:$0xf]
    %v572 = vld [vmem:[%s1 + $0x86c] sm:$0xf]
    %v573 = vld [vmem:[%s1 + $0x870] sm:$0xf]
    %v574 = vld [vmem:[%s1 + $0x874] sm:$0xf]
    %v575 = vld [vmem:[%s1 + $0x878] sm:$0xf]
    %v576 = vld [vmem:[%s1 + $0x87c] sm:$0xf]
    %v577 = vld [vmem:[%s1 + $0x880] sm:$0xf]
    %v578 = vld [vmem:[%s1 + $0x884] sm:$0xf]
    %v579 = vld [vmem:[%s1 + $0x888] sm:$0xf]
    %v580 = vld [vmem:[%s1 + $0x88c] sm:$0xf]
    %v581 = vld [vmem:[%s1 + $0x890] sm:$0xf]
    %v582 = vld [vmem:[%s1 + $0x894] sm:$0xf]
    %v583 = vld [vmem:[%s1 + $0x898] sm:$0xf]
    %v584 = vld [vmem:[%s1 + $0x89c] sm:$0xf]
    %v585 = vld [vmem:[%s1 + $0x8a0] sm:$0xf]
    %v586 = vld [vmem:[%s1 + $0x8a4] sm:$0xf]
    %v587 = vld [vmem:[%s1 + $0x8a8] sm:$0xf]
    %v588 = vld [vmem:[%s1 + $0x8ac] sm:$0xf]
    %v589 = vld [vmem:[%s1 + $0x8b0] sm:$0xf]
    %v590 = vld [vmem:[%s1 + $0x8b4] sm:$0xf]
    %v591 = vld [vmem:[%s1 + $0x8b8] sm:$0xf]
    %v592 = vld [vmem:[%s1 + $0x8bc] sm:$0xf]
    %v593 = vld [vmem:[%s1 + $0x8c0] sm:$0xf]
    %v594 = vld [vmem:[%s1 + $0x8c4] sm:$0xf]
    %v595 = vld [vmem:[%s1 + $0x8c8] sm:$0xf]
    %v596 = vld [vmem:[%s1 + $0x8cc] sm:$0xf]
    %v597 = vld [vmem:[%s1 + $0x8d0] sm:$0xf]
    %v598 = vld [vmem:[%s1 + $0x8d4] sm:$0xf]
    %v599 = vld [vmem:[%s1 + $0x8d8] sm:$0xf]
    %v600 = vld [vmem:[%s1 + $0x8dc] sm:$0xf]
    %v601 = vld [vmem:[%s1 + $0x8e0] sm:$0xf]
    %v602 = vld [vmem:[%s1 + $0x8e4] sm:$0xf]
    %v603 = vld [vmem:[%s1 + $0x8e8] sm:$0xf]
    %v604 = vld [vmem:[%s1 + $0x8ec] sm:$0xf]
    %v605 = vld [vmem:[%s1 + $0x8f0] sm:$0xf]
    %v606 = vld [vmem:[%s1 + $0x8f4] sm:$0xf]
    %v607 = vld [vmem:[%s1 + $0x8f8] sm:$0xf]
    %v608 = vld [vmem:[%s1 + $0x8fc] sm:$0xf]
    %v609 = vld [vmem:[%s2] sm:$0x1]
    %v611 = vlaneseq
    %v612 = vshrl.u32 %v611, 7
    %v613 = vsub.s32 0, %v612
    %v614 = vrot.slane %v609, %v613
    %v621 = vcombine.high %v28, %v28
    %v623 = vunpack.c.l.s4 1966171168
    %v624 = vunpack.c.0.s8 %v623
    %v625 = vlaneseq
    %v626 = vshrl.u32 %v625, 7
    %v627 = vsub.s32 %v624, %v626
    %v628 = vrot.slane %v28, %v627
    %v630 = vunpack.c.l.s4 1966171168
    %v631 = vunpack.c.0.s8 %v630
    %v632 = vlaneseq
    %v633 = vshrl.u32 %v632, 7
    %v634 = vsub.s32 %v631, %v633
    %v635 = vrot.slane %v621, %v634
    %v636 = vcombine.high %v628, %v628
    %v637 = vcombine.high %v635, %v635
    %v639 = vunpack.c.l.s4 1966171168
    %v640 = vunpack.c.0.s8 %v639
    %v641 = vlaneseq
    %v642 = vshrl.u32 %v641, 7
    %v643 = vsub.s32 %v640, %v642
    %v644 = vrot.slane %v628, %v643
    %v646 = vunpack.c.l.s4 1966171168
    %v647 = vunpack.c.0.s8 %v646
    %v648 = vlaneseq
    %v649 = vshrl.u32 %v648, 7
    %v650 = vsub.s32 %v647, %v649
    %v651 = vrot.slane %v635, %v650
    %v653 = vunpack.c.l.s4 1966171168
    %v654 = vunpack.c.0.s8 %v653
    %v655 = vlaneseq
    %v656 = vshrl.u32 %v655, 7
    %v657 = vsub.s32 %v654, %v656
    %v658 = vrot.slane %v636, %v657
    %v660 = vunpack.c.l.s4 1966171168
    %v661 = vunpack.c.0.s8 %v660
    %v662 = vlaneseq
    %v663 = vshrl.u32 %v662, 7
    %v664 = vsub.s32 %v661, %v663
    %v665 = vrot.slane %v637, %v664
    %v666 = vcombine.high %v644, %v644
    %v667 = vcombine.high %v651, %v651
    %v668 = vcombine.high %v658, %v658
    %v669 = vcombine.high %v665, %v665
    %v670 = vcombine.high %v29, %v29
    %v672 = vunpack.c.l.s4 1966171168
    %v673 = vunpack.c.0.s8 %v672
    %v674 = vlaneseq
    %v675 = vshrl.u32 %v674, 7
    %v676 = vsub.s32 %v673, %v675
    %v677 = vrot.slane %v29, %v676
    %v679 = vunpack.c.l.s4 1966171168
    %v680 = vunpack.c.0.s8 %v679
    %v681 = vlaneseq
    %v682 = vshrl.u32 %v681, 7
    %v683 = vsub.s32 %v680, %v682
    %v684 = vrot.slane %v670, %v683
    %v685 = vcombine.high %v677, %v677
    %v686 = vcombine.high %v684, %v684
    %v688 = vunpack.c.l.s4 1966171168
    %v689 = vunpack.c.0.s8 %v688
    %v690 = vlaneseq
    %v691 = vshrl.u32 %v690, 7
    %v692 = vsub.s32 %v689, %v691
    %v693 = vrot.slane %v677, %v692
    %v695 = vunpack.c.l.s4 1966171168
    %v696 = vunpack.c.0.s8 %v695
    %v697 = vlaneseq
    %v698 = vshrl.u32 %v697, 7
    %v699 = vsub.s32 %v696, %v698
    %v700 = vrot.slane %v684, %v699
    %v702 = vunpack.c.l.s4 1966171168
    %v703 = vunpack.c.0.s8 %v702
    %v704 = vlaneseq
    %v705 = vshrl.u32 %v704, 7
    %v706 = vsub.s32 %v703, %v705
    %v707 = vrot.slane %v685, %v706
    %v709 = vunpack.c.l.s4 1966171168
    %v710 = vunpack.c.0.s8 %v709
    %v711 = vlaneseq
    %v712 = vshrl.u32 %v711, 7
    %v713 = vsub.s32 %v710, %v712
    %v714 = vrot.slane %v686, %v713
    %v715 = vcombine.high %v693, %v693
    %v716 = vcombine.high %v700, %v700
    %v717 = vcombine.high %v707, %v707
    %v718 = vcombine.high %v714, %v714
    %v719 = vcombine.high %v30, %v30
    %v721 = vunpack.c.l.s4 1966171168
    %v722 = vunpack.c.0.s8 %v721
    %v723 = vlaneseq
    %v724 = vshrl.u32 %v723, 7
    %v725 = vsub.s32 %v722, %v724
    %v726 = vrot.slane %v30, %v725
    %v728 = vunpack.c.l.s4 1966171168
    %v729 = vunpack.c.0.s8 %v728
    %v730 = vlaneseq
    %v731 = vshrl.u32 %v730, 7
    %v732 = vsub.s32 %v729, %v731
    %v733 = vrot.slane %v719, %v732
    %v734 = vcombine.high %v726, %v726
    %v735 = vcombine.high %v733, %v733
    %v737 = vunpack.c.l.s4 1966171168
    %v738 = vunpack.c.0.s8 %v737
    %v739 = vlaneseq
    %v740 = vshrl.u32 %v739, 7
    %v741 = vsub.s32 %v738, %v740
    %v742 = vrot.slane %v726, %v741
    %v744 = vunpack.c.l.s4 1966171168
    %v745 = vunpack.c.0.s8 %v744
    %v746 = vlaneseq
    %v747 = vshrl.u32 %v746, 7
    %v748 = vsub.s32 %v745, %v747
    %v749 = vrot.slane %v733, %v748
    %v751 = vunpack.c.l.s4 1966171168
    %v752 = vunpack.c.0.s8 %v751
    %v753 = vlaneseq
    %v754 = vshrl.u32 %v753, 7
    %v755 = vsub.s32 %v752, %v754
    %v756 = vrot.slane %v734, %v755
    %v758 = vunpack.c.l.s4 1966171168
    %v759 = vunpack.c.0.s8 %v758
    %v760 = vlaneseq
    %v761 = vshrl.u32 %v760, 7
    %v762 = vsub.s32 %v759, %v761
    %v763 = vrot.slane %v735, %v762
    %v764 = vcombine.high %v742, %v742
    %v765 = vcombine.high %v749, %v749
    %v766 = vcombine.high %v756, %v756
    %v767 = vcombine.high %v763, %v763
    %v768 = vcombine.high %v31, %v31
    %v770 = vunpack.c.l.s4 1966171168
    %v771 = vunpack.c.0.s8 %v770
    %v772 = vlaneseq
    %v773 = vshrl.u32 %v772, 7
    %v774 = vsub.s32 %v771, %v773
    %v775 = vrot.slane %v31, %v774
    %v777 = vunpack.c.l.s4 1966171168
    %v778 = vunpack.c.0.s8 %v777
    %v779 = vlaneseq
    %v780 = vshrl.u32 %v779, 7
    %v781 = vsub.s32 %v778, %v780
    %v782 = vrot.slane %v768, %v781
    %v783 = vcombine.high %v775, %v775
    %v784 = vcombine.high %v782, %v782
    %v786 = vunpack.c.l.s4 1966171168
    %v787 = vunpack.c.0.s8 %v786
    %v788 = vlaneseq
    %v789 = vshrl.u32 %v788, 7
    %v790 = vsub.s32 %v787, %v789
    %v791 = vrot.slane %v775, %v790
    %v793 = vunpack.c.l.s4 1966171168
    %v794 = vunpack.c.0.s8 %v793
    %v795 = vlaneseq
    %v796 = vshrl.u32 %v795, 7
    %v797 = vsub.s32 %v794, %v796
    %v798 = vrot.slane %v782, %v797
    %v800 = vunpack.c.l.s4 1966171168
    %v801 = vunpack.c.0.s8 %v800
    %v802 = vlaneseq
    %v803 = vshrl.u32 %v802, 7
    %v804 = vsub.s32 %v801, %v803
    %v805 = vrot.slane %v783, %v804
    %v807 = vunpack.c.l.s4 1966171168
    %v808 = vunpack.c.0.s8 %v807
    %v809 = vlaneseq
    %v810 = vshrl.u32 %v809, 7
    %v811 = vsub.s32 %v808, %v810
    %v812 = vrot.slane %v784, %v811
    %v813 = vcombine.high %v791, %v791
    %v814 = vcombine.high %v798, %v798
    %v815 = vcombine.high %v805, %v805
    %v816 = vcombine.high %v812, %v812
    %v818 = vunpack.c.l.s4 1966171168
    %v819 = vunpack.c.0.s8 %v818
    %v820 = vlaneseq
    %v821 = vshrl.u32 %v820, 7
    %v822 = vsub.s32 %v819, %v821
    %v823 = vrot.slane %v32, %v822
    %v824 = vcombine.high %v823, %v823
    %v826 = vunpack.c.l.s4 1966171168
    %v827 = vunpack.c.0.s8 %v826
    %v828 = vlaneseq
    %v829 = vshrl.u32 %v828, 7
    %v830 = vsub.s32 %v827, %v829
    %v831 = vrot.slane %v823, %v830
    %v833 = vunpack.c.l.s4 1966171168
    %v834 = vunpack.c.0.s8 %v833
    %v835 = vlaneseq
    %v836 = vshrl.u32 %v835, 7
    %v837 = vsub.s32 %v834, %v836
    %v838 = vrot.slane %v824, %v837
    %v839 = vcombine.high %v831, %v831
    %v840 = vcombine.high %v838, %v838
    %v1453 = vunpack.c.l.b16 %v33
    %v1454 = vunpack.c.l.b16 %v34
    %v1455 = vunpack.c.l.b16 %v35
    %v1456 = vunpack.c.l.b16 %v36
    %v1457 = vunpack.c.l.b16 %v37
    %v1458 = vunpack.c.l.b16 %v38
    %v1459 = vunpack.c.l.b16 %v39
    %v1460 = vunpack.c.l.b16 %v40
    %v1461 = vunpack.c.l.b16 %v41
    %v1462 = vunpack.c.l.b16 %v42
    %v1463 = vunpack.c.l.b16 %v43
    %v1464 = vunpack.c.l.b16 %v44
    %v1465 = vunpack.c.l.b16 %v45
    %v1466 = vunpack.c.l.b16 %v46
    %v1467 = vunpack.c.l.b16 %v47
    %v1468 = vunpack.c.l.b16 %v48
    %v1469 = vunpack.c.l.b16 %v49
    %v1470 = vunpack.c.l.b16 %v50
    %v1471 = vunpack.c.l.b16 %v51
    %v1472 = vunpack.c.l.b16 %v52
    %v1473 = vunpack.c.l.b16 %v53
    %v1474 = vunpack.c.l.b16 %v54
    %v1475 = vunpack.c.l.b16 %v55
    %v1476 = vunpack.c.l.b16 %v56
    %v1477 = vunpack.c.l.b16 %v57
    %v1478 = vunpack.c.l.b16 %v58
    %v1479 = vunpack.c.l.b16 %v59
    %v1480 = vunpack.c.l.b16 %v60
    %v1481 = vunpack.c.l.b16 %v61
    %v1482 = vunpack.c.l.b16 %v62
    %v1483 = vunpack.c.l.b16 %v63
    %v1484 = vunpack.c.l.b16 %v64
    %v1485 = vunpack.c.l.b16 %v65
    %v1486 = vunpack.c.l.b16 %v66
    %v1487 = vunpack.c.l.b16 %v67
    %v1488 = vunpack.c.l.b16 %v68
    %v1489 = vunpack.c.l.b16 %v69
    %v1490 = vunpack.c.l.b16 %v70
    %v1491 = vunpack.c.l.b16 %v71
    %v1492 = vunpack.c.l.b16 %v72
    %v1493 = vunpack.c.l.b16 %v73
    %v1494 = vunpack.c.l.b16 %v74
    %v1495 = vunpack.c.l.b16 %v75
    %v1496 = vunpack.c.l.b16 %v76
    %v1497 = vunpack.c.l.b16 %v77
    %v1498 = vunpack.c.l.b16 %v78
    %v1499 = vunpack.c.l.b16 %v79
    %v1500 = vunpack.c.l.b16 %v80
    %v1501 = vunpack.c.l.b16 %v81
    %v1502 = vunpack.c.l.b16 %v82
    %v1503 = vunpack.c.l.b16 %v83
    %v1504 = vunpack.c.l.b16 %v84
    %v1505 = vunpack.c.l.b16 %v85
    %v1506 = vunpack.c.l.b16 %v86
    %v1507 = vunpack.c.l.b16 %v87
    %v1508 = vunpack.c.l.b16 %v88
    %v1509 = vunpack.c.l.b16 %v89
    %v1510 = vunpack.c.l.b16 %v90
    %v1511 = vunpack.c.l.b16 %v91
    %v1512 = vunpack.c.l.b16 %v92
    %v1513 = vunpack.c.l.b16 %v93
    %v1514 = vunpack.c.l.b16 %v94
    %v1515 = vunpack.c.l.b16 %v95
    %v1516 = vunpack.c.l.b16 %v96
    %v1517 = vunpack.c.l.b16 %v97
    %v1518 = vunpack.c.l.b16 %v98
    %v1519 = vunpack.c.l.b16 %v99
    %v1520 = vunpack.c.l.b16 %v100
    %v1521 = vunpack.c.l.b16 %v101
    %v1522 = vunpack.c.l.b16 %v102
    %v1523 = vunpack.c.l.b16 %v103
    %v1524 = vunpack.c.l.b16 %v104
    %v1525 = vunpack.c.l.b16 %v105
    %v1526 = vunpack.c.l.b16 %v106
    %v1527 = vunpack.c.l.b16 %v107
    %v1528 = vunpack.c.l.b16 %v108
    %v1529 = vunpack.c.l.b16 %v109
    %v1530 = vunpack.c.l.b16 %v110
    %v1531 = vunpack.c.l.b16 %v111
    %v1532 = vunpack.c.l.b16 %v112
    %v1533 = vunpack.c.l.b16 %v113
    %v1534 = vunpack.c.l.b16 %v114
    %v1535 = vunpack.c.l.b16 %v115
    %v1536 = vunpack.c.l.b16 %v116
    %v1537 = vunpack.c.l.b16 %v117
    %v1538 = vunpack.c.l.b16 %v118
    %v1539 = vunpack.c.l.b16 %v119
    %v1540 = vunpack.c.l.b16 %v120
    %v1541 = vunpack.c.l.b16 %v121
    %v1542 = vunpack.c.l.b16 %v122
    %v1543 = vunpack.c.l.b16 %v123
    %v1544 = vunpack.c.l.b16 %v124
    %v1545 = vunpack.c.l.b16 %v125
    %v1546 = vunpack.c.l.b16 %v126
    %v1547 = vunpack.c.l.b16 %v127
    %v1548 = vunpack.c.l.b16 %v128
    %v1549 = vunpack.c.l.b16 %v129
    %v1550 = vunpack.c.l.b16 %v130
    %v1551 = vunpack.c.l.b16 %v131
    %v1552 = vunpack.c.l.b16 %v132
    %v1553 = vunpack.c.l.b16 %v133
    %v1554 = vunpack.c.l.b16 %v134
    %v1555 = vunpack.c.l.b16 %v135
    %v1556 = vunpack.c.l.b16 %v136
    %v1557 = vunpack.c.l.b16 %v137
    %v1558 = vunpack.c.l.b16 %v138
    %v1559 = vunpack.c.l.b16 %v139
    %v1560 = vunpack.c.l.b16 %v140
    %v1561 = vunpack.c.l.b16 %v141
    %v1562 = vunpack.c.l.b16 %v142
    %v1563 = vunpack.c.l.b16 %v143
    %v1564 = vunpack.c.l.b16 %v144
    %v1565 = vunpack.c.l.b16 %v145
    %v1566 = vunpack.c.l.b16 %v146
    %v1567 = vunpack.c.l.b16 %v147
    %v1568 = vunpack.c.l.b16 %v148
    %v1569 = vunpack.c.l.b16 %v149
    %v1570 = vunpack.c.l.b16 %v150
    %v1571 = vunpack.c.l.b16 %v151
    %v1572 = vunpack.c.l.b16 %v152
    %v1573 = vunpack.c.l.b16 %v153
    %v1574 = vunpack.c.l.b16 %v154
    %v1575 = vunpack.c.l.b16 %v155
    %v1576 = vunpack.c.l.b16 %v156
    %v1577 = vunpack.c.l.b16 %v157
    %v1578 = vunpack.c.l.b16 %v158
    %v1579 = vunpack.c.l.b16 %v159
    %v1580 = vunpack.c.l.b16 %v160
    %v1581 = vunpack.c.l.b16 %v161
    %v1582 = vunpack.c.l.b16 %v162
    %v1583 = vunpack.c.l.b16 %v163
    %v1584 = vunpack.c.l.b16 %v164
    %v1585 = vunpack.c.l.b16 %v165
    %v1586 = vunpack.c.l.b16 %v166
    %v1587 = vunpack.c.l.b16 %v167
    %v1588 = vunpack.c.l.b16 %v168
    %v1589 = vunpack.c.l.b16 %v169
    %v1590 = vunpack.c.l.b16 %v170
    %v1591 = vunpack.c.l.b16 %v171
    %v1592 = vunpack.c.l.b16 %v172
    %v1593 = vunpack.c.l.b16 %v173
    %v1594 = vunpack.c.l.b16 %v174
    %v1595 = vunpack.c.l.b16 %v175
    %v1596 = vunpack.c.l.b16 %v176
    %v1597 = vunpack.c.l.b16 %v177
    %v1598 = vunpack.c.l.b16 %v178
    %v1599 = vunpack.c.l.b16 %v179
    %v1600 = vunpack.c.l.b16 %v180
    %v1601 = vunpack.c.l.b16 %v181
    %v1602 = vunpack.c.l.b16 %v182
    %v1603 = vunpack.c.l.b16 %v183
    %v1604 = vunpack.c.l.b16 %v184
    %v1605 = vunpack.c.l.b16 %v185
    %v1606 = vunpack.c.l.b16 %v186
    %v1607 = vunpack.c.l.b16 %v187
    %v1608 = vunpack.c.l.b16 %v188
    %v1609 = vunpack.c.l.b16 %v189
    %v1610 = vunpack.c.l.b16 %v190
    %v1611 = vunpack.c.l.b16 %v191
    %v1612 = vunpack.c.l.b16 %v192
    %v1613 = vunpack.c.l.b16 %v193
    %v1614 = vunpack.c.l.b16 %v194
    %v1615 = vunpack.c.l.b16 %v195
    %v1616 = vunpack.c.l.b16 %v196
    %v1617 = vunpack.c.l.b16 %v197
    %v1618 = vunpack.c.l.b16 %v198
    %v1619 = vunpack.c.l.b16 %v199
    %v1620 = vunpack.c.l.b16 %v200
    %v1621 = vunpack.c.l.b16 %v201
    %v1622 = vunpack.c.l.b16 %v202
    %v1623 = vunpack.c.l.b16 %v203
    %v1624 = vunpack.c.l.b16 %v204
    %v1625 = vunpack.c.l.b16 %v205
    %v1626 = vunpack.c.l.b16 %v206
    %v1627 = vunpack.c.l.b16 %v207
    %v1628 = vunpack.c.l.b16 %v208
    %v1629 = vunpack.c.l.b16 %v209
    %v1630 = vunpack.c.l.b16 %v210
    %v1631 = vunpack.c.l.b16 %v211
    %v1632 = vunpack.c.l.b16 %v212
    %v1633 = vunpack.c.l.b16 %v213
    %v1634 = vunpack.c.l.b16 %v214
    %v1635 = vunpack.c.l.b16 %v215
    %v1636 = vunpack.c.l.b16 %v216
    %v1637 = vunpack.c.l.b16 %v217
    %v1638 = vunpack.c.l.b16 %v218
    %v1639 = vunpack.c.l.b16 %v219
    %v1640 = vunpack.c.l.b16 %v220
    %v1641 = vunpack.c.l.b16 %v221
    %v1642 = vunpack.c.l.b16 %v222
    %v1643 = vunpack.c.l.b16 %v223
    %v1644 = vunpack.c.l.b16 %v224
    %v1645 = vunpack.c.l.b16 %v225
    %v1646 = vunpack.c.l.b16 %v226
    %v1647 = vunpack.c.l.b16 %v227
    %v1648 = vunpack.c.l.b16 %v228
    %v1649 = vunpack.c.l.b16 %v229
    %v1650 = vunpack.c.l.b16 %v230
    %v1651 = vunpack.c.l.b16 %v231
    %v1652 = vunpack.c.l.b16 %v232
    %v1653 = vunpack.c.l.b16 %v233
    %v1654 = vunpack.c.l.b16 %v234
    %v1655 = vunpack.c.l.b16 %v235
    %v1656 = vunpack.c.l.b16 %v236
    %v1657 = vunpack.c.l.b16 %v237
    %v1658 = vunpack.c.l.b16 %v238
    %v1659 = vunpack.c.l.b16 %v239
    %v1660 = vunpack.c.l.b16 %v240
    %v1661 = vunpack.c.l.b16 %v241
    %v1662 = vunpack.c.l.b16 %v242
    %v1663 = vunpack.c.l.b16 %v243
    %v1664 = vunpack.c.l.b16 %v244
    %v1665 = vunpack.c.l.b16 %v245
    %v1666 = vunpack.c.l.b16 %v246
    %v1667 = vunpack.c.l.b16 %v247
    %v1668 = vunpack.c.l.b16 %v248
    %v1669 = vunpack.c.l.b16 %v249
    %v1670 = vunpack.c.l.b16 %v250
    %v1671 = vunpack.c.l.b16 %v251
    %v1672 = vunpack.c.l.b16 %v252
    %v1673 = vunpack.c.l.b16 %v253
    %v1674 = vunpack.c.l.b16 %v254
    %v1675 = vunpack.c.l.b16 %v255
    %v1676 = vunpack.c.l.b16 %v256
    %v1677 = vunpack.c.l.b16 %v257
    %v1678 = vunpack.c.l.b16 %v258
    %v1679 = vunpack.c.l.b16 %v259
    %v1680 = vunpack.c.l.b16 %v260
    %v1681 = vunpack.c.l.b16 %v261
    %v1682 = vunpack.c.l.b16 %v262
    %v1683 = vunpack.c.l.b16 %v263
    %v1684 = vunpack.c.l.b16 %v264
    %v1685 = vunpack.c.l.b16 %v265
    %v1686 = vunpack.c.l.b16 %v266
    %v1687 = vunpack.c.l.b16 %v267
    %v1688 = vunpack.c.l.b16 %v268
    %v1689 = vunpack.c.l.b16 %v269
    %v1690 = vunpack.c.l.b16 %v270
    %v1691 = vunpack.c.l.b16 %v271
    %v1692 = vunpack.c.l.b16 %v272
    %v1693 = vunpack.c.l.b16 %v273
    %v1694 = vunpack.c.l.b16 %v274
    %v1695 = vunpack.c.l.b16 %v275
    %v1696 = vunpack.c.l.b16 %v276
    %v1697 = vunpack.c.l.b16 %v277
    %v1698 = vunpack.c.l.b16 %v278
    %v1699 = vunpack.c.l.b16 %v279
    %v1700 = vunpack.c.l.b16 %v280
    %v1701 = vunpack.c.l.b16 %v281
    %v1702 = vunpack.c.l.b16 %v282
    %v1703 = vunpack.c.l.b16 %v283
    %v1704 = vunpack.c.l.b16 %v284
    %v1705 = vunpack.c.l.b16 %v285
    %v1706 = vunpack.c.l.b16 %v286
    %v1707 = vunpack.c.l.b16 %v287
    %v1708 = vunpack.c.l.b16 %v288
    %v1709 = vunpack.c.l.b16 %v289
    %v1710 = vunpack.c.l.b16 %v290
    %v1711 = vunpack.c.l.b16 %v291
    %v1712 = vunpack.c.l.b16 %v292
    %v1713 = vunpack.c.l.b16 %v293
    %v1714 = vunpack.c.l.b16 %v294
    %v1715 = vunpack.c.l.b16 %v295
    %v1716 = vunpack.c.l.b16 %v296
    %v1717 = vunpack.c.l.b16 %v297
    %v1718 = vunpack.c.l.b16 %v298
    %v1719 = vunpack.c.l.b16 %v299
    %v1720 = vunpack.c.l.b16 %v300
    %v1721 = vunpack.c.l.b16 %v301
    %v1722 = vunpack.c.l.b16 %v302
    %v1723 = vunpack.c.l.b16 %v303
    %v1724 = vunpack.c.l.b16 %v304
    %v1725 = vunpack.c.l.b16 %v305
    %v1726 = vunpack.c.l.b16 %v306
    %v1727 = vunpack.c.l.b16 %v307
    %v1728 = vunpack.c.l.b16 %v308
    %v1729 = vunpack.c.l.b16 %v309
    %v1730 = vunpack.c.l.b16 %v310
    %v1731 = vunpack.c.l.b16 %v311
    %v1732 = vunpack.c.l.b16 %v312
    %v1733 = vunpack.c.l.b16 %v313
    %v1734 = vunpack.c.l.b16 %v314
    %v1735 = vunpack.c.l.b16 %v315
    %v1736 = vunpack.c.l.b16 %v316
    %v1737 = vunpack.c.l.b16 %v317
    %v1738 = vunpack.c.l.b16 %v318
    %v1739 = vunpack.c.l.b16 %v319
    %v1740 = vunpack.c.l.b16 %v320
    %v1741 = vunpack.c.l.b16 %v321
    %v1742 = vunpack.c.l.b16 %v322
    %v1743 = vunpack.c.l.b16 %v323
    %v1744 = vunpack.c.l.b16 %v324
    %v1745 = vunpack.c.l.b16 %v325
    %v1746 = vunpack.c.l.b16 %v326
    %v1747 = vunpack.c.l.b16 %v327
    %v1748 = vunpack.c.l.b16 %v328
    %v1749 = vunpack.c.l.b16 %v329
    %v1750 = vunpack.c.l.b16 %v330
    %v1751 = vunpack.c.l.b16 %v331
    %v1752 = vunpack.c.l.b16 %v332
    %v1753 = vunpack.c.l.b16 %v333
    %v1754 = vunpack.c.l.b16 %v334
    %v1755 = vunpack.c.l.b16 %v335
    %v1756 = vunpack.c.l.b16 %v336
    %v1757 = vunpack.c.l.b16 %v337
    %v1758 = vunpack.c.l.b16 %v338
    %v1759 = vunpack.c.l.b16 %v339
    %v1760 = vunpack.c.l.b16 %v340
    %v1761 = vunpack.c.l.b16 %v341
    %v1762 = vunpack.c.l.b16 %v342
    %v1763 = vunpack.c.l.b16 %v343
    %v1764 = vunpack.c.l.b16 %v344
    %v1765 = vunpack.c.l.b16 %v345
    %v1766 = vunpack.c.l.b16 %v346
    %v1767 = vunpack.c.l.b16 %v347
    %v1768 = vunpack.c.l.b16 %v348
    %v1769 = vunpack.c.l.b16 %v349
    %v1770 = vunpack.c.l.b16 %v350
    %v1771 = vunpack.c.l.b16 %v351
    %v1772 = vunpack.c.l.b16 %v352
    %v1773 = vunpack.c.l.b16 %v353
    %v1774 = vunpack.c.l.b16 %v354
    %v1775 = vunpack.c.l.b16 %v355
    %v1776 = vunpack.c.l.b16 %v356
    %v1777 = vunpack.c.l.b16 %v357
    %v1778 = vunpack.c.l.b16 %v358
    %v1779 = vunpack.c.l.b16 %v359
    %v1780 = vunpack.c.l.b16 %v360
    %v1781 = vunpack.c.l.b16 %v361
    %v1782 = vunpack.c.l.b16 %v362
    %v1783 = vunpack.c.l.b16 %v363
    %v1784 = vunpack.c.l.b16 %v364
    %v1785 = vunpack.c.l.b16 %v365
    %v1786 = vunpack.c.l.b16 %v366
    %v1787 = vunpack.c.l.b16 %v367
    %v1788 = vunpack.c.l.b16 %v368
    %v1789 = vunpack.c.l.b16 %v369
    %v1790 = vunpack.c.l.b16 %v370
    %v1791 = vunpack.c.l.b16 %v371
    %v1792 = vunpack.c.l.b16 %v372
    %v1793 = vunpack.c.l.b16 %v373
    %v1794 = vunpack.c.l.b16 %v374
    %v1795 = vunpack.c.l.b16 %v375
    %v1796 = vunpack.c.l.b16 %v376
    %v1797 = vunpack.c.l.b16 %v377
    %v1798 = vunpack.c.l.b16 %v378
    %v1799 = vunpack.c.l.b16 %v379
    %v1800 = vunpack.c.l.b16 %v380
    %v1801 = vunpack.c.l.b16 %v381
    %v1802 = vunpack.c.l.b16 %v382
    %v1803 = vunpack.c.l.b16 %v383
    %v1804 = vunpack.c.l.b16 %v384
    %v1805 = vunpack.c.l.b16 %v385
    %v1806 = vunpack.c.l.b16 %v386
    %v1807 = vunpack.c.l.b16 %v387
    %v1808 = vunpack.c.l.b16 %v388
    %v1809 = vunpack.c.l.b16 %v389
    %v1810 = vunpack.c.l.b16 %v390
    %v1811 = vunpack.c.l.b16 %v391
    %v1812 = vunpack.c.l.b16 %v392
    %v1813 = vunpack.c.l.b16 %v393
    %v1814 = vunpack.c.l.b16 %v394
    %v1815 = vunpack.c.l.b16 %v395
    %v1816 = vunpack.c.l.b16 %v396
    %v1817 = vunpack.c.l.b16 %v397
    %v1818 = vunpack.c.l.b16 %v398
    %v1819 = vunpack.c.l.b16 %v399
    %v1820 = vunpack.c.l.b16 %v400
    %v1821 = vunpack.c.l.b16 %v401
    %v1822 = vunpack.c.l.b16 %v402
    %v1823 = vunpack.c.l.b16 %v403
    %v1824 = vunpack.c.l.b16 %v404
    %v1825 = vunpack.c.l.b16 %v405
    %v1826 = vunpack.c.l.b16 %v406
    %v1827 = vunpack.c.l.b16 %v407
    %v1828 = vunpack.c.l.b16 %v408
    %v1829 = vunpack.c.l.b16 %v409
    %v1830 = vunpack.c.l.b16 %v410
    %v1831 = vunpack.c.l.b16 %v411
    %v1832 = vunpack.c.l.b16 %v412
    %v1833 = vunpack.c.l.b16 %v413
    %v1834 = vunpack.c.l.b16 %v414
    %v1835 = vunpack.c.l.b16 %v415
    %v1836 = vunpack.c.l.b16 %v416
    %v1837 = vunpack.c.l.b16 %v417
    %v1838 = vunpack.c.l.b16 %v418
    %v1839 = vunpack.c.l.b16 %v419
    %v1840 = vunpack.c.l.b16 %v420
    %v1841 = vunpack.c.l.b16 %v421
    %v1842 = vunpack.c.l.b16 %v422
    %v1843 = vunpack.c.l.b16 %v423
    %v1844 = vunpack.c.l.b16 %v424
    %v1845 = vunpack.c.l.b16 %v425
    %v1846 = vunpack.c.l.b16 %v426
    %v1847 = vunpack.c.l.b16 %v427
    %v1848 = vunpack.c.l.b16 %v428
    %v1849 = vunpack.c.l.b16 %v429
    %v1850 = vunpack.c.l.b16 %v430
    %v1851 = vunpack.c.l.b16 %v431
    %v1852 = vunpack.c.l.b16 %v432
    %v1853 = vunpack.c.l.b16 %v433
    %v1854 = vunpack.c.l.b16 %v434
    %v1855 = vunpack.c.l.b16 %v435
    %v1856 = vunpack.c.l.b16 %v436
    %v1857 = vunpack.c.l.b16 %v437
    %v1858 = vunpack.c.l.b16 %v438
    %v1859 = vunpack.c.l.b16 %v439
    %v1860 = vunpack.c.l.b16 %v440
    %v1861 = vunpack.c.l.b16 %v441
    %v1862 = vunpack.c.l.b16 %v442
    %v1863 = vunpack.c.l.b16 %v443
    %v1864 = vunpack.c.l.b16 %v444
    %v1865 = vunpack.c.l.b16 %v445
    %v1866 = vunpack.c.l.b16 %v446
    %v1867 = vunpack.c.l.b16 %v447
    %v1868 = vunpack.c.l.b16 %v448
    %v1869 = vunpack.c.l.b16 %v449
    %v1870 = vunpack.c.l.b16 %v450
    %v1871 = vunpack.c.l.b16 %v451
    %v1872 = vunpack.c.l.b16 %v452
    %v1873 = vunpack.c.l.b16 %v453
    %v1874 = vunpack.c.l.b16 %v454
    %v1875 = vunpack.c.l.b16 %v455
    %v1876 = vunpack.c.l.b16 %v456
    %v1877 = vunpack.c.l.b16 %v457
    %v1878 = vunpack.c.l.b16 %v458
    %v1879 = vunpack.c.l.b16 %v459
    %v1880 = vunpack.c.l.b16 %v460
    %v1881 = vunpack.c.l.b16 %v461
    %v1882 = vunpack.c.l.b16 %v462
    %v1883 = vunpack.c.l.b16 %v463
    %v1884 = vunpack.c.l.b16 %v464
    %v1885 = vunpack.c.l.b16 %v465
    %v1886 = vunpack.c.l.b16 %v466
    %v1887 = vunpack.c.l.b16 %v467
    %v1888 = vunpack.c.l.b16 %v468
    %v1889 = vunpack.c.l.b16 %v469
    %v1890 = vunpack.c.l.b16 %v470
    %v1891 = vunpack.c.l.b16 %v471
    %v1892 = vunpack.c.l.b16 %v472
    %v1893 = vunpack.c.l.b16 %v473
    %v1894 = vunpack.c.l.b16 %v474
    %v1895 = vunpack.c.l.b16 %v475
    %v1896 = vunpack.c.l.b16 %v476
    %v1897 = vunpack.c.l.b16 %v477
    %v1898 = vunpack.c.l.b16 %v478
    %v1899 = vunpack.c.l.b16 %v479
    %v1900 = vunpack.c.l.b16 %v480
    %v1901 = vunpack.c.l.b16 %v481
    %v1902 = vunpack.c.l.b16 %v482
    %v1903 = vunpack.c.l.b16 %v483
    %v1904 = vunpack.c.l.b16 %v484
    %v1905 = vunpack.c.l.b16 %v485
    %v1906 = vunpack.c.l.b16 %v486
    %v1907 = vunpack.c.l.b16 %v487
    %v1908 = vunpack.c.l.b16 %v488
    %v1909 = vunpack.c.l.b16 %v489
    %v1910 = vunpack.c.l.b16 %v490
    %v1911 = vunpack.c.l.b16 %v491
    %v1912 = vunpack.c.l.b16 %v492
    %v1913 = vunpack.c.l.b16 %v493
    %v1914 = vunpack.c.l.b16 %v494
    %v1915 = vunpack.c.l.b16 %v495
    %v1916 = vunpack.c.l.b16 %v496
    %v1917 = vunpack.c.l.b16 %v497
    %v1918 = vunpack.c.l.b16 %v498
    %v1919 = vunpack.c.l.b16 %v499
    %v1920 = vunpack.c.l.b16 %v500
    %v1921 = vunpack.c.l.b16 %v501
    %v1922 = vunpack.c.l.b16 %v502
    %v1923 = vunpack.c.l.b16 %v503
    %v1924 = vunpack.c.l.b16 %v504
    %v1925 = vunpack.c.l.b16 %v505
    %v1926 = vunpack.c.l.b16 %v506
    %v1927 = vunpack.c.l.b16 %v507
    %v1928 = vunpack.c.l.b16 %v508
    %v1929 = vunpack.c.l.b16 %v509
    %v1930 = vunpack.c.l.b16 %v510
    %v1931 = vunpack.c.l.b16 %v511
    %v1932 = vunpack.c.l.b16 %v512
    %v1933 = vunpack.c.l.b16 %v513
    %v1934 = vunpack.c.l.b16 %v514
    %v1935 = vunpack.c.l.b16 %v515
    %v1936 = vunpack.c.l.b16 %v516
    %v1937 = vunpack.c.l.b16 %v517
    %v1938 = vunpack.c.l.b16 %v518
    %v1939 = vunpack.c.l.b16 %v519
    %v1940 = vunpack.c.l.b16 %v520
    %v1941 = vunpack.c.l.b16 %v521
    %v1942 = vunpack.c.l.b16 %v522
    %v1943 = vunpack.c.l.b16 %v523
    %v1944 = vunpack.c.l.b16 %v524
    %v1945 = vunpack.c.l.b16 %v525
    %v1946 = vunpack.c.l.b16 %v526
    %v1947 = vunpack.c.l.b16 %v527
    %v1948 = vunpack.c.l.b16 %v528
    %v1949 = vunpack.c.l.b16 %v529
    %v1950 = vunpack.c.l.b16 %v530
    %v1951 = vunpack.c.l.b16 %v531
    %v1952 = vunpack.c.l.b16 %v532
    %v1953 = vunpack.c.l.b16 %v533
    %v1954 = vunpack.c.l.b16 %v534
    %v1955 = vunpack.c.l.b16 %v535
    %v1956 = vunpack.c.l.b16 %v536
    %v1957 = vunpack.c.l.b16 %v537
    %v1958 = vunpack.c.l.b16 %v538
    %v1959 = vunpack.c.l.b16 %v539
    %v1960 = vunpack.c.l.b16 %v540
    %v1961 = vunpack.c.l.b16 %v541
    %v1962 = vunpack.c.l.b16 %v542
    %v1963 = vunpack.c.l.b16 %v543
    %v1964 = vunpack.c.l.b16 %v544
    %v1965 = vunpack.c.l.b16 %v545
    %v1966 = vunpack.c.l.b16 %v546
    %v1967 = vunpack.c.l.b16 %v547
    %v1968 = vunpack.c.l.b16 %v548
    %v1969 = vunpack.c.l.b16 %v549
    %v1970 = vunpack.c.l.b16 %v550
    %v1971 = vunpack.c.l.b16 %v551
    %v1972 = vunpack.c.l.b16 %v552
    %v1973 = vunpack.c.l.b16 %v553
    %v1974 = vunpack.c.l.b16 %v554
    %v1975 = vunpack.c.l.b16 %v555
    %v1976 = vunpack.c.l.b16 %v556
    %v1977 = vunpack.c.l.b16 %v557
    %v1978 = vunpack.c.l.b16 %v558
    %v1979 = vunpack.c.l.b16 %v559
    %v1980 = vunpack.c.l.b16 %v560
    %v1981 = vunpack.c.l.b16 %v561
    %v1982 = vunpack.c.l.b16 %v562
    %v1983 = vunpack.c.l.b16 %v563
    %v1984 = vunpack.c.l.b16 %v564
    %v1985 = vunpack.c.l.b16 %v565
    %v1986 = vunpack.c.l.b16 %v566
    %v1987 = vunpack.c.l.b16 %v567
    %v1988 = vunpack.c.l.b16 %v568
    %v1989 = vunpack.c.l.b16 %v569
    %v1990 = vunpack.c.l.b16 %v570
    %v1991 = vunpack.c.l.b16 %v571
    %v1992 = vunpack.c.l.b16 %v572
    %v1993 = vunpack.c.l.b16 %v573
    %v1994 = vunpack.c.l.b16 %v574
    %v1995 = vunpack.c.l.b16 %v575
    %v1996 = vunpack.c.l.b16 %v576
    %v1997 = vunpack.c.l.b16 %v577
    %v1998 = vunpack.c.l.b16 %v578
    %v1999 = vunpack.c.l.b16 %v579
    %v2000 = vunpack.c.l.b16 %v580
    %v2001 = vunpack.c.l.b16 %v581
    %v2002 = vunpack.c.l.b16 %v582
    %v2003 = vunpack.c.l.b16 %v583
    %v2004 = vunpack.c.l.b16 %v584
    %v2005 = vunpack.c.l.b16 %v585
    %v2006 = vunpack.c.l.b16 %v586
    %v2007 = vunpack.c.l.b16 %v587
    %v2008 = vunpack.c.l.b16 %v588
    %v2009 = vunpack.c.l.b16 %v589
    %v2010 = vunpack.c.l.b16 %v590
    %v2011 = vunpack.c.l.b16 %v591
    %v2012 = vunpack.c.l.b16 %v592
    %v2013 = vunpack.c.l.b16 %v593
    %v2014 = vunpack.c.l.b16 %v594
    %v2015 = vunpack.c.l.b16 %v595
    %v2016 = vunpack.c.l.b16 %v596
    %v2017 = vunpack.c.l.b16 %v597
    %v2018 = vunpack.c.l.b16 %v598
    %v2019 = vunpack.c.l.b16 %v599
    %v2020 = vunpack.c.l.b16 %v600
    %v2021 = vunpack.c.l.b16 %v601
    %v2022 = vunpack.c.l.b16 %v602
    %v2023 = vunpack.c.l.b16 %v603
    %v2024 = vunpack.c.l.b16 %v604
    %v2025 = vunpack.c.l.b16 %v605
    %v2026 = vunpack.c.l.b16 %v606
    %v2027 = vunpack.c.l.b16 %v607
    %v2028 = vunpack.c.l.b16 %v608
    %v2029 = vpack.c.b16 %v1454, %v1453
    %v2030 = vpack.c.b16 %v1456, %v1455
    %v2031 = vpack.c.b16 %v1458, %v1457
    %v2032 = vpack.c.b16 %v1460, %v1459
    %v2033 = vpack.c.b16 %v1462, %v1461
    %v2034 = vpack.c.b16 %v1464, %v1463
    %v2035 = vpack.c.b16 %v1466, %v1465
    %v2036 = vpack.c.b16 %v1468, %v1467
    %v2037 = vpack.c.b16 %v1470, %v1469
    %v2038 = vpack.c.b16 %v1472, %v1471
    %v2039 = vpack.c.b16 %v1474, %v1473
    %v2040 = vpack.c.b16 %v1476, %v1475
    %v2041 = vpack.c.b16 %v1478, %v1477
    %v2042 = vpack.c.b16 %v1480, %v1479
    %v2043 = vpack.c.b16 %v1482, %v1481
    %v2044 = vpack.c.b16 %v1484, %v1483
    %v2045 = vpack.c.b16 %v1486, %v1485
    %v2046 = vpack.c.b16 %v1488, %v1487
    %v2047 = vpack.c.b16 %v1490, %v1489
    %v2048 = vpack.c.b16 %v1492, %v1491
    %v2049 = vpack.c.b16 %v1494, %v1493
    %v2050 = vpack.c.b16 %v1496, %v1495
    %v2051 = vpack.c.b16 %v1498, %v1497
    %v2052 = vpack.c.b16 %v1500, %v1499
    %v2053 = vpack.c.b16 %v1502, %v1501
    %v2054 = vpack.c.b16 %v1504, %v1503
    %v2055 = vpack.c.b16 %v1506, %v1505
    %v2056 = vpack.c.b16 %v1508, %v1507
    %v2057 = vpack.c.b16 %v1510, %v1509
    %v2058 = vpack.c.b16 %v1512, %v1511
    %v2059 = vpack.c.b16 %v1514, %v1513
    %v2060 = vpack.c.b16 %v1516, %v1515
    %v2061 = vpack.c.b16 %v1518, %v1517
    %v2062 = vpack.c.b16 %v1520, %v1519
    %v2063 = vpack.c.b16 %v1522, %v1521
    %v2064 = vpack.c.b16 %v1524, %v1523
    %v2065 = vpack.c.b16 %v1526, %v1525
    %v2066 = vpack.c.b16 %v1528, %v1527
    %v2067 = vpack.c.b16 %v1530, %v1529
    %v2068 = vpack.c.b16 %v1532, %v1531
    %v2069 = vpack.c.b16 %v1534, %v1533
    %v2070 = vpack.c.b16 %v1536, %v1535
    %v2071 = vpack.c.b16 %v1538, %v1537
    %v2072 = vpack.c.b16 %v1540, %v1539
    %v2073 = vpack.c.b16 %v1542, %v1541
    %v2074 = vpack.c.b16 %v1544, %v1543
    %v2075 = vpack.c.b16 %v1546, %v1545
    %v2076 = vpack.c.b16 %v1548, %v1547
    %v2077 = vpack.c.b16 %v1550, %v1549
    %v2078 = vpack.c.b16 %v1552, %v1551
    %v2079 = vpack.c.b16 %v1554, %v1553
    %v2080 = vpack.c.b16 %v1556, %v1555
    %v2081 = vpack.c.b16 %v1558, %v1557
    %v2082 = vpack.c.b16 %v1560, %v1559
    %v2083 = vpack.c.b16 %v1562, %v1561
    %v2084 = vpack.c.b16 %v1564, %v1563
    %v2085 = vpack.c.b16 %v1566, %v1565
    %v2086 = vpack.c.b16 %v1568, %v1567
    %v2087 = vpack.c.b16 %v1570, %v1569
    %v2088 = vpack.c.b16 %v1572, %v1571
    %v2089 = vpack.c.b16 %v1574, %v1573
    %v2090 = vpack.c.b16 %v1576, %v1575
    %v2091 = vpack.c.b16 %v1578, %v1577
    %v2092 = vpack.c.b16 %v1580, %v1579
    %v2093 = vpack.c.b16 %v1582, %v1581
    %v2094 = vpack.c.b16 %v1584, %v1583
    %v2095 = vpack.c.b16 %v1586, %v1585
    %v2096 = vpack.c.b16 %v1588, %v1587
    %v2097 = vpack.c.b16 %v1590, %v1589
    %v2098 = vpack.c.b16 %v1592, %v1591
    %v2099 = vpack.c.b16 %v1594, %v1593
    %v2100 = vpack.c.b16 %v1596, %v1595
    %v2101 = vpack.c.b16 %v1598, %v1597
    %v2102 = vpack.c.b16 %v1600, %v1599
    %v2103 = vpack.c.b16 %v1602, %v1601
    %v2104 = vpack.c.b16 %v1604, %v1603
    %v2105 = vpack.c.b16 %v1606, %v1605
    %v2106 = vpack.c.b16 %v1608, %v1607
    %v2107 = vpack.c.b16 %v1610, %v1609
    %v2108 = vpack.c.b16 %v1612, %v1611
    %v2109 = vpack.c.b16 %v1614, %v1613
    %v2110 = vpack.c.b16 %v1616, %v1615
    %v2111 = vpack.c.b16 %v1618, %v1617
    %v2112 = vpack.c.b16 %v1620, %v1619
    %v2113 = vpack.c.b16 %v1622, %v1621
    %v2114 = vpack.c.b16 %v1624, %v1623
    %v2115 = vpack.c.b16 %v1626, %v1625
    %v2116 = vpack.c.b16 %v1628, %v1627
    %v2117 = vpack.c.b16 %v1630, %v1629
    %v2118 = vpack.c.b16 %v1632, %v1631
    %v2119 = vpack.c.b16 %v1634, %v1633
    %v2120 = vpack.c.b16 %v1636, %v1635
    %v2121 = vpack.c.b16 %v1638, %v1637
    %v2122 = vpack.c.b16 %v1640, %v1639
    %v2123 = vpack.c.b16 %v1642, %v1641
    %v2124 = vpack.c.b16 %v1644, %v1643
    %v2125 = vpack.c.b16 %v1646, %v1645
    %v2126 = vpack.c.b16 %v1648, %v1647
    %v2127 = vpack.c.b16 %v1650, %v1649
    %v2128 = vpack.c.b16 %v1652, %v1651
    %v2129 = vpack.c.b16 %v1654, %v1653
    %v2130 = vpack.c.b16 %v1656, %v1655
    %v2131 = vpack.c.b16 %v1658, %v1657
    %v2132 = vpack.c.b16 %v1660, %v1659
    %v2133 = vpack.c.b16 %v1662, %v1661
    %v2134 = vpack.c.b16 %v1664, %v1663
    %v2135 = vpack.c.b16 %v1666, %v1665
    %v2136 = vpack.c.b16 %v1668, %v1667
    %v2137 = vpack.c.b16 %v1670, %v1669
    %v2138 = vpack.c.b16 %v1672, %v1671
    %v2139 = vpack.c.b16 %v1674, %v1673
    %v2140 = vpack.c.b16 %v1676, %v1675
    %v2141 = vpack.c.b16 %v1678, %v1677
    %v2142 = vpack.c.b16 %v1680, %v1679
    %v2143 = vpack.c.b16 %v1682, %v1681
    %v2144 = vpack.c.b16 %v1684, %v1683
    %v2145 = vpack.c.b16 %v1686, %v1685
    %v2146 = vpack.c.b16 %v1688, %v1687
    %v2147 = vpack.c.b16 %v1690, %v1689
    %v2148 = vpack.c.b16 %v1692, %v1691
    %v2149 = vpack.c.b16 %v1694, %v1693
    %v2150 = vpack.c.b16 %v1696, %v1695
    %v2151 = vpack.c.b16 %v1698, %v1697
    %v2152 = vpack.c.b16 %v1700, %v1699
    %v2153 = vpack.c.b16 %v1702, %v1701
    %v2154 = vpack.c.b16 %v1704, %v1703
    %v2155 = vpack.c.b16 %v1706, %v1705
    %v2156 = vpack.c.b16 %v1708, %v1707
    %v2157 = vpack.c.b16 %v1710, %v1709
    %v2158 = vpack.c.b16 %v1712, %v1711
    %v2159 = vpack.c.b16 %v1714, %v1713
    %v2160 = vpack.c.b16 %v1716, %v1715
    %v2161 = vpack.c.b16 %v1718, %v1717
    %v2162 = vpack.c.b16 %v1720, %v1719
    %v2163 = vpack.c.b16 %v1722, %v1721
    %v2164 = vpack.c.b16 %v1724, %v1723
    %v2165 = vpack.c.b16 %v1726, %v1725
    %v2166 = vpack.c.b16 %v1728, %v1727
    %v2167 = vpack.c.b16 %v1730, %v1729
    %v2168 = vpack.c.b16 %v1732, %v1731
    %v2169 = vpack.c.b16 %v1734, %v1733
    %v2170 = vpack.c.b16 %v1736, %v1735
    %v2171 = vpack.c.b16 %v1738, %v1737
    %v2172 = vpack.c.b16 %v1740, %v1739
    %v2173 = vpack.c.b16 %v1742, %v1741
    %v2174 = vpack.c.b16 %v1744, %v1743
    %v2175 = vpack.c.b16 %v1746, %v1745
    %v2176 = vpack.c.b16 %v1748, %v1747
    %v2177 = vpack.c.b16 %v1750, %v1749
    %v2178 = vpack.c.b16 %v1752, %v1751
    %v2179 = vpack.c.b16 %v1754, %v1753
    %v2180 = vpack.c.b16 %v1756, %v1755
    %v2181 = vpack.c.b16 %v1758, %v1757
    %v2182 = vpack.c.b16 %v1760, %v1759
    %v2183 = vpack.c.b16 %v1762, %v1761
    %v2184 = vpack.c.b16 %v1764, %v1763
    %v2185 = vpack.c.b16 %v1766, %v1765
    %v2186 = vpack.c.b16 %v1768, %v1767
    %v2187 = vpack.c.b16 %v1770, %v1769
    %v2188 = vpack.c.b16 %v1772, %v1771
    %v2189 = vpack.c.b16 %v1774, %v1773
    %v2190 = vpack.c.b16 %v1776, %v1775
    %v2191 = vpack.c.b16 %v1778, %v1777
    %v2192 = vpack.c.b16 %v1780, %v1779
    %v2193 = vpack.c.b16 %v1782, %v1781
    %v2194 = vpack.c.b16 %v1784, %v1783
    %v2195 = vpack.c.b16 %v1786, %v1785
    %v2196 = vpack.c.b16 %v1788, %v1787
    %v2197 = vpack.c.b16 %v1790, %v1789
    %v2198 = vpack.c.b16 %v1792, %v1791
    %v2199 = vpack.c.b16 %v1794, %v1793
    %v2200 = vpack.c.b16 %v1796, %v1795
    %v2201 = vpack.c.b16 %v1798, %v1797
    %v2202 = vpack.c.b16 %v1800, %v1799
    %v2203 = vpack.c.b16 %v1802, %v1801
    %v2204 = vpack.c.b16 %v1804, %v1803
    %v2205 = vpack.c.b16 %v1806, %v1805
    %v2206 = vpack.c.b16 %v1808, %v1807
    %v2207 = vpack.c.b16 %v1810, %v1809
    %v2208 = vpack.c.b16 %v1812, %v1811
    %v2209 = vpack.c.b16 %v1814, %v1813
    %v2210 = vpack.c.b16 %v1816, %v1815
    %v2211 = vpack.c.b16 %v1818, %v1817
    %v2212 = vpack.c.b16 %v1820, %v1819
    %v2213 = vpack.c.b16 %v1822, %v1821
    %v2214 = vpack.c.b16 %v1824, %v1823
    %v2215 = vpack.c.b16 %v1826, %v1825
    %v2216 = vpack.c.b16 %v1828, %v1827
    %v2217 = vpack.c.b16 %v1830, %v1829
    %v2218 = vpack.c.b16 %v1832, %v1831
    %v2219 = vpack.c.b16 %v1834, %v1833
    %v2220 = vpack.c.b16 %v1836, %v1835
    %v2221 = vpack.c.b16 %v1838, %v1837
    %v2222 = vpack.c.b16 %v1840, %v1839
    %v2223 = vpack.c.b16 %v1842, %v1841
    %v2224 = vpack.c.b16 %v1844, %v1843
    %v2225 = vpack.c.b16 %v1846, %v1845
    %v2226 = vpack.c.b16 %v1848, %v1847
    %v2227 = vpack.c.b16 %v1850, %v1849
    %v2228 = vpack.c.b16 %v1852, %v1851
    %v2229 = vpack.c.b16 %v1854, %v1853
    %v2230 = vpack.c.b16 %v1856, %v1855
    %v2231 = vpack.c.b16 %v1858, %v1857
    %v2232 = vpack.c.b16 %v1860, %v1859
    %v2233 = vpack.c.b16 %v1862, %v1861
    %v2234 = vpack.c.b16 %v1864, %v1863
    %v2235 = vpack.c.b16 %v1866, %v1865
    %v2236 = vpack.c.b16 %v1868, %v1867
    %v2237 = vpack.c.b16 %v1870, %v1869
    %v2238 = vpack.c.b16 %v1872, %v1871
    %v2239 = vpack.c.b16 %v1874, %v1873
    %v2240 = vpack.c.b16 %v1876, %v1875
    %v2241 = vpack.c.b16 %v1878, %v1877
    %v2242 = vpack.c.b16 %v1880, %v1879
    %v2243 = vpack.c.b16 %v1882, %v1881
    %v2244 = vpack.c.b16 %v1884, %v1883
    %v2245 = vpack.c.b16 %v1886, %v1885
    %v2246 = vpack.c.b16 %v1888, %v1887
    %v2247 = vpack.c.b16 %v1890, %v1889
    %v2248 = vpack.c.b16 %v1892, %v1891
    %v2249 = vpack.c.b16 %v1894, %v1893
    %v2250 = vpack.c.b16 %v1896, %v1895
    %v2251 = vpack.c.b16 %v1898, %v1897
    %v2252 = vpack.c.b16 %v1900, %v1899
    %v2253 = vpack.c.b16 %v1902, %v1901
    %v2254 = vpack.c.b16 %v1904, %v1903
    %v2255 = vpack.c.b16 %v1906, %v1905
    %v2256 = vpack.c.b16 %v1908, %v1907
    %v2257 = vpack.c.b16 %v1910, %v1909
    %v2258 = vpack.c.b16 %v1912, %v1911
    %v2259 = vpack.c.b16 %v1914, %v1913
    %v2260 = vpack.c.b16 %v1916, %v1915
    %v2261 = vpack.c.b16 %v1918, %v1917
    %v2262 = vpack.c.b16 %v1920, %v1919
    %v2263 = vpack.c.b16 %v1922, %v1921
    %v2264 = vpack.c.b16 %v1924, %v1923
    %v2265 = vpack.c.b16 %v1926, %v1925
    %v2266 = vpack.c.b16 %v1928, %v1927
    %v2267 = vpack.c.b16 %v1930, %v1929
    %v2268 = vpack.c.b16 %v1932, %v1931
    %v2269 = vpack.c.b16 %v1934, %v1933
    %v2270 = vpack.c.b16 %v1936, %v1935
    %v2271 = vpack.c.b16 %v1938, %v1937
    %v2272 = vpack.c.b16 %v1940, %v1939
    %v2273 = vpack.c.b16 %v1942, %v1941
    %v2274 = vpack.c.b16 %v1944, %v1943
    %v2275 = vpack.c.b16 %v1946, %v1945
    %v2276 = vpack.c.b16 %v1948, %v1947
    %v2277 = vpack.c.b16 %v1950, %v1949
    %v2278 = vpack.c.b16 %v1952, %v1951
    %v2279 = vpack.c.b16 %v1954, %v1953
    %v2280 = vpack.c.b16 %v1956, %v1955
    %v2281 = vpack.c.b16 %v1958, %v1957
    %v2282 = vpack.c.b16 %v1960, %v1959
    %v2283 = vpack.c.b16 %v1962, %v1961
    %v2284 = vpack.c.b16 %v1964, %v1963
    %v2285 = vpack.c.b16 %v1966, %v1965
    %v2286 = vpack.c.b16 %v1968, %v1967
    %v2287 = vpack.c.b16 %v1970, %v1969
    %v2288 = vpack.c.b16 %v1972, %v1971
    %v2289 = vpack.c.b16 %v1974, %v1973
    %v2290 = vpack.c.b16 %v1976, %v1975
    %v2291 = vpack.c.b16 %v1978, %v1977
    %v2292 = vpack.c.b16 %v1980, %v1979
    %v2293 = vpack.c.b16 %v1982, %v1981
    %v2294 = vpack.c.b16 %v1984, %v1983
    %v2295 = vpack.c.b16 %v1986, %v1985
    %v2296 = vpack.c.b16 %v1988, %v1987
    %v2297 = vpack.c.b16 %v1990, %v1989
    %v2298 = vpack.c.b16 %v1992, %v1991
    %v2299 = vpack.c.b16 %v1994, %v1993
    %v2300 = vpack.c.b16 %v1996, %v1995
    %v2301 = vpack.c.b16 %v1998, %v1997
    %v2302 = vpack.c.b16 %v2000, %v1999
    %v2303 = vpack.c.b16 %v2002, %v2001
    %v2304 = vpack.c.b16 %v2004, %v2003
    %v2305 = vpack.c.b16 %v2006, %v2005
    %v2306 = vpack.c.b16 %v2008, %v2007
    %v2307 = vpack.c.b16 %v2010, %v2009
    %v2308 = vpack.c.b16 %v2012, %v2011
    %v2309 = vpack.c.b16 %v2014, %v2013
    %v2310 = vpack.c.b16 %v2016, %v2015
    %v2311 = vpack.c.b16 %v2018, %v2017
    %v2312 = vpack.c.b16 %v2020, %v2019
    %v2313 = vpack.c.b16 %v2022, %v2021
    %v2314 = vpack.c.b16 %v2024, %v2023
    %v2315 = vpack.c.b16 %v2026, %v2025
    %v2316 = vpack.c.b16 %v2028, %v2027
    %2605 = vmatprep.subr.bf16.mxu0 0
    %2606 = vmatpush1.bf16.msra.mxu0 %v2029
    %2607 = vmatprep.subr.bf16.mxu0 0
    %2608 = vmatpush1.bf16.msra.mxu0 %v2030
    %2609 = vmatprep.subr.bf16.mxu0 0
    %2610 = vmatpush1.bf16.msra.mxu0 %v2031
    %2611 = vmatprep.subr.bf16.mxu0 0
    %2612 = vmatpush1.bf16.msra.mxu0 %v2032
    %2613 = vmatprep.subr.bf16.mxu0 0
    %2614 = vmatpush1.bf16.msra.mxu0 %v2033
    %2615 = vmatprep.subr.bf16.mxu0 0
    %2616 = vmatpush1.bf16.msra.mxu0 %v2034
    %2617 = vmatprep.subr.bf16.mxu0 0
    %2618 = vmatpush1.bf16.msra.mxu0 %v2035
    %2619 = vmatprep.subr.bf16.mxu0 0
    %2620 = vmatpush1.bf16.msra.mxu0 %v2036
    %2621 = vmatprep.subr.bf16.mxu0 0
    %2622 = vmatpush1.bf16.msra.mxu0 %v2037
    %2623 = vmatprep.subr.bf16.mxu0 0
    %2624 = vmatpush1.bf16.msra.mxu0 %v2038
    %2625 = vmatprep.subr.bf16.mxu0 0
    %2626 = vmatpush1.bf16.msra.mxu0 %v2039
    %2627 = vmatprep.subr.bf16.mxu0 0
    %2628 = vmatpush1.bf16.msra.mxu0 %v2040
    %2629 = vmatprep.subr.bf16.mxu0 0
    %2630 = vmatpush1.bf16.msra.mxu0 %v2041
    %2631 = vmatprep.subr.bf16.mxu0 0
    %2632 = vmatpush1.bf16.msra.mxu0 %v2042
    %2633 = vmatprep.subr.bf16.mxu0 0
    %2634 = vmatpush1.bf16.msra.mxu0 %v2043
    %2635 = vmatprep.subr.bf16.mxu0 0
    %2636 = vmatpush1.bf16.msra.mxu0 %v2044
    %2637 = vmatprep.mubr.bf16.mxu0 %v658
    %2638 = vmatmul.mubr.bf16.gmra.mrb[0].mxu0 %v644
    %v2639 = vpop.f32.mrb[0].mxu0
    %v2640 = vadd.f32 %v614, %v2639
    %v2641 = vpop.f32.mrb[0].mxu0
    %v2642 = vpop.f32.mrb[0].mxu0
    %v2643 = vpop.f32.mrb[0].mxu0
    %2644 = vdwg.mxu0
    %2645 = vmatprep.subr.bf16.mxu0 0
    %2646 = vmatpush1.bf16.msra.mxu0 %v2045
    %2647 = vmatprep.subr.bf16.mxu0 0
    %2648 = vmatpush1.bf16.msra.mxu0 %v2046
    %2649 = vmatprep.subr.bf16.mxu0 0
    %2650 = vmatpush1.bf16.msra.mxu0 %v2047
    %2651 = vmatprep.subr.bf16.mxu0 0
    %2652 = vmatpush1.bf16.msra.mxu0 %v2048
    %2653 = vmatprep.subr.bf16.mxu0 0
    %2654 = vmatpush1.bf16.msra.mxu0 %v2049
    %2655 = vmatprep.subr.bf16.mxu0 0
    %2656 = vmatpush1.bf16.msra.mxu0 %v2050
    %2657 = vmatprep.subr.bf16.mxu0 0
    %2658 = vmatpush1.bf16.msra.mxu0 %v2051
    %2659 = vmatprep.subr.bf16.mxu0 0
    %2660 = vmatpush1.bf16.msra.mxu0 %v2052
    %2661 = vmatprep.subr.bf16.mxu0 0
    %2662 = vmatpush1.bf16.msra.mxu0 %v2053
    %2663 = vmatprep.subr.bf16.mxu0 0
    %2664 = vmatpush1.bf16.msra.mxu0 %v2054
    %2665 = vmatprep.subr.bf16.mxu0 0
    %2666 = vmatpush1.bf16.msra.mxu0 %v2055
    %2667 = vmatprep.subr.bf16.mxu0 0
    %2668 = vmatpush1.bf16.msra.mxu0 %v2056
    %2669 = vmatprep.subr.bf16.mxu0 0
    %2670 = vmatpush1.bf16.msra.mxu0 %v2057
    %2671 = vmatprep.subr.bf16.mxu0 0
    %2672 = vmatpush1.bf16.msra.mxu0 %v2058
    %2673 = vmatprep.subr.bf16.mxu0 0
    %2674 = vmatpush1.bf16.msra.mxu0 %v2059
    %2675 = vmatprep.subr.bf16.mxu0 0
    %2676 = vmatpush1.bf16.msra.mxu0 %v2060
    %2677 = vmatprep.mubr.bf16.mxu0 %v668
    %2678 = vmatmul.mubr.bf16.gmra.mrb[0].mxu0 %v666
    %v2679 = vpop.f32.mrb[0].mxu0
    %v2680 = vadd.f32 %v2640, %v2679
    %v2681 = vpop.f32.mrb[0].mxu0
    %v2682 = vpop.f32.mrb[0].mxu0
    %v2683 = vpop.f32.mrb[0].mxu0
    %2684 = vdwg.mxu0
    %2685 = vmatprep.subr.bf16.mxu0 0
    %2686 = vmatpush1.bf16.msra.mxu0 %v2061
    %2687 = vmatprep.subr.bf16.mxu0 0
    %2688 = vmatpush1.bf16.msra.mxu0 %v2062
    %2689 = vmatprep.subr.bf16.mxu0 0
    %2690 = vmatpush1.bf16.msra.mxu0 %v2063
    %2691 = vmatprep.subr.bf16.mxu0 0
    %2692 = vmatpush1.bf16.msra.mxu0 %v2064
    %2693 = vmatprep.subr.bf16.mxu0 0
    %2694 = vmatpush1.bf16.msra.mxu0 %v2065
    %2695 = vmatprep.subr.bf16.mxu0 0
    %2696 = vmatpush1.bf16.msra.mxu0 %v2066
    %2697 = vmatprep.subr.bf16.mxu0 0
    %2698 = vmatpush1.bf16.msra.mxu0 %v2067
    %2699 = vmatprep.subr.bf16.mxu0 0
    %2700 = vmatpush1.bf16.msra.mxu0 %v2068
    %2701 = vmatprep.subr.bf16.mxu0 0
    %2702 = vmatpush1.bf16.msra.mxu0 %v2069
    %2703 = vmatprep.subr.bf16.mxu0 0
    %2704 = vmatpush1.bf16.msra.mxu0 %v2070
    %2705 = vmatprep.subr.bf16.mxu0 0
    %2706 = vmatpush1.bf16.msra.mxu0 %v2071
    %2707 = vmatprep.subr.bf16.mxu0 0
    %2708 = vmatpush1.bf16.msra.mxu0 %v2072
    %2709 = vmatprep.subr.bf16.mxu0 0
    %2710 = vmatpush1.bf16.msra.mxu0 %v2073
    %2711 = vmatprep.subr.bf16.mxu0 0
    %2712 = vmatpush1.bf16.msra.mxu0 %v2074
    %2713 = vmatprep.subr.bf16.mxu0 0
    %2714 = vmatpush1.bf16.msra.mxu0 %v2075
    %2715 = vmatprep.subr.bf16.mxu0 0
    %2716 = vmatpush1.bf16.msra.mxu0 %v2076
    %2717 = vmatprep.mubr.bf16.mxu0 %v665
    %2718 = vmatmul.mubr.bf16.gmra.mrb[0].mxu0 %v651
    %v2719 = vpop.f32.mrb[0].mxu0
    %v2720 = vadd.f32 %v2680, %v2719
    %v2721 = vpop.f32.mrb[0].mxu0
    %v2722 = vpop.f32.mrb[0].mxu0
    %v2723 = vpop.f32.mrb[0].mxu0
    %2724 = vdwg.mxu0
    %2725 = vmatprep.subr.bf16.mxu0 0
    %2726 = vmatpush1.bf16.msra.mxu0 %v2077
    %2727 = vmatprep.subr.bf16.mxu0 0
    %2728 = vmatpush1.bf16.msra.mxu0 %v2078
    %2729 = vmatprep.subr.bf16.mxu0 0
    %2730 = vmatpush1.bf16.msra.mxu0 %v2079
    %2731 = vmatprep.subr.bf16.mxu0 0
    %2732 = vmatpush1.bf16.msra.mxu0 %v2080
    %2733 = vmatprep.subr.bf16.mxu0 0
    %2734 = vmatpush1.bf16.msra.mxu0 %v2081
    %2735 = vmatprep.subr.bf16.mxu0 0
    %2736 = vmatpush1.bf16.msra.mxu0 %v2082
    %2737 = vmatprep.subr.bf16.mxu0 0
    %2738 = vmatpush1.bf16.msra.mxu0 %v2083
    %2739 = vmatprep.subr.bf16.mxu0 0
    %2740 = vmatpush1.bf16.msra.mxu0 %v2084
    %2741 = vmatprep.subr.bf16.mxu0 0
    %2742 = vmatpush1.bf16.msra.mxu0 %v2085
    %2743 = vmatprep.subr.bf16.mxu0 0
    %2744 = vmatpush1.bf16.msra.mxu0 %v2086
    %2745 = vmatprep.subr.bf16.mxu0 0
    %2746 = vmatpush1.bf16.msra.mxu0 %v2087
    %2747 = vmatprep.subr.bf16.mxu0 0
    %2748 = vmatpush1.bf16.msra.mxu0 %v2088
    %2749 = vmatprep.subr.bf16.mxu0 0
    %2750 = vmatpush1.bf16.msra.mxu0 %v2089
    %2751 = vmatprep.subr.bf16.mxu0 0
    %2752 = vmatpush1.bf16.msra.mxu0 %v2090
    %2753 = vmatprep.subr.bf16.mxu0 0
    %2754 = vmatpush1.bf16.msra.mxu0 %v2091
    %2755 = vmatprep.subr.bf16.mxu0 0
    %2756 = vmatpush1.bf16.msra.mxu0 %v2092
    %2757 = vmatprep.mubr.bf16.mxu0 %v669
    %2758 = vmatmul.mubr.bf16.gmra.mrb[0].mxu0 %v667
    %v2759 = vpop.f32.mrb[0].mxu0
    %v2760 = vadd.f32 %v2720, %v2759
    %v2761 = vpop.f32.mrb[0].mxu0
    %v2762 = vpop.f32.mrb[0].mxu0
    %v2763 = vpop.f32.mrb[0].mxu0
    %2764 = vdwg.mxu0
    %2765 = vmatprep.subr.bf16.mxu0 0
    %2766 = vmatpush1.bf16.msra.mxu0 %v2093
    %2767 = vmatprep.subr.bf16.mxu0 0
    %2768 = vmatpush1.bf16.msra.mxu0 %v2094
    %2769 = vmatprep.subr.bf16.mxu0 0
    %2770 = vmatpush1.bf16.msra.mxu0 %v2095
    %2771 = vmatprep.subr.bf16.mxu0 0
    %2772 = vmatpush1.bf16.msra.mxu0 %v2096
    %2773 = vmatprep.subr.bf16.mxu0 0
    %2774 = vmatpush1.bf16.msra.mxu0 %v2097
    %2775 = vmatprep.subr.bf16.mxu0 0
    %2776 = vmatpush1.bf16.msra.mxu0 %v2098
    %2777 = vmatprep.subr.bf16.mxu0 0
    %2778 = vmatpush1.bf16.msra.mxu0 %v2099
    %2779 = vmatprep.subr.bf16.mxu0 0
    %2780 = vmatpush1.bf16.msra.mxu0 %v2100
    %2781 = vmatprep.subr.bf16.mxu0 0
    %2782 = vmatpush1.bf16.msra.mxu0 %v2101
    %2783 = vmatprep.subr.bf16.mxu0 0
    %2784 = vmatpush1.bf16.msra.mxu0 %v2102
    %2785 = vmatprep.subr.bf16.mxu0 0
    %2786 = vmatpush1.bf16.msra.mxu0 %v2103
    %2787 = vmatprep.subr.bf16.mxu0 0
    %2788 = vmatpush1.bf16.msra.mxu0 %v2104
    %2789 = vmatprep.subr.bf16.mxu0 0
    %2790 = vmatpush1.bf16.msra.mxu0 %v2105
    %2791 = vmatprep.subr.bf16.mxu0 0
    %2792 = vmatpush1.bf16.msra.mxu0 %v2106
    %2793 = vmatprep.subr.bf16.mxu0 0
    %2794 = vmatpush1.bf16.msra.mxu0 %v2107
    %2795 = vmatprep.subr.bf16.mxu0 0
    %2796 = vmatpush1.bf16.msra.mxu0 %v2108
    %2797 = vmatprep.mubr.bf16.mxu0 %v707
    %2798 = vmatmul.mubr.bf16.gmra.mrb[0].mxu0 %v693
    %v2799 = vpop.f32.mrb[0].mxu0
    %v2800 = vadd.f32 %v2760, %v2799
    %v2801 = vpop.f32.mrb[0].mxu0
    %v2802 = vpop.f32.mrb[0].mxu0
    %v2803 = vpop.f32.mrb[0].mxu0
    %2804 = vdwg.mxu0
    %2805 = vmatprep.subr.bf16.mxu0 0
    %2806 = vmatpush1.bf16.msra.mxu0 %v2109
    %2807 = vmatprep.subr.bf16.mxu0 0
    %2808 = vmatpush1.bf16.msra.mxu0 %v2110
    %2809 = vmatprep.subr.bf16.mxu0 0
    %2810 = vmatpush1.bf16.msra.mxu0 %v2111
    %2811 = vmatprep.subr.bf16.mxu0 0
    %2812 = vmatpush1.bf16.msra.mxu0 %v2112
    %2813 = vmatprep.subr.bf16.mxu0 0
    %2814 = vmatpush1.bf16.msra.mxu0 %v2113
    %2815 = vmatprep.subr.bf16.mxu0 0
    %2816 = vmatpush1.bf16.msra.mxu0 %v2114
    %2817 = vmatprep.subr.bf16.mxu0 0
    %2818 = vmatpush1.bf16.msra.mxu0 %v2115
    %2819 = vmatprep.subr.bf16.mxu0 0
    %2820 = vmatpush1.bf16.msra.mxu0 %v2116
    %2821 = vmatprep.subr.bf16.mxu0 0
    %2822 = vmatpush1.bf16.msra.mxu0 %v2117
    %2823 = vmatprep.subr.bf16.mxu0 0
    %2824 = vmatpush1.bf16.msra.mxu0 %v2118
    %2825 = vmatprep.subr.bf16.mxu0 0
    %2826 = vmatpush1.bf16.msra.mxu0 %v2119
    %2827 = vmatprep.subr.bf16.mxu0 0
    %2828 = vmatpush1.bf16.msra.mxu0 %v2120
    %2829 = vmatprep.subr.bf16.mxu0 0
    %2830 = vmatpush1.bf16.msra.mxu0 %v2121
    %2831 = vmatprep.subr.bf16.mxu0 0
    %2832 = vmatpush1.bf16.msra.mxu0 %v2122
    %2833 = vmatprep.subr.bf16.mxu0 0
    %2834 = vmatpush1.bf16.msra.mxu0 %v2123
    %2835 = vmatprep.subr.bf16.mxu0 0
    %2836 = vmatpush1.bf16.msra.mxu0 %v2124
    %2837 = vmatprep.mubr.bf16.mxu0 %v717
    %2838 = vmatmul.mubr.bf16.gmra.mrb[0].mxu0 %v715
    %v2839 = vpop.f32.mrb[0].mxu0
    %v2840 = vadd.f32 %v2800, %v2839
    %v2841 = vpop.f32.mrb[0].mxu0
    %v2842 = vpop.f32.mrb[0].mxu0
    %v2843 = vpop.f32.mrb[0].mxu0
    %2844 = vdwg.mxu0
    %2845 = vmatprep.subr.bf16.mxu0 0
    %2846 = vmatpush1.bf16.msra.mxu0 %v2125
    %2847 = vmatprep.subr.bf16.mxu0 0
    %2848 = vmatpush1.bf16.msra.mxu0 %v2126
    %2849 = vmatprep.subr.bf16.mxu0 0
    %2850 = vmatpush1.bf16.msra.mxu0 %v2127
    %2851 = vmatprep.subr.bf16.mxu0 0
    %2852 = vmatpush1.bf16.msra.mxu0 %v2128
    %2853 = vmatprep.subr.bf16.mxu0 0
    %2854 = vmatpush1.bf16.msra.mxu0 %v2129
    %2855 = vmatprep.subr.bf16.mxu0 0
    %2856 = vmatpush1.bf16.msra.mxu0 %v2130
    %2857 = vmatprep.subr.bf16.mxu0 0
    %2858 = vmatpush1.bf16.msra.mxu0 %v2131
    %2859 = vmatprep.subr.bf16.mxu0 0
    %2860 = vmatpush1.bf16.msra.mxu0 %v2132
    %2861 = vmatprep.subr.bf16.mxu0 0
    %2862 = vmatpush1.bf16.msra.mxu0 %v2133
    %2863 = vmatprep.subr.bf16.mxu0 0
    %2864 = vmatpush1.bf16.msra.mxu0 %v2134
    %2865 = vmatprep.subr.bf16.mxu0 0
    %2866 = vmatpush1.bf16.msra.mxu0 %v2135
    %2867 = vmatprep.subr.bf16.mxu0 0
    %2868 = vmatpush1.bf16.msra.mxu0 %v2136
    %2869 = vmatprep.subr.bf16.mxu0 0
    %2870 = vmatpush1.bf16.msra.mxu0 %v2137
    %2871 = vmatprep.subr.bf16.mxu0 0
    %2872 = vmatpush1.bf16.msra.mxu0 %v2138
    %2873 = vmatprep.subr.bf16.mxu0 0
    %2874 = vmatpush1.bf16.msra.mxu0 %v2139
    %2875 = vmatprep.subr.bf16.mxu0 0
    %2876 = vmatpush1.bf16.msra.mxu0 %v2140
    %2877 = vmatprep.mubr.bf16.mxu0 %v714
    %2878 = vmatmul.mubr.bf16.gmra.mrb[0].mxu0 %v700
    %v2879 = vpop.f32.mrb[0].mxu0
    %v2880 = vadd.f32 %v2840, %v2879
    %v2881 = vpop.f32.mrb[0].mxu0
    %v2882 = vpop.f32.mrb[0].mxu0
    %v2883 = vpop.f32.mrb[0].mxu0
    %2884 = vdwg.mxu0
    %2885 = vmatprep.subr.bf16.mxu0 0
    %2886 = vmatpush1.bf16.msra.mxu0 %v2141
    %2887 = vmatprep.subr.bf16.mxu0 0
    %2888 = vmatpush1.bf16.msra.mxu0 %v2142
    %2889 = vmatprep.subr.bf16.mxu0 0
    %2890 = vmatpush1.bf16.msra.mxu0 %v2143
    %2891 = vmatprep.subr.bf16.mxu0 0
    %2892 = vmatpush1.bf16.msra.mxu0 %v2144
    %2893 = vmatprep.subr.bf16.mxu0 0
    %2894 = vmatpush1.bf16.msra.mxu0 %v2145
    %2895 = vmatprep.subr.bf16.mxu0 0
    %2896 = vmatpush1.bf16.msra.mxu0 %v2146
    %2897 = vmatprep.subr.bf16.mxu0 0
    %2898 = vmatpush1.bf16.msra.mxu0 %v2147
    %2899 = vmatprep.subr.bf16.mxu0 0
    %2900 = vmatpush1.bf16.msra.mxu0 %v2148
    %2901 = vmatprep.subr.bf16.mxu0 0
    %2902 = vmatpush1.bf16.msra.mxu0 %v2149
    %2903 = vmatprep.subr.bf16.mxu0 0
    %2904 = vmatpush1.bf16.msra.mxu0 %v2150
    %2905 = vmatprep.subr.bf16.mxu0 0
    %2906 = vmatpush1.bf16.msra.mxu0 %v2151
    %2907 = vmatprep.subr.bf16.mxu0 0
    %2908 = vmatpush1.bf16.msra.mxu0 %v2152
    %2909 = vmatprep.subr.bf16.mxu0 0
    %2910 = vmatpush1.bf16.msra.mxu0 %v2153
    %2911 = vmatprep.subr.bf16.mxu0 0
    %2912 = vmatpush1.bf16.msra.mxu0 %v2154
    %2913 = vmatprep.subr.bf16.mxu0 0
    %2914 = vmatpush1.bf16.msra.mxu0 %v2155
    %2915 = vmatprep.subr.bf16.mxu0 0
    %2916 = vmatpush1.bf16.msra.mxu0 %v2156
    %2917 = vmatprep.mubr.bf16.mxu0 %v718
    %2918 = vmatmul.mubr.bf16.gmra.mrb[0].mxu0 %v716
    %v2919 = vpop.f32.mrb[0].mxu0
    %v2920 = vadd.f32 %v2880, %v2919
    %v2921 = vpop.f32.mrb[0].mxu0
    %v2922 = vpop.f32.mrb[0].mxu0
    %v2923 = vpop.f32.mrb[0].mxu0
    %2924 = vdwg.mxu0
    %2925 = vmatprep.subr.bf16.mxu0 0
    %2926 = vmatpush1.bf16.msra.mxu0 %v2157
    %2927 = vmatprep.subr.bf16.mxu0 0
    %2928 = vmatpush1.bf16.msra.mxu0 %v2158
    %2929 = vmatprep.subr.bf16.mxu0 0
    %2930 = vmatpush1.bf16.msra.mxu0 %v2159
    %2931 = vmatprep.subr.bf16.mxu0 0
    %2932 = vmatpush1.bf16.msra.mxu0 %v2160
    %2933 = vmatprep.subr.bf16.mxu0 0
    %2934 = vmatpush1.bf16.msra.mxu0 %v2161
    %2935 = vmatprep.subr.bf16.mxu0 0
    %2936 = vmatpush1.bf16.msra.mxu0 %v2162
    %2937 = vmatprep.subr.bf16.mxu0 0
    %2938 = vmatpush1.bf16.msra.mxu0 %v2163
    %2939 = vmatprep.subr.bf16.mxu0 0
    %2940 = vmatpush1.bf16.msra.mxu0 %v2164
    %2941 = vmatprep.subr.bf16.mxu0 0
    %2942 = vmatpush1.bf16.msra.mxu0 %v2165
    %2943 = vmatprep.subr.bf16.mxu0 0
    %2944 = vmatpush1.bf16.msra.mxu0 %v2166
    %2945 = vmatprep.subr.bf16.mxu0 0
    %2946 = vmatpush1.bf16.msra.mxu0 %v2167
    %2947 = vmatprep.subr.bf16.mxu0 0
    %2948 = vmatpush1.bf16.msra.mxu0 %v2168
    %2949 = vmatprep.subr.bf16.mxu0 0
    %2950 = vmatpush1.bf16.msra.mxu0 %v2169
    %2951 = vmatprep.subr.bf16.mxu0 0
    %2952 = vmatpush1.bf16.msra.mxu0 %v2170
    %2953 = vmatprep.subr.bf16.mxu0 0
    %2954 = vmatpush1.bf16.msra.mxu0 %v2171
    %2955 = vmatprep.subr.bf16.mxu0 0
    %2956 = vmatpush1.bf16.msra.mxu0 %v2172
    %2957 = vmatprep.mubr.bf16.mxu0 %v756
    %2958 = vmatmul.mubr.bf16.gmra.mrb[0].mxu0 %v742
    %v2959 = vpop.f32.mrb[0].mxu0
    %v2960 = vadd.f32 %v2920, %v2959
    %v2961 = vpop.f32.mrb[0].mxu0
    %v2962 = vpop.f32.mrb[0].mxu0
    %v2963 = vpop.f32.mrb[0].mxu0
    %2964 = vdwg.mxu0
    %2965 = vmatprep.subr.bf16.mxu0 0
    %2966 = vmatpush1.bf16.msra.mxu0 %v2173
    %2967 = vmatprep.subr.bf16.mxu0 0
    %2968 = vmatpush1.bf16.msra.mxu0 %v2174
    %2969 = vmatprep.subr.bf16.mxu0 0
    %2970 = vmatpush1.bf16.msra.mxu0 %v2175
    %2971 = vmatprep.subr.bf16.mxu0 0
    %2972 = vmatpush1.bf16.msra.mxu0 %v2176
    %2973 = vmatprep.subr.bf16.mxu0 0
    %2974 = vmatpush1.bf16.msra.mxu0 %v2177
    %2975 = vmatprep.subr.bf16.mxu0 0
    %2976 = vmatpush1.bf16.msra.mxu0 %v2178
    %2977 = vmatprep.subr.bf16.mxu0 0
    %2978 = vmatpush1.bf16.msra.mxu0 %v2179
    %2979 = vmatprep.subr.bf16.mxu0 0
    %2980 = vmatpush1.bf16.msra.mxu0 %v2180
    %2981 = vmatprep.subr.bf16.mxu0 0
    %2982 = vmatpush1.bf16.msra.mxu0 %v2181
    %2983 = vmatprep.subr.bf16.mxu0 0
    %2984 = vmatpush1.bf16.msra.mxu0 %v2182
    %2985 = vmatprep.subr.bf16.mxu0 0
    %2986 = vmatpush1.bf16.msra.mxu0 %v2183
    %2987 = vmatprep.subr.bf16.mxu0 0
    %2988 = vmatpush1.bf16.msra.mxu0 %v2184
    %2989 = vmatprep.subr.bf16.mxu0 0
    %2990 = vmatpush1.bf16.msra.mxu0 %v2185
    %2991 = vmatprep.subr.bf16.mxu0 0
    %2992 = vmatpush1.bf16.msra.mxu0 %v2186
    %2993 = vmatprep.subr.bf16.mxu0 0
    %2994 = vmatpush1.bf16.msra.mxu0 %v2187
    %2995 = vmatprep.subr.bf16.mxu0 0
    %2996 = vmatpush1.bf16.msra.mxu0 %v2188
    %2997 = vmatprep.mubr.bf16.mxu0 %v766
    %2998 = vmatmul.mubr.bf16.gmra.mrb[0].mxu0 %v764
    %v2999 = vpop.f32.mrb[0].mxu0
    %v3000 = vadd.f32 %v2960, %v2999
    %v3001 = vpop.f32.mrb[0].mxu0
    %v3002 = vpop.f32.mrb[0].mxu0
    %v3003 = vpop.f32.mrb[0].mxu0
    %3004 = vdwg.mxu0
    %3005 = vmatprep.subr.bf16.mxu0 0
    %3006 = vmatpush1.bf16.msra.mxu0 %v2189
    %3007 = vmatprep.subr.bf16.mxu0 0
    %3008 = vmatpush1.bf16.msra.mxu0 %v2190
    %3009 = vmatprep.subr.bf16.mxu0 0
    %3010 = vmatpush1.bf16.msra.mxu0 %v2191
    %3011 = vmatprep.subr.bf16.mxu0 0
    %3012 = vmatpush1.bf16.msra.mxu0 %v2192
    %3013 = vmatprep.subr.bf16.mxu0 0
    %3014 = vmatpush1.bf16.msra.mxu0 %v2193
    %3015 = vmatprep.subr.bf16.mxu0 0
    %3016 = vmatpush1.bf16.msra.mxu0 %v2194
    %3017 = vmatprep.subr.bf16.mxu0 0
    %3018 = vmatpush1.bf16.msra.mxu0 %v2195
    %3019 = vmatprep.subr.bf16.mxu0 0
    %3020 = vmatpush1.bf16.msra.mxu0 %v2196
    %3021 = vmatprep.subr.bf16.mxu0 0
    %3022 = vmatpush1.bf16.msra.mxu0 %v2197
    %3023 = vmatprep.subr.bf16.mxu0 0
    %3024 = vmatpush1.bf16.msra.mxu0 %v2198
    %3025 = vmatprep.subr.bf16.mxu0 0
    %3026 = vmatpush1.bf16.msra.mxu0 %v2199
    %3027 = vmatprep.subr.bf16.mxu0 0
    %3028 = vmatpush1.bf16.msra.mxu0 %v2200
    %3029 = vmatprep.subr.bf16.mxu0 0
    %3030 = vmatpush1.bf16.msra.mxu0 %v2201
    %3031 = vmatprep.subr.bf16.mxu0 0
    %3032 = vmatpush1.bf16.msra.mxu0 %v2202
    %3033 = vmatprep.subr.bf16.mxu0 0
    %3034 = vmatpush1.bf16.msra.mxu0 %v2203
    %3035 = vmatprep.subr.bf16.mxu0 0
    %3036 = vmatpush1.bf16.msra.mxu0 %v2204
    %3037 = vmatprep.mubr.bf16.mxu0 %v763
    %3038 = vmatmul.mubr.bf16.gmra.mrb[0].mxu0 %v749
    %v3039 = vpop.f32.mrb[0].mxu0
    %v3040 = vadd.f32 %v3000, %v3039
    %v3041 = vpop.f32.mrb[0].mxu0
    %v3042 = vpop.f32.mrb[0].mxu0
    %v3043 = vpop.f32.mrb[0].mxu0
    %3044 = vdwg.mxu0
    %3045 = vmatprep.subr.bf16.mxu0 0
    %3046 = vmatpush1.bf16.msra.mxu0 %v2205
    %3047 = vmatprep.subr.bf16.mxu0 0
    %3048 = vmatpush1.bf16.msra.mxu0 %v2206
    %3049 = vmatprep.subr.bf16.mxu0 0
    %3050 = vmatpush1.bf16.msra.mxu0 %v2207
    %3051 = vmatprep.subr.bf16.mxu0 0
    %3052 = vmatpush1.bf16.msra.mxu0 %v2208
    %3053 = vmatprep.subr.bf16.mxu0 0
    %3054 = vmatpush1.bf16.msra.mxu0 %v2209
    %3055 = vmatprep.subr.bf16.mxu0 0
    %3056 = vmatpush1.bf16.msra.mxu0 %v2210
    %3057 = vmatprep.subr.bf16.mxu0 0
    %3058 = vmatpush1.bf16.msra.mxu0 %v2211
    %3059 = vmatprep.subr.bf16.mxu0 0
    %3060 = vmatpush1.bf16.msra.mxu0 %v2212
    %3061 = vmatprep.subr.bf16.mxu0 0
    %3062 = vmatpush1.bf16.msra.mxu0 %v2213
    %3063 = vmatprep.subr.bf16.mxu0 0
    %3064 = vmatpush1.bf16.msra.mxu0 %v2214
    %3065 = vmatprep.subr.bf16.mxu0 0
    %3066 = vmatpush1.bf16.msra.mxu0 %v2215
    %3067 = vmatprep.subr.bf16.mxu0 0
    %3068 = vmatpush1.bf16.msra.mxu0 %v2216
    %3069 = vmatprep.subr.bf16.mxu0 0
    %3070 = vmatpush1.bf16.msra.mxu0 %v2217
    %3071 = vmatprep.subr.bf16.mxu0 0
    %3072 = vmatpush1.bf16.msra.mxu0 %v2218
    %3073 = vmatprep.subr.bf16.mxu0 0
    %3074 = vmatpush1.bf16.msra.mxu0 %v2219
    %3075 = vmatprep.subr.bf16.mxu0 0
    %3076 = vmatpush1.bf16.msra.mxu0 %v2220
    %3077 = vmatprep.mubr.bf16.mxu0 %v767
    %3078 = vmatmul.mubr.bf16.gmra.mrb[0].mxu0 %v765
    %v3079 = vpop.f32.mrb[0].mxu0
    %v3080 = vadd.f32 %v3040, %v3079
    %v3081 = vpop.f32.mrb[0].mxu0
    %v3082 = vpop.f32.mrb[0].mxu0
    %v3083 = vpop.f32.mrb[0].mxu0
    %3084 = vdwg.mxu0
    %3085 = vmatprep.subr.bf16.mxu0 0
    %3086 = vmatpush1.bf16.msra.mxu0 %v2221
    %3087 = vmatprep.subr.bf16.mxu0 0
    %3088 = vmatpush1.bf16.msra.mxu0 %v2222
    %3089 = vmatprep.subr.bf16.mxu0 0
    %3090 = vmatpush1.bf16.msra.mxu0 %v2223
    %3091 = vmatprep.subr.bf16.mxu0 0
    %3092 = vmatpush1.bf16.msra.mxu0 %v2224
    %3093 = vmatprep.subr.bf16.mxu0 0
    %3094 = vmatpush1.bf16.msra.mxu0 %v2225
    %3095 = vmatprep.subr.bf16.mxu0 0
    %3096 = vmatpush1.bf16.msra.mxu0 %v2226
    %3097 = vmatprep.subr.bf16.mxu0 0
    %3098 = vmatpush1.bf16.msra.mxu0 %v2227
    %3099 = vmatprep.subr.bf16.mxu0 0
    %3100 = vmatpush1.bf16.msra.mxu0 %v2228
    %3101 = vmatprep.subr.bf16.mxu0 0
    %3102 = vmatpush1.bf16.msra.mxu0 %v2229
    %3103 = vmatprep.subr.bf16.mxu0 0
    %3104 = vmatpush1.bf16.msra.mxu0 %v2230
    %3105 = vmatprep.subr.bf16.mxu0 0
    %3106 = vmatpush1.bf16.msra.mxu0 %v2231
    %3107 = vmatprep.subr.bf16.mxu0 0
    %3108 = vmatpush1.bf16.msra.mxu0 %v2232
    %3109 = vmatprep.subr.bf16.mxu0 0
    %3110 = vmatpush1.bf16.msra.mxu0 %v2233
    %3111 = vmatprep.subr.bf16.mxu0 0
    %3112 = vmatpush1.bf16.msra.mxu0 %v2234
    %3113 = vmatprep.subr.bf16.mxu0 0
    %3114 = vmatpush1.bf16.msra.mxu0 %v2235
    %3115 = vmatprep.subr.bf16.mxu0 0
    %3116 = vmatpush1.bf16.msra.mxu0 %v2236
    %3117 = vmatprep.mubr.bf16.mxu0 %v805
    %3118 = vmatmul.mubr.bf16.gmra.mrb[0].mxu0 %v791
    %v3119 = vpop.f32.mrb[0].mxu0
    %v3120 = vadd.f32 %v3080, %v3119
    %v3121 = vpop.f32.mrb[0].mxu0
    %v3122 = vpop.f32.mrb[0].mxu0
    %v3123 = vpop.f32.mrb[0].mxu0
    %3124 = vdwg.mxu0
    %3125 = vmatprep.subr.bf16.mxu0 0
    %3126 = vmatpush1.bf16.msra.mxu0 %v2237
    %3127 = vmatprep.subr.bf16.mxu0 0
    %3128 = vmatpush1.bf16.msra.mxu0 %v2238
    %3129 = vmatprep.subr.bf16.mxu0 0
    %3130 = vmatpush1.bf16.msra.mxu0 %v2239
    %3131 = vmatprep.subr.bf16.mxu0 0
    %3132 = vmatpush1.bf16.msra.mxu0 %v2240
    %3133 = vmatprep.subr.bf16.mxu0 0
    %3134 = vmatpush1.bf16.msra.mxu0 %v2241
    %3135 = vmatprep.subr.bf16.mxu0 0
    %3136 = vmatpush1.bf16.msra.mxu0 %v2242
    %3137 = vmatprep.subr.bf16.mxu0 0
    %3138 = vmatpush1.bf16.msra.mxu0 %v2243
    %3139 = vmatprep.subr.bf16.mxu0 0
    %3140 = vmatpush1.bf16.msra.mxu0 %v2244
    %3141 = vmatprep.subr.bf16.mxu0 0
    %3142 = vmatpush1.bf16.msra.mxu0 %v2245
    %3143 = vmatprep.subr.bf16.mxu0 0
    %3144 = vmatpush1.bf16.msra.mxu0 %v2246
    %3145 = vmatprep.subr.bf16.mxu0 0
    %3146 = vmatpush1.bf16.msra.mxu0 %v2247
    %3147 = vmatprep.subr.bf16.mxu0 0
    %3148 = vmatpush1.bf16.msra.mxu0 %v2248
    %3149 = vmatprep.subr.bf16.mxu0 0
    %3150 = vmatpush1.bf16.msra.mxu0 %v2249
    %3151 = vmatprep.subr.bf16.mxu0 0
    %3152 = vmatpush1.bf16.msra.mxu0 %v2250
    %3153 = vmatprep.subr.bf16.mxu0 0
    %3154 = vmatpush1.bf16.msra.mxu0 %v2251
    %3155 = vmatprep.subr.bf16.mxu0 0
    %3156 = vmatpush1.bf16.msra.mxu0 %v2252
    %3157 = vmatprep.mubr.bf16.mxu0 %v815
    %3158 = vmatmul.mubr.bf16.gmra.mrb[0].mxu0 %v813
    %v3159 = vpop.f32.mrb[0].mxu0
    %v3160 = vadd.f32 %v3120, %v3159
    %v3161 = vpop.f32.mrb[0].mxu0
    %v3162 = vpop.f32.mrb[0].mxu0
    %v3163 = vpop.f32.mrb[0].mxu0
    %3164 = vdwg.mxu0
    %3165 = vmatprep.subr.bf16.mxu0 0
    %3166 = vmatpush1.bf16.msra.mxu0 %v2253
    %3167 = vmatprep.subr.bf16.mxu0 0
    %3168 = vmatpush1.bf16.msra.mxu0 %v2254
    %3169 = vmatprep.subr.bf16.mxu0 0
    %3170 = vmatpush1.bf16.msra.mxu0 %v2255
    %3171 = vmatprep.subr.bf16.mxu0 0
    %3172 = vmatpush1.bf16.msra.mxu0 %v2256
    %3173 = vmatprep.subr.bf16.mxu0 0
    %3174 = vmatpush1.bf16.msra.mxu0 %v2257
    %3175 = vmatprep.subr.bf16.mxu0 0
    %3176 = vmatpush1.bf16.msra.mxu0 %v2258
    %3177 = vmatprep.subr.bf16.mxu0 0
    %3178 = vmatpush1.bf16.msra.mxu0 %v2259
    %3179 = vmatprep.subr.bf16.mxu0 0
    %3180 = vmatpush1.bf16.msra.mxu0 %v2260
    %3181 = vmatprep.subr.bf16.mxu0 0
    %3182 = vmatpush1.bf16.msra.mxu0 %v2261
    %3183 = vmatprep.subr.bf16.mxu0 0
    %3184 = vmatpush1.bf16.msra.mxu0 %v2262
    %3185 = vmatprep.subr.bf16.mxu0 0
    %3186 = vmatpush1.bf16.msra.mxu0 %v2263
    %3187 = vmatprep.subr.bf16.mxu0 0
    %3188 = vmatpush1.bf16.msra.mxu0 %v2264
    %3189 = vmatprep.subr.bf16.mxu0 0
    %3190 = vmatpush1.bf16.msra.mxu0 %v2265
    %3191 = vmatprep.subr.bf16.mxu0 0
    %3192 = vmatpush1.bf16.msra.mxu0 %v2266
    %3193 = vmatprep.subr.bf16.mxu0 0
    %3194 = vmatpush1.bf16.msra.mxu0 %v2267
    %3195 = vmatprep.subr.bf16.mxu0 0
    %3196 = vmatpush1.bf16.msra.mxu0 %v2268
    %3197 = vmatprep.mubr.bf16.mxu0 %v812
    %3198 = vmatmul.mubr.bf16.gmra.mrb[0].mxu0 %v798
    %v3199 = vpop.f32.mrb[0].mxu0
    %v3200 = vadd.f32 %v3160, %v3199
    %v3201 = vpop.f32.mrb[0].mxu0
    %v3202 = vpop.f32.mrb[0].mxu0
    %v3203 = vpop.f32.mrb[0].mxu0
    %3204 = vdwg.mxu0
    %3205 = vmatprep.subr.bf16.mxu0 0
    %3206 = vmatpush1.bf16.msra.mxu0 %v2269
    %3207 = vmatprep.subr.bf16.mxu0 0
    %3208 = vmatpush1.bf16.msra.mxu0 %v2270
    %3209 = vmatprep.subr.bf16.mxu0 0
    %3210 = vmatpush1.bf16.msra.mxu0 %v2271
    %3211 = vmatprep.subr.bf16.mxu0 0
    %3212 = vmatpush1.bf16.msra.mxu0 %v2272
    %3213 = vmatprep.subr.bf16.mxu0 0
    %3214 = vmatpush1.bf16.msra.mxu0 %v2273
    %3215 = vmatprep.subr.bf16.mxu0 0
    %3216 = vmatpush1.bf16.msra.mxu0 %v2274
    %3217 = vmatprep.subr.bf16.mxu0 0
    %3218 = vmatpush1.bf16.msra.mxu0 %v2275
    %3219 = vmatprep.subr.bf16.mxu0 0
    %3220 = vmatpush1.bf16.msra.mxu0 %v2276
    %3221 = vmatprep.subr.bf16.mxu0 0
    %3222 = vmatpush1.bf16.msra.mxu0 %v2277
    %3223 = vmatprep.subr.bf16.mxu0 0
    %3224 = vmatpush1.bf16.msra.mxu0 %v2278
    %3225 = vmatprep.subr.bf16.mxu0 0
    %3226 = vmatpush1.bf16.msra.mxu0 %v2279
    %3227 = vmatprep.subr.bf16.mxu0 0
    %3228 = vmatpush1.bf16.msra.mxu0 %v2280
    %3229 = vmatprep.subr.bf16.mxu0 0
    %3230 = vmatpush1.bf16.msra.mxu0 %v2281
    %3231 = vmatprep.subr.bf16.mxu0 0
    %3232 = vmatpush1.bf16.msra.mxu0 %v2282
    %3233 = vmatprep.subr.bf16.mxu0 0
    %3234 = vmatpush1.bf16.msra.mxu0 %v2283
    %3235 = vmatprep.subr.bf16.mxu0 0
    %3236 = vmatpush1.bf16.msra.mxu0 %v2284
    %3237 = vmatprep.mubr.bf16.mxu0 %v816
    %3238 = vmatmul.mubr.bf16.gmra.mrb[0].mxu0 %v814
    %v3239 = vpop.f32.mrb[0].mxu0
    %v3240 = vadd.f32 %v3200, %v3239
    %v3241 = vpop.f32.mrb[0].mxu0
    %v3242 = vpop.f32.mrb[0].mxu0
    %v3243 = vpop.f32.mrb[0].mxu0
    %3244 = vdwg.mxu0
    %3245 = vmatprep.subr.bf16.mxu0 0
    %3246 = vmatpush1.bf16.msra.mxu0 %v2285
    %3247 = vmatprep.subr.bf16.mxu0 0
    %3248 = vmatpush1.bf16.msra.mxu0 %v2286
    %3249 = vmatprep.subr.bf16.mxu0 0
    %3250 = vmatpush1.bf16.msra.mxu0 %v2287
    %3251 = vmatprep.subr.bf16.mxu0 0
    %3252 = vmatpush1.bf16.msra.mxu0 %v2288
    %3253 = vmatprep.subr.bf16.mxu0 0
    %3254 = vmatpush1.bf16.msra.mxu0 %v2289
    %3255 = vmatprep.subr.bf16.mxu0 0
    %3256 = vmatpush1.bf16.msra.mxu0 %v2290
    %3257 = vmatprep.subr.bf16.mxu0 0
    %3258 = vmatpush1.bf16.msra.mxu0 %v2291
    %3259 = vmatprep.subr.bf16.mxu0 0
    %3260 = vmatpush1.bf16.msra.mxu0 %v2292
    %3261 = vmatprep.subr.bf16.mxu0 0
    %3262 = vmatpush1.bf16.msra.mxu0 %v2293
    %3263 = vmatprep.subr.bf16.mxu0 0
    %3264 = vmatpush1.bf16.msra.mxu0 %v2294
    %3265 = vmatprep.subr.bf16.mxu0 0
    %3266 = vmatpush1.bf16.msra.mxu0 %v2295
    %3267 = vmatprep.subr.bf16.mxu0 0
    %3268 = vmatpush1.bf16.msra.mxu0 %v2296
    %3269 = vmatprep.subr.bf16.mxu0 0
    %3270 = vmatpush1.bf16.msra.mxu0 %v2297
    %3271 = vmatprep.subr.bf16.mxu0 0
    %3272 = vmatpush1.bf16.msra.mxu0 %v2298
    %3273 = vmatprep.subr.bf16.mxu0 0
    %3274 = vmatpush1.bf16.msra.mxu0 %v2299
    %3275 = vmatprep.subr.bf16.mxu0 0
    %3276 = vmatpush1.bf16.msra.mxu0 %v2300
    %3277 = vmatprep.mubr.bf16.mxu0 %v838
    %3278 = vmatmul.mubr.bf16.gmra.mrb[0].mxu0 %v831
    %v3279 = vpop.f32.mrb[0].mxu0
    %v3280 = vadd.f32 %v3240, %v3279
    %v3281 = vpop.f32.mrb[0].mxu0
    %v3282 = vpop.f32.mrb[0].mxu0
    %v3283 = vpop.f32.mrb[0].mxu0
    %3284 = vdwg.mxu0
    %3285 = vmatprep.subr.bf16.mxu0 0
    %3286 = vmatpush1.bf16.msra.mxu0 %v2301
    %3287 = vmatprep.subr.bf16.mxu0 0
    %3288 = vmatpush1.bf16.msra.mxu0 %v2302
    %3289 = vmatprep.subr.bf16.mxu0 0
    %3290 = vmatpush1.bf16.msra.mxu0 %v2303
    %3291 = vmatprep.subr.bf16.mxu0 0
    %3292 = vmatpush1.bf16.msra.mxu0 %v2304
    %3293 = vmatprep.subr.bf16.mxu0 0
    %3294 = vmatpush1.bf16.msra.mxu0 %v2305
    %3295 = vmatprep.subr.bf16.mxu0 0
    %3296 = vmatpush1.bf16.msra.mxu0 %v2306
    %3297 = vmatprep.subr.bf16.mxu0 0
    %3298 = vmatpush1.bf16.msra.mxu0 %v2307
    %3299 = vmatprep.subr.bf16.mxu0 0
    %3300 = vmatpush1.bf16.msra.mxu0 %v2308
    %3301 = vmatprep.subr.bf16.mxu0 0
    %3302 = vmatpush1.bf16.msra.mxu0 %v2309
    %3303 = vmatprep.subr.bf16.mxu0 0
    %3304 = vmatpush1.bf16.msra.mxu0 %v2310
    %3305 = vmatprep.subr.bf16.mxu0 0
    %3306 = vmatpush1.bf16.msra.mxu0 %v2311
    %3307 = vmatprep.subr.bf16.mxu0 0
    %3308 = vmatpush1.bf16.msra.mxu0 %v2312
    %3309 = vmatprep.subr.bf16.mxu0 0
    %3310 = vmatpush1.bf16.msra.mxu0 %v2313
    %3311 = vmatprep.subr.bf16.mxu0 0
    %3312 = vmatpush1.bf16.msra.mxu0 %v2314
    %3313 = vmatprep.subr.bf16.mxu0 0
    %3314 = vmatpush1.bf16.msra.mxu0 %v2315
    %3315 = vmatprep.subr.bf16.mxu0 0
    %3316 = vmatpush1.bf16.msra.mxu0 %v2316
    %3317 = vmatprep.mubr.bf16.mxu0 %v840
    %3318 = vmatmul.mubr.bf16.gmra.mrb[0].mxu0 %v839
    %v3319 = vpop.f32.mrb[0].mxu0
    %v3320 = vadd.f32 %v3280, %v3319
    %v3321 = vpop.f32.mrb[0].mxu0
    %v3322 = vpop.f32.mrb[0].mxu0
    %v3323 = vpop.f32.mrb[0].mxu0
    %3324 = vdwg.mxu0
    %v3325 = vmax.f32 %v3320, 0.0
    %v3326 = vpack.c.bf16 %v3325, %v3325
    %v3327 = vld [vmem:[%s3] sm:$0xf]
    %v3328 = vld [vmem:[%s3 + $0x4] sm:$0xf]
    %v3329 = vld [vmem:[%s3 + $0x8] sm:$0xf]
    %v3330 = vld [vmem:[%s3 + $0xc] sm:$0xf]
    %v3331 = vld [vmem:[%s3 + $0x10] sm:$0xf]
    %v3332 = vld [vmem:[%s3 + $0x14] sm:$0xf]
    %v3333 = vld [vmem:[%s3 + $0x18] sm:$0xf]
    %v3334 = vld [vmem:[%s3 + $0x1c] sm:$0xf]
    %v3335 = vld [vmem:[%s3 + $0x20] sm:$0xf]
    %v3336 = vld [vmem:[%s3 + $0x24] sm:$0xf]
    %v3337 = vld [vmem:[%s3 + $0x28] sm:$0xf]
    %v3338 = vld [vmem:[%s3 + $0x2c] sm:$0xf]
    %v3339 = vld [vmem:[%s3 + $0x30] sm:$0xf]
    %v3340 = vld [vmem:[%s3 + $0x34] sm:$0xf]
    %v3341 = vld [vmem:[%s3 + $0x38] sm:$0xf]
    %v3342 = vld [vmem:[%s4] sm:$0x1]
    %v3344 = vlaneseq
    %v3345 = vshrl.u32 %v3344, 7
    %v3346 = vsub.s32 0, %v3345
    %v3347 = vrot.slane %v3342, %v3346
    %v3364 = vunpack.c.l.b16 %v3327
    %v3365 = vunpack.c.l.b16 %v3328
    %v3366 = vunpack.c.l.b16 %v3329
    %v3367 = vunpack.c.l.b16 %v3330
    %v3368 = vunpack.c.l.b16 %v3331
    %v3369 = vunpack.c.l.b16 %v3332
    %v3370 = vunpack.c.l.b16 %v3333
    %v3371 = vunpack.c.l.b16 %v3334
    %v3372 = vunpack.c.l.b16 %v3335
    %v3373 = vunpack.c.l.b16 %v3336
    %v3374 = vunpack.c.l.b16 %v3337
    %v3375 = vunpack.c.l.b16 %v3338
    %v3376 = vunpack.c.l.b16 %v3339
    %v3377 = vunpack.c.l.b16 %v3340
    %v3378 = vunpack.c.l.b16 %v3341
    %v3379 = vpack.c.b16 %v3365, %v3364
    %v3380 = vpack.c.b16 %v3367, %v3366
    %v3381 = vpack.c.b16 %v3369, %v3368
    %v3382 = vpack.c.b16 %v3371, %v3370
    %v3383 = vpack.c.b16 %v3373, %v3372
    %v3384 = vpack.c.b16 %v3375, %v3374
    %v3385 = vpack.c.b16 %v3377, %v3376
    %v3386 = vpack.c.b16 %v3378, %v3378
    %vm3394 = vcmask 982016
    %v3396 = vsel %vm3394, %v3326, 0
    %vm3398 = vcmask 1043456
    %v3400 = vsel %vm3398, %v3386, 0
    %3402 = vmatprep.subr.bf16.mxu0 0
    %3403 = vmatpush1.bf16.msra.mxu0 %v3379
    %3404 = vmatprep.subr.bf16.mxu0 0
    %3405 = vmatpush1.bf16.msra.mxu0 %v3380
    %3406 = vmatprep.subr.bf16.mxu0 0
    %3407 = vmatpush1.bf16.msra.mxu0 %v3381
    %3408 = vmatprep.subr.bf16.mxu0 0
    %3409 = vmatpush1.bf16.msra.mxu0 %v3382
    %3410 = vmatprep.subr.bf16.mxu0 0
    %3411 = vmatpush1.bf16.msra.mxu0 %v3383
    %3412 = vmatprep.subr.bf16.mxu0 0
    %3413 = vmatpush1.bf16.msra.mxu0 %v3384
    %3414 = vmatprep.subr.bf16.mxu0 0
    %3415 = vmatpush1.bf16.msra.mxu0 %v3385
    %3416 = vmatprep.subr.bf16.mxu0 0
    %3417 = vmatpush1.bf16.msra.mxu0 %v3400
    %3418 = vmatprep.subr.bf16.mxu0 0
    %3419 = vmatpush1.bf16.msra.mxu0 0
    %3420 = vmatprep.subr.bf16.mxu0 0
    %3421 = vmatpush1.bf16.msra.mxu0 0
    %3422 = vmatprep.subr.bf16.mxu0 0
    %3423 = vmatpush1.bf16.msra.mxu0 0
    %3424 = vmatprep.subr.bf16.mxu0 0
    %3425 = vmatpush1.bf16.msra.mxu0 0
    %3426 = vmatprep.subr.bf16.mxu0 0
    %3427 = vmatpush1.bf16.msra.mxu0 0
    %3428 = vmatprep.subr.bf16.mxu0 0
    %3429 = vmatpush1.bf16.msra.mxu0 0
    %3430 = vmatprep.subr.bf16.mxu0 0
    %3431 = vmatpush1.bf16.msra.mxu0 0
    %3432 = vmatprep.subr.bf16.mxu0 0
    %3433 = vmatpush1.bf16.msra.mxu0 0
    %3434 = vmatprep.mubr.bf16.mxu0 0
    %3435 = vmatmul.mubr.bf16.gmra.mrb[0].mxu0 %v3396
    %v3436 = vpop.f32.mrb[0].mxu0
    %v3437 = vadd.f32 %v3347, %v3436
    %v3438 = vpop.f32.mrb[0].mxu0
    %v3439 = vpop.f32.mrb[0].mxu0
    %v3440 = vpop.f32.mrb[0].mxu0
    %3441 = vdwg.mxu0
    %v3442 = vmax.f32 %v3437, 0.0
    %v3443 = vpack.c.bf16 %v3442, %v3442
    %v3444 = vld [vmem:[%s5] sm:$0xf]
    %v3445 = vld [vmem:[%s5 + $0x4] sm:$0xf]
    %v3446 = vld [vmem:[%s5 + $0x8] sm:$0xf]
    %v3447 = vld [vmem:[%s5 + $0xc] sm:$0xf]
    %v3448 = vld [vmem:[%s5 + $0x10] sm:$0xf]
    %v3449 = vld [vmem:[%s5 + $0x14] sm:$0xf]
    %v3450 = vld [vmem:[%s5 + $0x18] sm:$0xf]
    %v3451 = vld [vmem:[%s5 + $0x1c] sm:$0xf]
    %v3452 = vld [vmem:[%s5 + $0x20] sm:$0xf]
    %v3453 = vld [vmem:[%s5 + $0x24] sm:$0xf]
    %v3454 = vld [vmem:[%s5 + $0x28] sm:$0x3]
    %v3455 = vld [vmem:[%s6] sm:$0x1]
    %v3457 = vlaneseq
    %v3458 = vshrl.u32 %v3457, 7
    %v3459 = vsub.s32 0, %v3458
    %v3460 = vrot.slane %v3455, %v3459
    %v3473 = vunpack.c.l.b16 %v3444
    %v3474 = vunpack.c.l.b16 %v3445
    %v3475 = vunpack.c.l.b16 %v3446
    %v3476 = vunpack.c.l.b16 %v3447
    %v3477 = vunpack.c.l.b16 %v3448
    %v3478 = vunpack.c.l.b16 %v3449
    %v3479 = vunpack.c.l.b16 %v3450
    %v3480 = vunpack.c.l.b16 %v3451
    %v3481 = vunpack.c.l.b16 %v3452
    %v3482 = vunpack.c.l.b16 %v3453
    %v3483 = vunpack.c.l.b16 %v3454
    %v3484 = vpack.c.b16 %v3474, %v3473
    %v3485 = vpack.c.b16 %v3476, %v3475
    %v3486 = vpack.c.b16 %v3478, %v3477
    %v3487 = vpack.c.b16 %v3480, %v3479
    %v3488 = vpack.c.b16 %v3482, %v3481
    %v3489 = vpack.c.b16 %v3483, %v3483
    %vm3495 = vcmask 687104
    %v3497 = vsel %vm3495, %v3443, 0
    %vm3499 = vcmask 1041408
    %v3501 = vsel %vm3499, %v3489, 0
    %3503 = vmatprep.subr.bf16.mxu0 0
    %3504 = vmatpush1.bf16.msra.mxu0 %v3484
    %3505 = vmatprep.subr.bf16.mxu0 0
    %3506 = vmatpush1.bf16.msra.mxu0 %v3485
    %3507 = vmatprep.subr.bf16.mxu0 0
    %3508 = vmatpush1.bf16.msra.mxu0 %v3486
    %3509 = vmatprep.subr.bf16.mxu0 0
    %3510 = vmatpush1.bf16.msra.mxu0 %v3487
    %3511 = vmatprep.subr.bf16.mxu0 0
    %3512 = vmatpush1.bf16.msra.mxu0 %v3488
    %3513 = vmatprep.subr.bf16.mxu0 0
    %3514 = vmatpush1.bf16.msra.mxu0 %v3501
    %3515 = vmatprep.subr.bf16.mxu0 0
    %3516 = vmatpush1.bf16.msra.mxu0 0
    %3517 = vmatprep.subr.bf16.mxu0 0
    %3518 = vmatpush1.bf16.msra.mxu0 0
    %3519 = vmatprep.subr.bf16.mxu0 0
    %3520 = vmatpush1.bf16.msra.mxu0 0
    %3521 = vmatprep.subr.bf16.mxu0 0
    %3522 = vmatpush1.bf16.msra.mxu0 0
    %3523 = vmatprep.subr.bf16.mxu0 0
    %3524 = vmatpush1.bf16.msra.mxu0 0
    %3525 = vmatprep.subr.bf16.mxu0 0
    %3526 = vmatpush1.bf16.msra.mxu0 0
    %3527 = vmatprep.subr.bf16.mxu0 0
    %3528 = vmatpush1.bf16.msra.mxu0 0
    %3529 = vmatprep.subr.bf16.mxu0 0
    %3530 = vmatpush1.bf16.msra.mxu0 0
    %3531 = vmatprep.subr.bf16.mxu0 0
    %3532 = vmatpush1.bf16.msra.mxu0 0
    %3533 = vmatprep.subr.bf16.mxu0 0
    %3534 = vmatpush1.bf16.msra.mxu0 0
    %3535 = vmatprep.mubr.bf16.mxu0 0
    %3536 = vmatmul.mubr.bf16.gmra.mrb[0].mxu0 %v3497
    %v3537 = vpop.f32.mrb[0].mxu0
    %v3538 = vadd.f32 %v3460, %v3537
    %v3539 = vpop.f32.mrb[0].mxu0
    %v3540 = vpop.f32.mrb[0].mxu0
    %v3541 = vpop.f32.mrb[0].mxu0
    %3542 = vdwg.mxu0
    %vm3543 = vcmask 74752
    %3544 = vst.msk [vmem:[#allocation2] sm:$0x3] %vm3543, %v3538
    // Predicated region
    $region30: #{net_forward.5} parent=1 // pred_check
      _
    $region31: #{net_forward.5} parent=1 // pred_check_branch
      %3546 = sbr.rel (0) target = $region33
    $region32: #{net_forward.5} parent=1 // pred_region
      %s3548 = ssub.s32 32, 32
      %3549 = vsyncadd [#allocation3], %s3548
      %s3551 = sshll.u32 [#allocation2], 4
      %s3552 = int_to_ptr.vmem [resolvable:$true] %s3551
      %3554 = dma.vmem_to_hbm [thread:$0]  %s3552, 32, %s7, [#allocation3]
    $region33: #{net_forward.5} parent=1 // pred_fallthru
      _
    // Predicated region
    $region34: #{net_forward.5} parent=1 // pred_check
      _
    $region35: #{net_forward.5} parent=1 // pred_check_branch
      %3556 = sbr.rel (0) target = $region37
    $region36: #{net_forward.5} parent=1 // pred_region
      %3557 = dma.done [#allocation3], 32
    $region37: #{net_forward.5} parent=1 // pred_fallthru
      _
    %3558 = vsyncpa [#allocation3], 1

</llo_original>
